<compile_context>
chip_gen: v5e
topology: v5e:2x2
jax: 0.10.0
libtpu: 0.0.40
codegen_flags: <defaults>
</compile_context>

<pallas_src>
import functools

import jax
import jax.numpy as jnp
from jax import lax
from jax.experimental import pallas as pl
from jax.experimental.pallas import tpu as pltpu


def _round_up(n, m):
    return ((n + m - 1) // m) * m


def _pad_gate_weight(w, H, Hp, pad_in=False):
    """w: (4H, d_in) PyTorch-layout gate weight -> (d_in_p, 4*Hp) transposed,
    with each gate's output block padded to Hp lanes (and optionally the
    input / contraction dim zero-padded to Hp)."""
    d_in = w.shape[1]
    d_in_p = Hp if pad_in else d_in
    w4 = w.reshape(4, H, d_in)
    w4 = jnp.pad(w4, ((0, 0), (0, Hp - H), (0, d_in_p - d_in)))
    return jnp.transpose(w4, (2, 0, 1)).reshape(d_in_p, 4 * Hp)


def _pad_gate_bias(b, H, Hp):
    """b: (4H,) -> (4*Hp,) with each gate block padded to Hp lanes."""
    return jnp.pad(b.reshape(4, H), ((0, 0), (0, Hp - H))).reshape(4 * Hp)


def _fused_lstm2_kernel(gx1_ref, whh1_ref, wih2_ref, whh2_ref, b2_ref,
                        h_out_ref, c_out_ref, *, seq_len, hidden_pad):
    """Fused 2-layer LSTM recurrence.

    gx1_ref : (T, Bp, 4*Hp)  precomputed layer-1 input projection (+ bias), f32
    whh1_ref: (Hp, 4*Hp)     layer-1 recurrent weights (transposed, gate-padded)
    wih2_ref: (Hp, 4*Hp)     layer-2 input weights (transposed, gate-padded)
    whh2_ref: (Hp, 4*Hp)     layer-2 recurrent weights
    b2_ref  : (1, 4*Hp)      layer-2 combined bias, f32
    h_out_ref, c_out_ref: (2, Bp, Hp) final hidden / cell per layer
    """
    Hp = hidden_pad
    Bp = gx1_ref.shape[1]

    # Weights/bias loaded into registers/VMEM once, reused every timestep.
    whh1 = whh1_ref[...]
    wih2 = wih2_ref[...]
    whh2 = whh2_ref[...]
    b2 = b2_ref[...]
    w_dtype = whh1.dtype

    def cell_update(gates, c_prev):
        # gates: (Bp, 4*Hp) f32; slices fall on 128-lane boundaries (Hp % 128 == 0).
        i = jax.nn.sigmoid(gates[:, 0 * Hp:1 * Hp])
        f = jax.nn.sigmoid(gates[:, 1 * Hp:2 * Hp])
        g = jnp.tanh(gates[:, 2 * Hp:3 * Hp])
        o = jax.nn.sigmoid(gates[:, 3 * Hp:4 * Hp])
        c_new = f * c_prev + i * g
        h_new = o * jnp.tanh(c_new)
        return h_new, c_new

    def step(t, carry):
        h1, c1, h2, c2 = carry
        # Layer 1: only the serial h @ W_hh^T matmul is on the critical path.
        g1 = gx1_ref[t] + jnp.dot(h1.astype(w_dtype), whh1,
                                  preferred_element_type=jnp.float32)
        h1, c1 = cell_update(g1, c1)
        # Layer 2 consumes layer-1's hidden state directly (no HBM round trip).
        g2 = (jnp.dot(h1.astype(w_dtype), wih2, preferred_element_type=jnp.float32)
              + jnp.dot(h2.astype(w_dtype), whh2, preferred_element_type=jnp.float32)
              + b2)
        h2, c2 = cell_update(g2, c2)
        return (h1, c1, h2, c2)

    z = jnp.zeros((Bp, Hp), jnp.float32)
    h1, c1, h2, c2 = lax.fori_loop(0, seq_len, step, (z, z, z, z), unroll=True)

    # Final-state writes happen exactly once, after the recurrence.
    h_out_ref[0] = h1
    h_out_ref[1] = h2
    c_out_ref[0] = c1
    c_out_ref[1] = c2


@functools.partial(jax.jit, static_argnames=("compute_dtype",))
def encoder_lstm_forward(x, params, compute_dtype=jnp.float32):
    """Matches EncoderLSTM.forward: x (B, T, input_size) -> (hidden, cell),
    each (num_layers=2, B, hidden_size)."""
    assert len(params) == 2, "fused kernel is specialized to num_layers=2"
    (w_ih1, w_hh1, b_ih1, b_hh1), (w_ih2, w_hh2, b_ih2, b_hh2) = params

    B, T, _ = x.shape
    H = w_hh1.shape[1]
    Hp = _round_up(H, 128)   # per-gate block padded to a full 128-lane multiple
    Bp = _round_up(B, 8)     # batch padded to the f32 sublane quantum

    # ---- Layer-1 input projection hoisted out of the recurrence (plain XLA) ----
    wih1_p = _pad_gate_weight(w_ih1, H, Hp)                      # (D, 4Hp)
    b1_p = _pad_gate_bias(b_ih1 + b_hh1, H, Hp)                  # (4Hp,)
    x_p = jnp.pad(x.astype(jnp.float32), ((0, Bp - B), (0, 0), (0, 0)))
    gx1 = jnp.einsum("btd,dg->tbg", x_p, wih1_p) + b1_p          # (T, Bp, 4Hp) f32

    # ---- Recurrent weights (resident in VMEM for the whole kernel) ----
    whh1_p = _pad_gate_weight(w_hh1, H, Hp, pad_in=True).astype(compute_dtype)
    wih2_p = _pad_gate_weight(w_ih2, H, Hp, pad_in=True).astype(compute_dtype)
    whh2_p = _pad_gate_weight(w_hh2, H, Hp, pad_in=True).astype(compute_dtype)
    b2_p = _pad_gate_bias(b_ih2 + b_hh2, H, Hp).reshape(1, 4 * Hp)

    kernel = functools.partial(_fused_lstm2_kernel, seq_len=T, hidden_pad=Hp)
    h_out, c_out = pl.pallas_call(
        kernel,
        out_shape=(
            jax.ShapeDtypeStruct((2, Bp, Hp), jnp.float32),
            jax.ShapeDtypeStruct((2, Bp, Hp), jnp.float32),
        ),
    )(gx1, whh1_p, wih2_p, whh2_p, b2_p)

    # Strip batch / per-gate hidden padding.
    return h_out[:, :B, :H], c_out[:, :B, :H]


def init_lstm_params(key, input_size, hidden_size, num_layers):
    """Deterministic init mirroring nn.LSTM shapes: uniform(-1/sqrt(H), 1/sqrt(H))."""
    bound = 1.0 / float(hidden_size) ** 0.5
    params = []
    for layer in range(num_layers):
        d_in = input_size if layer == 0 else hidden_size
        key, k1, k2, k3, k4 = jax.random.split(key, 5)
        w_ih = jax.random.uniform(k1, (4 * hidden_size, d_in), jnp.float32, -bound, bound)
        w_hh = jax.random.uniform(k2, (4 * hidden_size, hidden_size), jnp.float32, -bound, bound)
        b_ih = jax.random.uniform(k3, (4 * hidden_size,), jnp.float32, -bound, bound)
        b_hh = jax.random.uniform(k4, (4 * hidden_size,), jnp.float32, -bound, bound)
        params.append((w_ih, w_hh, b_ih, b_hh))
    return params


def encoder_lstm_ref(x, params):
    """Pure-JAX reference of torch.nn.LSTM forward for verification."""
    hs, cs = [], []
    inp = x  # (B, T, D)
    for (w_ih, w_hh, b_ih, b_hh) in params:
        B = inp.shape[0]
        H = w_hh.shape[1]
        h0 = jnp.zeros((B, H), jnp.float32)
        c0 = jnp.zeros((B, H), jnp.float32)

        def step(carry, x_t, w_ih=w_ih, w_hh=w_hh, b_ih=b_ih, b_hh=b_hh):
            h, c = carry
            gates = x_t @ w_ih.T + h @ w_hh.T + b_ih + b_hh
            i, f, g, o = jnp.split(gates, 4, axis=-1)
            i, f, o = jax.nn.sigmoid(i), jax.nn.sigmoid(f), jax.nn.sigmoid(o)
            g = jnp.tanh(g)
            c = f * c + i * g
            h = o * jnp.tanh(c)
            return (h, c), h

        (h, c), h_seq = lax.scan(step, (h0, c0), jnp.transpose(inp, (1, 0, 2)))
        inp = jnp.transpose(h_seq, (1, 0, 2))
        hs.append(h)
        cs.append(c)
    return jnp.stack(hs, axis=0), jnp.stack(cs, axis=0)


if __name__ == "__main__":
    # Small shapes consistent with the module: input_size=3, hidden=32, 2 layers.
    batch, seq_len, input_size, hidden_size, num_layers = 2, 8, 3, 32, 2

    key = jax.random.PRNGKey(0)
    key, kx, kp = jax.random.split(key, 3)
    x = jax.random.normal(kx, (batch, seq_len, input_size), jnp.float32)
    params = init_lstm_params(kp, input_size, hidden_size, num_layers)

    h_ref, c_ref = encoder_lstm_ref(x, params)

    # f32 path: exact check against the pure-JAX/PyTorch-equivalent reference.
    hidden, cell = jax.block_until_ready(
        encoder_lstm_forward(x, params, compute_dtype=jnp.float32))
    assert hidden.shape == (num_layers, batch, hidden_size)
    assert cell.shape == (num_layers, batch, hidden_size)
    assert jnp.allclose(hidden, h_ref, rtol=1e-5, atol=1e-5)
    assert jnp.allclose(cell, c_ref, rtol=1e-5, atol=1e-5)

    # bf16-weight path (MXU-friendly, f32 accumulation & gate math): looser check.
    hidden_bf, cell_bf = jax.block_until_ready(
        encoder_lstm_forward(x, params, compute_dtype=jnp.bfloat16))
    assert jnp.allclose(hidden_bf, h_ref, rtol=5e-2, atol=5e-2)
    assert jnp.allclose(cell_bf, c_ref, rtol=5e-2, atol=5e-2)

    print("KERNEL_OK")
</pallas_src>

<mosaic_0001>
module attributes {stable_mosaic.version = 11 : i64} {
  func.func @_fused_lstm2_kernel(%arg0: memref<8x8x512xf32, #tpu.memory_space<vmem>>, %arg1: memref<128x512xf32, #tpu.memory_space<vmem>>, %arg2: memref<128x512xf32, #tpu.memory_space<vmem>>, %arg3: memref<128x512xf32, #tpu.memory_space<vmem>>, %arg4: memref<1x512xf32, #tpu.memory_space<vmem>>, %arg5: memref<2x8x128xf32, #tpu.memory_space<vmem>>, %arg6: memref<2x8x128xf32, #tpu.memory_space<vmem>>) attributes {dimension_semantics = [], scalar_prefetch = 0 : i64, scratch_operands = 0 : i64, tpu.core_type = #tpu.core_type<tc>} {
    %c0 = arith.constant 0 : index
    %c0_0 = arith.constant 0 : index
    %0 = vector.load %arg1[%c0, %c0_0] : memref<128x512xf32, #tpu.memory_space<vmem>>, vector<128x512xf32>
    %c0_1 = arith.constant 0 : index
    %c0_2 = arith.constant 0 : index
    %1 = vector.load %arg2[%c0_1, %c0_2] : memref<128x512xf32, #tpu.memory_space<vmem>>, vector<128x512xf32>
    %c0_3 = arith.constant 0 : index
    %c0_4 = arith.constant 0 : index
    %2 = vector.load %arg3[%c0_3, %c0_4] : memref<128x512xf32, #tpu.memory_space<vmem>>, vector<128x512xf32>
    %c0_5 = arith.constant 0 : index
    %c0_6 = arith.constant 0 : index
    %3 = vector.load %arg4[%c0_5, %c0_6] : memref<1x512xf32, #tpu.memory_space<vmem>>, vector<1x512xf32>
    %cst = arith.constant 0.000000e+00 : f32
    %4 = vector.broadcast %cst : f32 to vector<8x128xf32>
    %c0_i32 = arith.constant 0 : i32
    %5 = arith.index_cast %c0_i32 : i32 to index
    %c0_7 = arith.constant 0 : index
    %c0_8 = arith.constant 0 : index
    %6 = vector.load %arg0[%5, %c0_7, %c0_8] : memref<8x8x512xf32, #tpu.memory_space<vmem>>, vector<1x8x512xf32>
    %7 = vector.shape_cast %6 : vector<1x8x512xf32> to vector<8x512xf32>
    %cst_9 = arith.constant dense<0.000000e+00> : vector<8x512xf32>
    %8 = tpu.matmul %4, %0, %cst_9 {dimension_numbers = #tpu.dot_dimension_numbers<[1], [0], [0], [1], [0, 0, 1, 1], [], []>} : vector<8x128xf32>, vector<128x512xf32>, vector<8x512xf32> -> vector<8x512xf32>
    %9 = arith.addf %7, %8 : vector<8x512xf32>
    %10 = vector.extract_strided_slice %9 {offsets = [0, 0], sizes = [8, 128], strides = [1, 1]} : vector<8x512xf32> to vector<8x128xf32>
    %11 = arith.negf %10 : vector<8x128xf32>
    %12 = math.exp %11 : vector<8x128xf32>
    %cst_10 = arith.constant 1.000000e+00 : f32
    %13 = vector.broadcast %cst_10 : f32 to vector<8x128xf32>
    %14 = arith.addf %13, %12 : vector<8x128xf32>
    %15 = arith.divf %13, %14 : vector<8x128xf32>
    %16 = vector.extract_strided_slice %9 {offsets = [0, 128], sizes = [8, 128], strides = [1, 1]} : vector<8x512xf32> to vector<8x128xf32>
    %17 = arith.negf %16 : vector<8x128xf32>
    %18 = math.exp %17 : vector<8x128xf32>
    %cst_11 = arith.constant 1.000000e+00 : f32
    %19 = vector.broadcast %cst_11 : f32 to vector<8x128xf32>
    %20 = arith.addf %19, %18 : vector<8x128xf32>
    %21 = arith.divf %19, %20 : vector<8x128xf32>
    %22 = vector.extract_strided_slice %9 {offsets = [0, 256], sizes = [8, 128], strides = [1, 1]} : vector<8x512xf32> to vector<8x128xf32>
    %23 = math.tanh %22 : vector<8x128xf32>
    %24 = vector.extract_strided_slice %9 {offsets = [0, 384], sizes = [8, 128], strides = [1, 1]} : vector<8x512xf32> to vector<8x128xf32>
    %25 = arith.negf %24 : vector<8x128xf32>
    %26 = math.exp %25 : vector<8x128xf32>
    %cst_12 = arith.constant 1.000000e+00 : f32
    %27 = vector.broadcast %cst_12 : f32 to vector<8x128xf32>
    %28 = arith.addf %27, %26 : vector<8x128xf32>
    %29 = arith.divf %27, %28 : vector<8x128xf32>
    %30 = arith.mulf %21, %4 : vector<8x128xf32>
    %31 = arith.mulf %15, %23 : vector<8x128xf32>
    %32 = arith.addf %30, %31 : vector<8x128xf32>
    %33 = math.tanh %32 : vector<8x128xf32>
    %34 = arith.mulf %29, %33 : vector<8x128xf32>
    %cst_13 = arith.constant dense<0.000000e+00> : vector<8x512xf32>
    %35 = tpu.matmul %34, %1, %cst_13 {dimension_numbers = #tpu.dot_dimension_numbers<[1], [0], [0], [1], [0, 0, 1, 1], [], []>} : vector<8x128xf32>, vector<128x512xf32>, vector<8x512xf32> -> vector<8x512xf32>
    %cst_14 = arith.constant dense<0.000000e+00> : vector<8x512xf32>
    %36 = tpu.matmul %4, %2, %cst_14 {dimension_numbers = #tpu.dot_dimension_numbers<[1], [0], [0], [1], [0, 0, 1, 1], [], []>} : vector<8x128xf32>, vector<128x512xf32>, vector<8x512xf32> -> vector<8x512xf32>
    %37 = arith.addf %35, %36 : vector<8x512xf32>
    %38 = vector.broadcast %3 : vector<1x512xf32> to vector<8x512xf32>
    %39 = arith.addf %37, %38 : vector<8x512xf32>
    %40 = vector.extract_strided_slice %39 {offsets = [0, 0], sizes = [8, 128], strides = [1, 1]} : vector<8x512xf32> to vector<8x128xf32>
    %41 = arith.negf %40 : vector<8x128xf32>
    %42 = math.exp %41 : vector<8x128xf32>
    %cst_15 = arith.constant 1.000000e+00 : f32
    %43 = vector.broadcast %cst_15 : f32 to vector<8x128xf32>
    %44 = arith.addf %43, %42 : vector<8x128xf32>
    %45 = arith.divf %43, %44 : vector<8x128xf32>
    %46 = vector.extract_strided_slice %39 {offsets = [0, 128], sizes = [8, 128], strides = [1, 1]} : vector<8x512xf32> to vector<8x128xf32>
    %47 = arith.negf %46 : vector<8x128xf32>
    %48 = math.exp %47 : vector<8x128xf32>
    %cst_16 = arith.constant 1.000000e+00 : f32
    %49 = vector.broadcast %cst_16 : f32 to vector<8x128xf32>
    %50 = arith.addf %49, %48 : vector<8x128xf32>
    %51 = arith.divf %49, %50 : vector<8x128xf32>
    %52 = vector.extract_strided_slice %39 {offsets = [0, 256], sizes = [8, 128], strides = [1, 1]} : vector<8x512xf32> to vector<8x128xf32>
    %53 = math.tanh %52 : vector<8x128xf32>
    %54 = vector.extract_strided_slice %39 {offsets = [0, 384], sizes = [8, 128], strides = [1, 1]} : vector<8x512xf32> to vector<8x128xf32>
    %55 = arith.negf %54 : vector<8x128xf32>
    %56 = math.exp %55 : vector<8x128xf32>
    %cst_17 = arith.constant 1.000000e+00 : f32
    %57 = vector.broadcast %cst_17 : f32 to vector<8x128xf32>
    %58 = arith.addf %57, %56 : vector<8x128xf32>
    %59 = arith.divf %57, %58 : vector<8x128xf32>
    %60 = arith.mulf %51, %4 : vector<8x128xf32>
    %61 = arith.mulf %45, %53 : vector<8x128xf32>
    %62 = arith.addf %60, %61 : vector<8x128xf32>
    %63 = math.tanh %62 : vector<8x128xf32>
    %64 = arith.mulf %59, %63 : vector<8x128xf32>
    %c1_i32 = arith.constant 1 : i32
    %65 = arith.index_cast %c1_i32 : i32 to index
    %c0_18 = arith.constant 0 : index
    %c0_19 = arith.constant 0 : index
    %66 = vector.load %arg0[%65, %c0_18, %c0_19] : memref<8x8x512xf32, #tpu.memory_space<vmem>>, vector<1x8x512xf32>
    %67 = vector.shape_cast %66 : vector<1x8x512xf32> to vector<8x512xf32>
    %cst_20 = arith.constant dense<0.000000e+00> : vector<8x512xf32>
    %68 = tpu.matmul %34, %0, %cst_20 {dimension_numbers = #tpu.dot_dimension_numbers<[1], [0], [0], [1], [0, 0, 1, 1], [], []>} : vector<8x128xf32>, vector<128x512xf32>, vector<8x512xf32> -> vector<8x512xf32>
    %69 = arith.addf %67, %68 : vector<8x512xf32>
    %70 = vector.extract_strided_slice %69 {offsets = [0, 0], sizes = [8, 128], strides = [1, 1]} : vector<8x512xf32> to vector<8x128xf32>
    %71 = arith.negf %70 : vector<8x128xf32>
    %72 = math.exp %71 : vector<8x128xf32>
    %cst_21 = arith.constant 1.000000e+00 : f32
    %73 = vector.broadcast %cst_21 : f32 to vector<8x128xf32>
    %74 = arith.addf %73, %72 : vector<8x128xf32>
    %75 = arith.divf %73, %74 : vector<8x128xf32>
    %76 = vector.extract_strided_slice %69 {offsets = [0, 128], sizes = [8, 128], strides = [1, 1]} : vector<8x512xf32> to vector<8x128xf32>
    %77 = arith.negf %76 : vector<8x128xf32>
    %78 = math.exp %77 : vector<8x128xf32>
    %cst_22 = arith.constant 1.000000e+00 : f32
    %79 = vector.broadcast %cst_22 : f32 to vector<8x128xf32>
    %80 = arith.addf %79, %78 : vector<8x128xf32>
    %81 = arith.divf %79, %80 : vector<8x128xf32>
    %82 = vector.extract_strided_slice %69 {offsets = [0, 256], sizes = [8, 128], strides = [1, 1]} : vector<8x512xf32> to vector<8x128xf32>
    %83 = math.tanh %82 : vector<8x128xf32>
    %84 = vector.extract_strided_slice %69 {offsets = [0, 384], sizes = [8, 128], strides = [1, 1]} : vector<8x512xf32> to vector<8x128xf32>
    %85 = arith.negf %84 : vector<8x128xf32>
    %86 = math.exp %85 : vector<8x128xf32>
    %cst_23 = arith.constant 1.000000e+00 : f32
    %87 = vector.broadcast %cst_23 : f32 to vector<8x128xf32>
    %88 = arith.addf %87, %86 : vector<8x128xf32>
    %89 = arith.divf %87, %88 : vector<8x128xf32>
    %90 = arith.mulf %81, %32 : vector<8x128xf32>
    %91 = arith.mulf %75, %83 : vector<8x128xf32>
    %92 = arith.addf %90, %91 : vector<8x128xf32>
    %93 = math.tanh %92 : vector<8x128xf32>
    %94 = arith.mulf %89, %93 : vector<8x128xf32>
    %cst_24 = arith.constant dense<0.000000e+00> : vector<8x512xf32>
    %95 = tpu.matmul %94, %1, %cst_24 {dimension_numbers = #tpu.dot_dimension_numbers<[1], [0], [0], [1], [0, 0, 1, 1], [], []>} : vector<8x128xf32>, vector<128x512xf32>, vector<8x512xf32> -> vector<8x512xf32>
    %cst_25 = arith.constant dense<0.000000e+00> : vector<8x512xf32>
    %96 = tpu.matmul %64, %2, %cst_25 {dimension_numbers = #tpu.dot_dimension_numbers<[1], [0], [0], [1], [0, 0, 1, 1], [], []>} : vector<8x128xf32>, vector<128x512xf32>, vector<8x512xf32> -> vector<8x512xf32>
    %97 = arith.addf %95, %96 : vector<8x512xf32>
    %98 = vector.broadcast %3 : vector<1x512xf32> to vector<8x512xf32>
    %99 = arith.addf %97, %98 : vector<8x512xf32>
    %100 = vector.extract_strided_slice %99 {offsets = [0, 0], sizes = [8, 128], strides = [1, 1]} : vector<8x512xf32> to vector<8x128xf32>
    %101 = arith.negf %100 : vector<8x128xf32>
    %102 = math.exp %101 : vector<8x128xf32>
    %cst_26 = arith.constant 1.000000e+00 : f32
    %103 = vector.broadcast %cst_26 : f32 to vector<8x128xf32>
    %104 = arith.addf %103, %102 : vector<8x128xf32>
    %105 = arith.divf %103, %104 : vector<8x128xf32>
    %106 = vector.extract_strided_slice %99 {offsets = [0, 128], sizes = [8, 128], strides = [1, 1]} : vector<8x512xf32> to vector<8x128xf32>
    %107 = arith.negf %106 : vector<8x128xf32>
    %108 = math.exp %107 : vector<8x128xf32>
    %cst_27 = arith.constant 1.000000e+00 : f32
    %109 = vector.broadcast %cst_27 : f32 to vector<8x128xf32>
    %110 = arith.addf %109, %108 : vector<8x128xf32>
    %111 = arith.divf %109, %110 : vector<8x128xf32>
    %112 = vector.extract_strided_slice %99 {offsets = [0, 256], sizes = [8, 128], strides = [1, 1]} : vector<8x512xf32> to vector<8x128xf32>
    %113 = math.tanh %112 : vector<8x128xf32>
    %114 = vector.extract_strided_slice %99 {offsets = [0, 384], sizes = [8, 128], strides = [1, 1]} : vector<8x512xf32> to vector<8x128xf32>
    %115 = arith.negf %114 : vector<8x128xf32>
    %116 = math.exp %115 : vector<8x128xf32>
    %cst_28 = arith.constant 1.000000e+00 : f32
    %117 = vector.broadcast %cst_28 : f32 to vector<8x128xf32>
    %118 = arith.addf %117, %116 : vector<8x128xf32>
    %119 = arith.divf %117, %118 : vector<8x128xf32>
    %120 = arith.mulf %111, %62 : vector<8x128xf32>
    %121 = arith.mulf %105, %113 : vector<8x128xf32>
    %122 = arith.addf %120, %121 : vector<8x128xf32>
    %123 = math.tanh %122 : vector<8x128xf32>
    %124 = arith.mulf %119, %123 : vector<8x128xf32>
    %c2_i32 = arith.constant 2 : i32
    %125 = arith.index_cast %c2_i32 : i32 to index
    %c0_29 = arith.constant 0 : index
    %c0_30 = arith.constant 0 : index
    %126 = vector.load %arg0[%125, %c0_29, %c0_30] : memref<8x8x512xf32, #tpu.memory_space<vmem>>, vector<1x8x512xf32>
    %127 = vector.shape_cast %126 : vector<1x8x512xf32> to vector<8x512xf32>
    %cst_31 = arith.constant dense<0.000000e+00> : vector<8x512xf32>
    %128 = tpu.matmul %94, %0, %cst_31 {dimension_numbers = #tpu.dot_dimension_numbers<[1], [0], [0], [1], [0, 0, 1, 1], [], []>} : vector<8x128xf32>, vector<128x512xf32>, vector<8x512xf32> -> vector<8x512xf32>
    %129 = arith.addf %127, %128 : vector<8x512xf32>
    %130 = vector.extract_strided_slice %129 {offsets = [0, 0], sizes = [8, 128], strides = [1, 1]} : vector<8x512xf32> to vector<8x128xf32>
    %131 = arith.negf %130 : vector<8x128xf32>
    %132 = math.exp %131 : vector<8x128xf32>
    %cst_32 = arith.constant 1.000000e+00 : f32
    %133 = vector.broadcast %cst_32 : f32 to vector<8x128xf32>
    %134 = arith.addf %133, %132 : vector<8x128xf32>
    %135 = arith.divf %133, %134 : vector<8x128xf32>
    %136 = vector.extract_strided_slice %129 {offsets = [0, 128], sizes = [8, 128], strides = [1, 1]} : vector<8x512xf32> to vector<8x128xf32>
    %137 = arith.negf %136 : vector<8x128xf32>
    %138 = math.exp %137 : vector<8x128xf32>
    %cst_33 = arith.constant 1.000000e+00 : f32
    %139 = vector.broadcast %cst_33 : f32 to vector<8x128xf32>
    %140 = arith.addf %139, %138 : vector<8x128xf32>
    %141 = arith.divf %139, %140 : vector<8x128xf32>
    %142 = vector.extract_strided_slice %129 {offsets = [0, 256], sizes = [8, 128], strides = [1, 1]} : vector<8x512xf32> to vector<8x128xf32>
    %143 = math.tanh %142 : vector<8x128xf32>
    %144 = vector.extract_strided_slice %129 {offsets = [0, 384], sizes = [8, 128], strides = [1, 1]} : vector<8x512xf32> to vector<8x128xf32>
    %145 = arith.negf %144 : vector<8x128xf32>
    %146 = math.exp %145 : vector<8x128xf32>
    %cst_34 = arith.constant 1.000000e+00 : f32
    %147 = vector.broadcast %cst_34 : f32 to vector<8x128xf32>
    %148 = arith.addf %147, %146 : vector<8x128xf32>
    %149 = arith.divf %147, %148 : vector<8x128xf32>
    %150 = arith.mulf %141, %92 : vector<8x128xf32>
    %151 = arith.mulf %135, %143 : vector<8x128xf32>
    %152 = arith.addf %150, %151 : vector<8x128xf32>
    %153 = math.tanh %152 : vector<8x128xf32>
    %154 = arith.mulf %149, %153 : vector<8x128xf32>
    %cst_35 = arith.constant dense<0.000000e+00> : vector<8x512xf32>
    %155 = tpu.matmul %154, %1, %cst_35 {dimension_numbers = #tpu.dot_dimension_numbers<[1], [0], [0], [1], [0, 0, 1, 1], [], []>} : vector<8x128xf32>, vector<128x512xf32>, vector<8x512xf32> -> vector<8x512xf32>
    %cst_36 = arith.constant dense<0.000000e+00> : vector<8x512xf32>
    %156 = tpu.matmul %124, %2, %cst_36 {dimension_numbers = #tpu.dot_dimension_numbers<[1], [0], [0], [1], [0, 0, 1, 1], [], []>} : vector<8x128xf32>, vector<128x512xf32>, vector<8x512xf32> -> vector<8x512xf32>
    %157 = arith.addf %155, %156 : vector<8x512xf32>
    %158 = vector.broadcast %3 : vector<1x512xf32> to vector<8x512xf32>
    %159 = arith.addf %157, %158 : vector<8x512xf32>
    %160 = vector.extract_strided_slice %159 {offsets = [0, 0], sizes = [8, 128], strides = [1, 1]} : vector<8x512xf32> to vector<8x128xf32>
    %161 = arith.negf %160 : vector<8x128xf32>
    %162 = math.exp %161 : vector<8x128xf32>
    %cst_37 = arith.constant 1.000000e+00 : f32
    %163 = vector.broadcast %cst_37 : f32 to vector<8x128xf32>
    %164 = arith.addf %163, %162 : vector<8x128xf32>
    %165 = arith.divf %163, %164 : vector<8x128xf32>
    %166 = vector.extract_strided_slice %159 {offsets = [0, 128], sizes = [8, 128], strides = [1, 1]} : vector<8x512xf32> to vector<8x128xf32>
    %167 = arith.negf %166 : vector<8x128xf32>
    %168 = math.exp %167 : vector<8x128xf32>
    %cst_38 = arith.constant 1.000000e+00 : f32
    %169 = vector.broadcast %cst_38 : f32 to vector<8x128xf32>
    %170 = arith.addf %169, %168 : vector<8x128xf32>
    %171 = arith.divf %169, %170 : vector<8x128xf32>
    %172 = vector.extract_strided_slice %159 {offsets = [0, 256], sizes = [8, 128], strides = [1, 1]} : vector<8x512xf32> to vector<8x128xf32>
    %173 = math.tanh %172 : vector<8x128xf32>
    %174 = vector.extract_strided_slice %159 {offsets = [0, 384], sizes = [8, 128], strides = [1, 1]} : vector<8x512xf32> to vector<8x128xf32>
    %175 = arith.negf %174 : vector<8x128xf32>
    %176 = math.exp %175 : vector<8x128xf32>
    %cst_39 = arith.constant 1.000000e+00 : f32
    %177 = vector.broadcast %cst_39 : f32 to vector<8x128xf32>
    %178 = arith.addf %177, %176 : vector<8x128xf32>
    %179 = arith.divf %177, %178 : vector<8x128xf32>
    %180 = arith.mulf %171, %122 : vector<8x128xf32>
    %181 = arith.mulf %165, %173 : vector<8x128xf32>
    %182 = arith.addf %180, %181 : vector<8x128xf32>
    %183 = math.tanh %182 : vector<8x128xf32>
    %184 = arith.mulf %179, %183 : vector<8x128xf32>
    %c3_i32 = arith.constant 3 : i32
    %185 = arith.index_cast %c3_i32 : i32 to index
    %c0_40 = arith.constant 0 : index
    %c0_41 = arith.constant 0 : index
    %186 = vector.load %arg0[%185, %c0_40, %c0_41] : memref<8x8x512xf32, #tpu.memory_space<vmem>>, vector<1x8x512xf32>
    %187 = vector.shape_cast %186 : vector<1x8x512xf32> to vector<8x512xf32>
    %cst_42 = arith.constant dense<0.000000e+00> : vector<8x512xf32>
    %188 = tpu.matmul %154, %0, %cst_42 {dimension_numbers = #tpu.dot_dimension_numbers<[1], [0], [0], [1], [0, 0, 1, 1], [], []>} : vector<8x128xf32>, vector<128x512xf32>, vector<8x512xf32> -> vector<8x512xf32>
    %189 = arith.addf %187, %188 : vector<8x512xf32>
    %190 = vector.extract_strided_slice %189 {offsets = [0, 0], sizes = [8, 128], strides = [1, 1]} : vector<8x512xf32> to vector<8x128xf32>
    %191 = arith.negf %190 : vector<8x128xf32>
    %192 = math.exp %191 : vector<8x128xf32>
    %cst_43 = arith.constant 1.000000e+00 : f32
    %193 = vector.broadcast %cst_43 : f32 to vector<8x128xf32>
    %194 = arith.addf %193, %192 : vector<8x128xf32>
    %195 = arith.divf %193, %194 : vector<8x128xf32>
    %196 = vector.extract_strided_slice %189 {offsets = [0, 128], sizes = [8, 128], strides = [1, 1]} : vector<8x512xf32> to vector<8x128xf32>
    %197 = arith.negf %196 : vector<8x128xf32>
    %198 = math.exp %197 : vector<8x128xf32>
    %cst_44 = arith.constant 1.000000e+00 : f32
    %199 = vector.broadcast %cst_44 : f32 to vector<8x128xf32>
    %200 = arith.addf %199, %198 : vector<8x128xf32>
    %201 = arith.divf %199, %200 : vector<8x128xf32>
    %202 = vector.extract_strided_slice %189 {offsets = [0, 256], sizes = [8, 128], strides = [1, 1]} : vector<8x512xf32> to vector<8x128xf32>
    %203 = math.tanh %202 : vector<8x128xf32>
    %204 = vector.extract_strided_slice %189 {offsets = [0, 384], sizes = [8, 128], strides = [1, 1]} : vector<8x512xf32> to vector<8x128xf32>
    %205 = arith.negf %204 : vector<8x128xf32>
    %206 = math.exp %205 : vector<8x128xf32>
    %cst_45 = arith.constant 1.000000e+00 : f32
    %207 = vector.broadcast %cst_45 : f32 to vector<8x128xf32>
    %208 = arith.addf %207, %206 : vector<8x128xf32>
    %209 = arith.divf %207, %208 : vector<8x128xf32>
    %210 = arith.mulf %201, %152 : vector<8x128xf32>
    %211 = arith.mulf %195, %203 : vector<8x128xf32>
    %212 = arith.addf %210, %211 : vector<8x128xf32>
    %213 = math.tanh %212 : vector<8x128xf32>
    %214 = arith.mulf %209, %213 : vector<8x128xf32>
    %cst_46 = arith.constant dense<0.000000e+00> : vector<8x512xf32>
    %215 = tpu.matmul %214, %1, %cst_46 {dimension_numbers = #tpu.dot_dimension_numbers<[1], [0], [0], [1], [0, 0, 1, 1], [], []>} : vector<8x128xf32>, vector<128x512xf32>, vector<8x512xf32> -> vector<8x512xf32>
    %cst_47 = arith.constant dense<0.000000e+00> : vector<8x512xf32>
    %216 = tpu.matmul %184, %2, %cst_47 {dimension_numbers = #tpu.dot_dimension_numbers<[1], [0], [0], [1], [0, 0, 1, 1], [], []>} : vector<8x128xf32>, vector<128x512xf32>, vector<8x512xf32> -> vector<8x512xf32>
    %217 = arith.addf %215, %216 : vector<8x512xf32>
    %218 = vector.broadcast %3 : vector<1x512xf32> to vector<8x512xf32>
    %219 = arith.addf %217, %218 : vector<8x512xf32>
    %220 = vector.extract_strided_slice %219 {offsets = [0, 0], sizes = [8, 128], strides = [1, 1]} : vector<8x512xf32> to vector<8x128xf32>
    %221 = arith.negf %220 : vector<8x128xf32>
    %222 = math.exp %221 : vector<8x128xf32>
    %cst_48 = arith.constant 1.000000e+00 : f32
    %223 = vector.broadcast %cst_48 : f32 to vector<8x128xf32>
    %224 = arith.addf %223, %222 : vector<8x128xf32>
    %225 = arith.divf %223, %224 : vector<8x128xf32>
    %226 = vector.extract_strided_slice %219 {offsets = [0, 128], sizes = [8, 128], strides = [1, 1]} : vector<8x512xf32> to vector<8x128xf32>
    %227 = arith.negf %226 : vector<8x128xf32>
    %228 = math.exp %227 : vector<8x128xf32>
    %cst_49 = arith.constant 1.000000e+00 : f32
    %229 = vector.broadcast %cst_49 : f32 to vector<8x128xf32>
    %230 = arith.addf %229, %228 : vector<8x128xf32>
    %231 = arith.divf %229, %230 : vector<8x128xf32>
    %232 = vector.extract_strided_slice %219 {offsets = [0, 256], sizes = [8, 128], strides = [1, 1]} : vector<8x512xf32> to vector<8x128xf32>
    %233 = math.tanh %232 : vector<8x128xf32>
    %234 = vector.extract_strided_slice %219 {offsets = [0, 384], sizes = [8, 128], strides = [1, 1]} : vector<8x512xf32> to vector<8x128xf32>
    %235 = arith.negf %234 : vector<8x128xf32>
    %236 = math.exp %235 : vector<8x128xf32>
    %cst_50 = arith.constant 1.000000e+00 : f32
    %237 = vector.broadcast %cst_50 : f32 to vector<8x128xf32>
    %238 = arith.addf %237, %236 : vector<8x128xf32>
    %239 = arith.divf %237, %238 : vector<8x128xf32>
    %240 = arith.mulf %231, %182 : vector<8x128xf32>
    %241 = arith.mulf %225, %233 : vector<8x128xf32>
    %242 = arith.addf %240, %241 : vector<8x128xf32>
    %243 = math.tanh %242 : vector<8x128xf32>
    %244 = arith.mulf %239, %243 : vector<8x128xf32>
    %c4_i32 = arith.constant 4 : i32
    %245 = arith.index_cast %c4_i32 : i32 to index
    %c0_51 = arith.constant 0 : index
    %c0_52 = arith.constant 0 : index
    %246 = vector.load %arg0[%245, %c0_51, %c0_52] : memref<8x8x512xf32, #tpu.memory_space<vmem>>, vector<1x8x512xf32>
    %247 = vector.shape_cast %246 : vector<1x8x512xf32> to vector<8x512xf32>
    %cst_53 = arith.constant dense<0.000000e+00> : vector<8x512xf32>
    %248 = tpu.matmul %214, %0, %cst_53 {dimension_numbers = #tpu.dot_dimension_numbers<[1], [0], [0], [1], [0, 0, 1, 1], [], []>} : vector<8x128xf32>, vector<128x512xf32>, vector<8x512xf32> -> vector<8x512xf32>
    %249 = arith.addf %247, %248 : vector<8x512xf32>
    %250 = vector.extract_strided_slice %249 {offsets = [0, 0], sizes = [8, 128], strides = [1, 1]} : vector<8x512xf32> to vector<8x128xf32>
    %251 = arith.negf %250 : vector<8x128xf32>
    %252 = math.exp %251 : vector<8x128xf32>
    %cst_54 = arith.constant 1.000000e+00 : f32
    %253 = vector.broadcast %cst_54 : f32 to vector<8x128xf32>
    %254 = arith.addf %253, %252 : vector<8x128xf32>
    %255 = arith.divf %253, %254 : vector<8x128xf32>
    %256 = vector.extract_strided_slice %249 {offsets = [0, 128], sizes = [8, 128], strides = [1, 1]} : vector<8x512xf32> to vector<8x128xf32>
    %257 = arith.negf %256 : vector<8x128xf32>
    %258 = math.exp %257 : vector<8x128xf32>
    %cst_55 = arith.constant 1.000000e+00 : f32
    %259 = vector.broadcast %cst_55 : f32 to vector<8x128xf32>
    %260 = arith.addf %259, %258 : vector<8x128xf32>
    %261 = arith.divf %259, %260 : vector<8x128xf32>
    %262 = vector.extract_strided_slice %249 {offsets = [0, 256], sizes = [8, 128], strides = [1, 1]} : vector<8x512xf32> to vector<8x128xf32>
    %263 = math.tanh %262 : vector<8x128xf32>
    %264 = vector.extract_strided_slice %249 {offsets = [0, 384], sizes = [8, 128], strides = [1, 1]} : vector<8x512xf32> to vector<8x128xf32>
    %265 = arith.negf %264 : vector<8x128xf32>
    %266 = math.exp %265 : vector<8x128xf32>
    %cst_56 = arith.constant 1.000000e+00 : f32
    %267 = vector.broadcast %cst_56 : f32 to vector<8x128xf32>
    %268 = arith.addf %267, %266 : vector<8x128xf32>
    %269 = arith.divf %267, %268 : vector<8x128xf32>
    %270 = arith.mulf %261, %212 : vector<8x128xf32>
    %271 = arith.mulf %255, %263 : vector<8x128xf32>
    %272 = arith.addf %270, %271 : vector<8x128xf32>
    %273 = math.tanh %272 : vector<8x128xf32>
    %274 = arith.mulf %269, %273 : vector<8x128xf32>
    %cst_57 = arith.constant dense<0.000000e+00> : vector<8x512xf32>
    %275 = tpu.matmul %274, %1, %cst_57 {dimension_numbers = #tpu.dot_dimension_numbers<[1], [0], [0], [1], [0, 0, 1, 1], [], []>} : vector<8x128xf32>, vector<128x512xf32>, vector<8x512xf32> -> vector<8x512xf32>
    %cst_58 = arith.constant dense<0.000000e+00> : vector<8x512xf32>
    %276 = tpu.matmul %244, %2, %cst_58 {dimension_numbers = #tpu.dot_dimension_numbers<[1], [0], [0], [1], [0, 0, 1, 1], [], []>} : vector<8x128xf32>, vector<128x512xf32>, vector<8x512xf32> -> vector<8x512xf32>
    %277 = arith.addf %275, %276 : vector<8x512xf32>
    %278 = vector.broadcast %3 : vector<1x512xf32> to vector<8x512xf32>
    %279 = arith.addf %277, %278 : vector<8x512xf32>
    %280 = vector.extract_strided_slice %279 {offsets = [0, 0], sizes = [8, 128], strides = [1, 1]} : vector<8x512xf32> to vector<8x128xf32>
    %281 = arith.negf %280 : vector<8x128xf32>
    %282 = math.exp %281 : vector<8x128xf32>
    %cst_59 = arith.constant 1.000000e+00 : f32
    %283 = vector.broadcast %cst_59 : f32 to vector<8x128xf32>
    %284 = arith.addf %283, %282 : vector<8x128xf32>
    %285 = arith.divf %283, %284 : vector<8x128xf32>
    %286 = vector.extract_strided_slice %279 {offsets = [0, 128], sizes = [8, 128], strides = [1, 1]} : vector<8x512xf32> to vector<8x128xf32>
    %287 = arith.negf %286 : vector<8x128xf32>
    %288 = math.exp %287 : vector<8x128xf32>
    %cst_60 = arith.constant 1.000000e+00 : f32
    %289 = vector.broadcast %cst_60 : f32 to vector<8x128xf32>
    %290 = arith.addf %289, %288 : vector<8x128xf32>
    %291 = arith.divf %289, %290 : vector<8x128xf32>
    %292 = vector.extract_strided_slice %279 {offsets = [0, 256], sizes = [8, 128], strides = [1, 1]} : vector<8x512xf32> to vector<8x128xf32>
    %293 = math.tanh %292 : vector<8x128xf32>
    %294 = vector.extract_strided_slice %279 {offsets = [0, 384], sizes = [8, 128], strides = [1, 1]} : vector<8x512xf32> to vector<8x128xf32>
    %295 = arith.negf %294 : vector<8x128xf32>
    %296 = math.exp %295 : vector<8x128xf32>
    %cst_61 = arith.constant 1.000000e+00 : f32
    %297 = vector.broadcast %cst_61 : f32 to vector<8x128xf32>
    %298 = arith.addf %297, %296 : vector<8x128xf32>
    %299 = arith.divf %297, %298 : vector<8x128xf32>
    %300 = arith.mulf %291, %242 : vector<8x128xf32>
    %301 = arith.mulf %285, %293 : vector<8x128xf32>
    %302 = arith.addf %300, %301 : vector<8x128xf32>
    %303 = math.tanh %302 : vector<8x128xf32>
    %304 = arith.mulf %299, %303 : vector<8x128xf32>
    %c5_i32 = arith.constant 5 : i32
    %305 = arith.index_cast %c5_i32 : i32 to index
    %c0_62 = arith.constant 0 : index
    %c0_63 = arith.constant 0 : index
    %306 = vector.load %arg0[%305, %c0_62, %c0_63] : memref<8x8x512xf32, #tpu.memory_space<vmem>>, vector<1x8x512xf32>
    %307 = vector.shape_cast %306 : vector<1x8x512xf32> to vector<8x512xf32>
    %cst_64 = arith.constant dense<0.000000e+00> : vector<8x512xf32>
    %308 = tpu.matmul %274, %0, %cst_64 {dimension_numbers = #tpu.dot_dimension_numbers<[1], [0], [0], [1], [0, 0, 1, 1], [], []>} : vector<8x128xf32>, vector<128x512xf32>, vector<8x512xf32> -> vector<8x512xf32>
    %309 = arith.addf %307, %308 : vector<8x512xf32>
    %310 = vector.extract_strided_slice %309 {offsets = [0, 0], sizes = [8, 128], strides = [1, 1]} : vector<8x512xf32> to vector<8x128xf32>
    %311 = arith.negf %310 : vector<8x128xf32>
    %312 = math.exp %311 : vector<8x128xf32>
    %cst_65 = arith.constant 1.000000e+00 : f32
    %313 = vector.broadcast %cst_65 : f32 to vector<8x128xf32>
    %314 = arith.addf %313, %312 : vector<8x128xf32>
    %315 = arith.divf %313, %314 : vector<8x128xf32>
    %316 = vector.extract_strided_slice %309 {offsets = [0, 128], sizes = [8, 128], strides = [1, 1]} : vector<8x512xf32> to vector<8x128xf32>
    %317 = arith.negf %316 : vector<8x128xf32>
    %318 = math.exp %317 : vector<8x128xf32>
    %cst_66 = arith.constant 1.000000e+00 : f32
    %319 = vector.broadcast %cst_66 : f32 to vector<8x128xf32>
    %320 = arith.addf %319, %318 : vector<8x128xf32>
    %321 = arith.divf %319, %320 : vector<8x128xf32>
    %322 = vector.extract_strided_slice %309 {offsets = [0, 256], sizes = [8, 128], strides = [1, 1]} : vector<8x512xf32> to vector<8x128xf32>
    %323 = math.tanh %322 : vector<8x128xf32>
    %324 = vector.extract_strided_slice %309 {offsets = [0, 384], sizes = [8, 128], strides = [1, 1]} : vector<8x512xf32> to vector<8x128xf32>
    %325 = arith.negf %324 : vector<8x128xf32>
    %326 = math.exp %325 : vector<8x128xf32>
    %cst_67 = arith.constant 1.000000e+00 : f32
    %327 = vector.broadcast %cst_67 : f32 to vector<8x128xf32>
    %328 = arith.addf %327, %326 : vector<8x128xf32>
    %329 = arith.divf %327, %328 : vector<8x128xf32>
    %330 = arith.mulf %321, %272 : vector<8x128xf32>
    %331 = arith.mulf %315, %323 : vector<8x128xf32>
    %332 = arith.addf %330, %331 : vector<8x128xf32>
    %333 = math.tanh %332 : vector<8x128xf32>
    %334 = arith.mulf %329, %333 : vector<8x128xf32>
    %cst_68 = arith.constant dense<0.000000e+00> : vector<8x512xf32>
    %335 = tpu.matmul %334, %1, %cst_68 {dimension_numbers = #tpu.dot_dimension_numbers<[1], [0], [0], [1], [0, 0, 1, 1], [], []>} : vector<8x128xf32>, vector<128x512xf32>, vector<8x512xf32> -> vector<8x512xf32>
    %cst_69 = arith.constant dense<0.000000e+00> : vector<8x512xf32>
    %336 = tpu.matmul %304, %2, %cst_69 {dimension_numbers = #tpu.dot_dimension_numbers<[1], [0], [0], [1], [0, 0, 1, 1], [], []>} : vector<8x128xf32>, vector<128x512xf32>, vector<8x512xf32> -> vector<8x512xf32>
    %337 = arith.addf %335, %336 : vector<8x512xf32>
    %338 = vector.broadcast %3 : vector<1x512xf32> to vector<8x512xf32>
    %339 = arith.addf %337, %338 : vector<8x512xf32>
    %340 = vector.extract_strided_slice %339 {offsets = [0, 0], sizes = [8, 128], strides = [1, 1]} : vector<8x512xf32> to vector<8x128xf32>
    %341 = arith.negf %340 : vector<8x128xf32>
    %342 = math.exp %341 : vector<8x128xf32>
    %cst_70 = arith.constant 1.000000e+00 : f32
    %343 = vector.broadcast %cst_70 : f32 to vector<8x128xf32>
    %344 = arith.addf %343, %342 : vector<8x128xf32>
    %345 = arith.divf %343, %344 : vector<8x128xf32>
    %346 = vector.extract_strided_slice %339 {offsets = [0, 128], sizes = [8, 128], strides = [1, 1]} : vector<8x512xf32> to vector<8x128xf32>
    %347 = arith.negf %346 : vector<8x128xf32>
    %348 = math.exp %347 : vector<8x128xf32>
    %cst_71 = arith.constant 1.000000e+00 : f32
    %349 = vector.broadcast %cst_71 : f32 to vector<8x128xf32>
    %350 = arith.addf %349, %348 : vector<8x128xf32>
    %351 = arith.divf %349, %350 : vector<8x128xf32>
    %352 = vector.extract_strided_slice %339 {offsets = [0, 256], sizes = [8, 128], strides = [1, 1]} : vector<8x512xf32> to vector<8x128xf32>
    %353 = math.tanh %352 : vector<8x128xf32>
    %354 = vector.extract_strided_slice %339 {offsets = [0, 384], sizes = [8, 128], strides = [1, 1]} : vector<8x512xf32> to vector<8x128xf32>
    %355 = arith.negf %354 : vector<8x128xf32>
    %356 = math.exp %355 : vector<8x128xf32>
    %cst_72 = arith.constant 1.000000e+00 : f32
    %357 = vector.broadcast %cst_72 : f32 to vector<8x128xf32>
    %358 = arith.addf %357, %356 : vector<8x128xf32>
    %359 = arith.divf %357, %358 : vector<8x128xf32>
    %360 = arith.mulf %351, %302 : vector<8x128xf32>
    %361 = arith.mulf %345, %353 : vector<8x128xf32>
    %362 = arith.addf %360, %361 : vector<8x128xf32>
    %363 = math.tanh %362 : vector<8x128xf32>
    %364 = arith.mulf %359, %363 : vector<8x128xf32>
    %c6_i32 = arith.constant 6 : i32
    %365 = arith.index_cast %c6_i32 : i32 to index
    %c0_73 = arith.constant 0 : index
    %c0_74 = arith.constant 0 : index
    %366 = vector.load %arg0[%365, %c0_73, %c0_74] : memref<8x8x512xf32, #tpu.memory_space<vmem>>, vector<1x8x512xf32>
    %367 = vector.shape_cast %366 : vector<1x8x512xf32> to vector<8x512xf32>
    %cst_75 = arith.constant dense<0.000000e+00> : vector<8x512xf32>
    %368 = tpu.matmul %334, %0, %cst_75 {dimension_numbers = #tpu.dot_dimension_numbers<[1], [0], [0], [1], [0, 0, 1, 1], [], []>} : vector<8x128xf32>, vector<128x512xf32>, vector<8x512xf32> -> vector<8x512xf32>
    %369 = arith.addf %367, %368 : vector<8x512xf32>
    %370 = vector.extract_strided_slice %369 {offsets = [0, 0], sizes = [8, 128], strides = [1, 1]} : vector<8x512xf32> to vector<8x128xf32>
    %371 = arith.negf %370 : vector<8x128xf32>
    %372 = math.exp %371 : vector<8x128xf32>
    %cst_76 = arith.constant 1.000000e+00 : f32
    %373 = vector.broadcast %cst_76 : f32 to vector<8x128xf32>
    %374 = arith.addf %373, %372 : vector<8x128xf32>
    %375 = arith.divf %373, %374 : vector<8x128xf32>
    %376 = vector.extract_strided_slice %369 {offsets = [0, 128], sizes = [8, 128], strides = [1, 1]} : vector<8x512xf32> to vector<8x128xf32>
    %377 = arith.negf %376 : vector<8x128xf32>
    %378 = math.exp %377 : vector<8x128xf32>
    %cst_77 = arith.constant 1.000000e+00 : f32
    %379 = vector.broadcast %cst_77 : f32 to vector<8x128xf32>
    %380 = arith.addf %379, %378 : vector<8x128xf32>
    %381 = arith.divf %379, %380 : vector<8x128xf32>
    %382 = vector.extract_strided_slice %369 {offsets = [0, 256], sizes = [8, 128], strides = [1, 1]} : vector<8x512xf32> to vector<8x128xf32>
    %383 = math.tanh %382 : vector<8x128xf32>
    %384 = vector.extract_strided_slice %369 {offsets = [0, 384], sizes = [8, 128], strides = [1, 1]} : vector<8x512xf32> to vector<8x128xf32>
    %385 = arith.negf %384 : vector<8x128xf32>
    %386 = math.exp %385 : vector<8x128xf32>
    %cst_78 = arith.constant 1.000000e+00 : f32
    %387 = vector.broadcast %cst_78 : f32 to vector<8x128xf32>
    %388 = arith.addf %387, %386 : vector<8x128xf32>
    %389 = arith.divf %387, %388 : vector<8x128xf32>
    %390 = arith.mulf %381, %332 : vector<8x128xf32>
    %391 = arith.mulf %375, %383 : vector<8x128xf32>
    %392 = arith.addf %390, %391 : vector<8x128xf32>
    %393 = math.tanh %392 : vector<8x128xf32>
    %394 = arith.mulf %389, %393 : vector<8x128xf32>
    %cst_79 = arith.constant dense<0.000000e+00> : vector<8x512xf32>
    %395 = tpu.matmul %394, %1, %cst_79 {dimension_numbers = #tpu.dot_dimension_numbers<[1], [0], [0], [1], [0, 0, 1, 1], [], []>} : vector<8x128xf32>, vector<128x512xf32>, vector<8x512xf32> -> vector<8x512xf32>
    %cst_80 = arith.constant dense<0.000000e+00> : vector<8x512xf32>
    %396 = tpu.matmul %364, %2, %cst_80 {dimension_numbers = #tpu.dot_dimension_numbers<[1], [0], [0], [1], [0, 0, 1, 1], [], []>} : vector<8x128xf32>, vector<128x512xf32>, vector<8x512xf32> -> vector<8x512xf32>
    %397 = arith.addf %395, %396 : vector<8x512xf32>
    %398 = vector.broadcast %3 : vector<1x512xf32> to vector<8x512xf32>
    %399 = arith.addf %397, %398 : vector<8x512xf32>
    %400 = vector.extract_strided_slice %399 {offsets = [0, 0], sizes = [8, 128], strides = [1, 1]} : vector<8x512xf32> to vector<8x128xf32>
    %401 = arith.negf %400 : vector<8x128xf32>
    %402 = math.exp %401 : vector<8x128xf32>
    %cst_81 = arith.constant 1.000000e+00 : f32
    %403 = vector.broadcast %cst_81 : f32 to vector<8x128xf32>
    %404 = arith.addf %403, %402 : vector<8x128xf32>
    %405 = arith.divf %403, %404 : vector<8x128xf32>
    %406 = vector.extract_strided_slice %399 {offsets = [0, 128], sizes = [8, 128], strides = [1, 1]} : vector<8x512xf32> to vector<8x128xf32>
    %407 = arith.negf %406 : vector<8x128xf32>
    %408 = math.exp %407 : vector<8x128xf32>
    %cst_82 = arith.constant 1.000000e+00 : f32
    %409 = vector.broadcast %cst_82 : f32 to vector<8x128xf32>
    %410 = arith.addf %409, %408 : vector<8x128xf32>
    %411 = arith.divf %409, %410 : vector<8x128xf32>
    %412 = vector.extract_strided_slice %399 {offsets = [0, 256], sizes = [8, 128], strides = [1, 1]} : vector<8x512xf32> to vector<8x128xf32>
    %413 = math.tanh %412 : vector<8x128xf32>
    %414 = vector.extract_strided_slice %399 {offsets = [0, 384], sizes = [8, 128], strides = [1, 1]} : vector<8x512xf32> to vector<8x128xf32>
    %415 = arith.negf %414 : vector<8x128xf32>
    %416 = math.exp %415 : vector<8x128xf32>
    %cst_83 = arith.constant 1.000000e+00 : f32
    %417 = vector.broadcast %cst_83 : f32 to vector<8x128xf32>
    %418 = arith.addf %417, %416 : vector<8x128xf32>
    %419 = arith.divf %417, %418 : vector<8x128xf32>
    %420 = arith.mulf %411, %362 : vector<8x128xf32>
    %421 = arith.mulf %405, %413 : vector<8x128xf32>
    %422 = arith.addf %420, %421 : vector<8x128xf32>
    %423 = math.tanh %422 : vector<8x128xf32>
    %424 = arith.mulf %419, %423 : vector<8x128xf32>
    %c7_i32 = arith.constant 7 : i32
    %425 = arith.index_cast %c7_i32 : i32 to index
    %c0_84 = arith.constant 0 : index
    %c0_85 = arith.constant 0 : index
    %426 = vector.load %arg0[%425, %c0_84, %c0_85] : memref<8x8x512xf32, #tpu.memory_space<vmem>>, vector<1x8x512xf32>
    %427 = vector.shape_cast %426 : vector<1x8x512xf32> to vector<8x512xf32>
    %cst_86 = arith.constant dense<0.000000e+00> : vector<8x512xf32>
    %428 = tpu.matmul %394, %0, %cst_86 {dimension_numbers = #tpu.dot_dimension_numbers<[1], [0], [0], [1], [0, 0, 1, 1], [], []>} : vector<8x128xf32>, vector<128x512xf32>, vector<8x512xf32> -> vector<8x512xf32>
    %429 = arith.addf %427, %428 : vector<8x512xf32>
    %430 = vector.extract_strided_slice %429 {offsets = [0, 0], sizes = [8, 128], strides = [1, 1]} : vector<8x512xf32> to vector<8x128xf32>
    %431 = arith.negf %430 : vector<8x128xf32>
    %432 = math.exp %431 : vector<8x128xf32>
    %cst_87 = arith.constant 1.000000e+00 : f32
    %433 = vector.broadcast %cst_87 : f32 to vector<8x128xf32>
    %434 = arith.addf %433, %432 : vector<8x128xf32>
    %435 = arith.divf %433, %434 : vector<8x128xf32>
    %436 = vector.extract_strided_slice %429 {offsets = [0, 128], sizes = [8, 128], strides = [1, 1]} : vector<8x512xf32> to vector<8x128xf32>
    %437 = arith.negf %436 : vector<8x128xf32>
    %438 = math.exp %437 : vector<8x128xf32>
    %cst_88 = arith.constant 1.000000e+00 : f32
    %439 = vector.broadcast %cst_88 : f32 to vector<8x128xf32>
    %440 = arith.addf %439, %438 : vector<8x128xf32>
    %441 = arith.divf %439, %440 : vector<8x128xf32>
    %442 = vector.extract_strided_slice %429 {offsets = [0, 256], sizes = [8, 128], strides = [1, 1]} : vector<8x512xf32> to vector<8x128xf32>
    %443 = math.tanh %442 : vector<8x128xf32>
    %444 = vector.extract_strided_slice %429 {offsets = [0, 384], sizes = [8, 128], strides = [1, 1]} : vector<8x512xf32> to vector<8x128xf32>
    %445 = arith.negf %444 : vector<8x128xf32>
    %446 = math.exp %445 : vector<8x128xf32>
    %cst_89 = arith.constant 1.000000e+00 : f32
    %447 = vector.broadcast %cst_89 : f32 to vector<8x128xf32>
    %448 = arith.addf %447, %446 : vector<8x128xf32>
    %449 = arith.divf %447, %448 : vector<8x128xf32>
    %450 = arith.mulf %441, %392 : vector<8x128xf32>
    %451 = arith.mulf %435, %443 : vector<8x128xf32>
    %452 = arith.addf %450, %451 : vector<8x128xf32>
    %453 = math.tanh %452 : vector<8x128xf32>
    %454 = arith.mulf %449, %453 : vector<8x128xf32>
    %cst_90 = arith.constant dense<0.000000e+00> : vector<8x512xf32>
    %455 = tpu.matmul %454, %1, %cst_90 {dimension_numbers = #tpu.dot_dimension_numbers<[1], [0], [0], [1], [0, 0, 1, 1], [], []>} : vector<8x128xf32>, vector<128x512xf32>, vector<8x512xf32> -> vector<8x512xf32>
    %cst_91 = arith.constant dense<0.000000e+00> : vector<8x512xf32>
    %456 = tpu.matmul %424, %2, %cst_91 {dimension_numbers = #tpu.dot_dimension_numbers<[1], [0], [0], [1], [0, 0, 1, 1], [], []>} : vector<8x128xf32>, vector<128x512xf32>, vector<8x512xf32> -> vector<8x512xf32>
    %457 = arith.addf %455, %456 : vector<8x512xf32>
    %458 = vector.broadcast %3 : vector<1x512xf32> to vector<8x512xf32>
    %459 = arith.addf %457, %458 : vector<8x512xf32>
    %460 = vector.extract_strided_slice %459 {offsets = [0, 0], sizes = [8, 128], strides = [1, 1]} : vector<8x512xf32> to vector<8x128xf32>
    %461 = arith.negf %460 : vector<8x128xf32>
    %462 = math.exp %461 : vector<8x128xf32>
    %cst_92 = arith.constant 1.000000e+00 : f32
    %463 = vector.broadcast %cst_92 : f32 to vector<8x128xf32>
    %464 = arith.addf %463, %462 : vector<8x128xf32>
    %465 = arith.divf %463, %464 : vector<8x128xf32>
    %466 = vector.extract_strided_slice %459 {offsets = [0, 128], sizes = [8, 128], strides = [1, 1]} : vector<8x512xf32> to vector<8x128xf32>
    %467 = arith.negf %466 : vector<8x128xf32>
    %468 = math.exp %467 : vector<8x128xf32>
    %cst_93 = arith.constant 1.000000e+00 : f32
    %469 = vector.broadcast %cst_93 : f32 to vector<8x128xf32>
    %470 = arith.addf %469, %468 : vector<8x128xf32>
    %471 = arith.divf %469, %470 : vector<8x128xf32>
    %472 = vector.extract_strided_slice %459 {offsets = [0, 256], sizes = [8, 128], strides = [1, 1]} : vector<8x512xf32> to vector<8x128xf32>
    %473 = math.tanh %472 : vector<8x128xf32>
    %474 = vector.extract_strided_slice %459 {offsets = [0, 384], sizes = [8, 128], strides = [1, 1]} : vector<8x512xf32> to vector<8x128xf32>
    %475 = arith.negf %474 : vector<8x128xf32>
    %476 = math.exp %475 : vector<8x128xf32>
    %cst_94 = arith.constant 1.000000e+00 : f32
    %477 = vector.broadcast %cst_94 : f32 to vector<8x128xf32>
    %478 = arith.addf %477, %476 : vector<8x128xf32>
    %479 = arith.divf %477, %478 : vector<8x128xf32>
    %480 = arith.mulf %471, %422 : vector<8x128xf32>
    %481 = arith.mulf %465, %473 : vector<8x128xf32>
    %482 = arith.addf %480, %481 : vector<8x128xf32>
    %483 = math.tanh %482 : vector<8x128xf32>
    %484 = arith.mulf %479, %483 : vector<8x128xf32>
    %c8_i32 = arith.constant 8 : i32
    %c0_95 = arith.constant 0 : index
    %c0_96 = arith.constant 0 : index
    %c0_97 = arith.constant 0 : index
    %485 = vector.load %arg5[%c0_95, %c0_96, %c0_97] : memref<2x8x128xf32, #tpu.memory_space<vmem>>, vector<1x8x128xf32>
    %486 = vector.shape_cast %485 : vector<1x8x128xf32> to vector<8x128xf32>
    %487 = vector.shape_cast %454 : vector<8x128xf32> to vector<1x8x128xf32>
    tpu.vector_store %arg5[%c0_95, %c0_96, %c0_97], %487 {strides = array<i32>} : memref<2x8x128xf32, #tpu.memory_space<vmem>>, vector<1x8x128xf32>,
    %c1 = arith.constant 1 : index
    %c0_98 = arith.constant 0 : index
    %c0_99 = arith.constant 0 : index
    %488 = vector.load %arg5[%c1, %c0_98, %c0_99] : memref<2x8x128xf32, #tpu.memory_space<vmem>>, vector<1x8x128xf32>
    %489 = vector.shape_cast %488 : vector<1x8x128xf32> to vector<8x128xf32>
    %490 = vector.shape_cast %484 : vector<8x128xf32> to vector<1x8x128xf32>
    tpu.vector_store %arg5[%c1, %c0_98, %c0_99], %490 {strides = array<i32>} : memref<2x8x128xf32, #tpu.memory_space<vmem>>, vector<1x8x128xf32>,
    %c0_100 = arith.constant 0 : index
    %c0_101 = arith.constant 0 : index
    %c0_102 = arith.constant 0 : index
    %491 = vector.load %arg6[%c0_100, %c0_101, %c0_102] : memref<2x8x128xf32, #tpu.memory_space<vmem>>, vector<1x8x128xf32>
    %492 = vector.shape_cast %491 : vector<1x8x128xf32> to vector<8x128xf32>
    %493 = vector.shape_cast %452 : vector<8x128xf32> to vector<1x8x128xf32>
    tpu.vector_store %arg6[%c0_100, %c0_101, %c0_102], %493 {strides = array<i32>} : memref<2x8x128xf32, #tpu.memory_space<vmem>>, vector<1x8x128xf32>,
    %c1_103 = arith.constant 1 : index
    %c0_104 = arith.constant 0 : index
    %c0_105 = arith.constant 0 : index
    %494 = vector.load %arg6[%c1_103, %c0_104, %c0_105] : memref<2x8x128xf32, #tpu.memory_space<vmem>>, vector<1x8x128xf32>
    %495 = vector.shape_cast %494 : vector<1x8x128xf32> to vector<8x128xf32>
    %496 = vector.shape_cast %482 : vector<8x128xf32> to vector<1x8x128xf32>
    tpu.vector_store %arg6[%c1_103, %c0_104, %c0_105], %496 {strides = array<i32>} : memref<2x8x128xf32, #tpu.memory_space<vmem>>, vector<1x8x128xf32>,
    return
  }
}

</mosaic_0001>

<llo_original>
// kernel: encoder_lstm_forward.1
$region0: #{encoder_lstm_forward.1}
  #allocation0 [shape = 'u32[]', space=smem, size = 0x4, offset = 0x4, fixed_abs, tag = 'smem constant byte address 0x4 - core index']
  #allocation1 [shape = 'u32[72,128]{1,0:T(1,128)}', space=vmem, size = 0x9000, scoped, tag = 'internal scratch']
  %s0 = inlined_call_operand.vmem [shape: f32[8,8,512], index: 0, kind: input, shape index: {}]
  %s1 = inlined_call_operand.vmem [shape: f32[128,512], index: 1, kind: input, shape index: {}]
  %s2 = inlined_call_operand.vmem [shape: f32[128,512], index: 2, kind: input, shape index: {}]
  %s3 = inlined_call_operand.vmem [shape: f32[128,512], index: 3, kind: input, shape index: {}]
  %s4 = inlined_call_operand.vmem [shape: f32[1,512], index: 4, kind: input, shape index: {}]
  %s5 = inlined_call_operand.vmem [shape: f32[2,8,128], index: 5, kind: output, shape index: {0}]
  %s6 = inlined_call_operand.vmem [shape: f32[2,8,128], index: 6, kind: output, shape index: {1}]
  %7 = xla_tuple %s5, %s6
  %s8 = sld [smem:[#allocation0]]
  $region38: #{encoder_lstm_forward.1} parent=0
    _
  %s10 = ssub.s32 1, %s8
  %s11 = scalar_select 0, %s10, %s8
  // Predicated region
  $region2: #{encoder_lstm_forward.1} parent=0 // pred_check
    _
  $region3: #{encoder_lstm_forward.1} parent=0 // pred_check_branch
    %13 = sbr.rel (0) target = $region5
  $region4: #{encoder_lstm_forward.1} parent=0 // pred_region
    _
  $region5: #{encoder_lstm_forward.1} parent=0 // pred_fallthru
    _
  // Predicated region
  $region6: #{encoder_lstm_forward.1} parent=0 // pred_check
    _
  $region7: #{encoder_lstm_forward.1} parent=0 // pred_check_branch
    %15 = sbr.rel (0) target = $region9
  $region8: #{encoder_lstm_forward.1} parent=0 // pred_region
    _
  $region9: #{encoder_lstm_forward.1} parent=0 // pred_fallthru
    _
  // Predicated region
  $region10: #{encoder_lstm_forward.1} parent=0 // pred_check
    _
  $region11: #{encoder_lstm_forward.1} parent=0 // pred_check_branch
    %17 = sbr.rel (0) target = $region13
  $region12: #{encoder_lstm_forward.1} parent=0 // pred_region
    _
  $region13: #{encoder_lstm_forward.1} parent=0 // pred_fallthru
    _
  // Predicated region
  $region14: #{encoder_lstm_forward.1} parent=0 // pred_check
    _
  $region15: #{encoder_lstm_forward.1} parent=0 // pred_check_branch
    %19 = sbr.rel (0) target = $region17
  $region16: #{encoder_lstm_forward.1} parent=0 // pred_region
    _
  $region17: #{encoder_lstm_forward.1} parent=0 // pred_fallthru
    _
  // Predicated region
  $region18: #{encoder_lstm_forward.1} parent=0 // pred_check
    _
  $region19: #{encoder_lstm_forward.1} parent=0 // pred_check_branch
    %21 = sbr.rel (0) target = $region21
  $region20: #{encoder_lstm_forward.1} parent=0 // pred_region
    _
  $region21: #{encoder_lstm_forward.1} parent=0 // pred_fallthru
    _
  %v22 = vld [vmem:[%s1] sm:$0xff]
  %v23 = vld [vmem:[%s1 + $0x8] sm:$0xff]
  %v24 = vld [vmem:[%s1 + $0x10] sm:$0xff]
  %v25 = vld [vmem:[%s1 + $0x18] sm:$0xff]
  %v26 = vld [vmem:[%s1 + $0x20] sm:$0xff]
  %v27 = vld [vmem:[%s1 + $0x28] sm:$0xff]
  %v28 = vld [vmem:[%s1 + $0x30] sm:$0xff]
  %v29 = vld [vmem:[%s1 + $0x38] sm:$0xff]
  %v30 = vld [vmem:[%s1 + $0x40] sm:$0xff]
  %v31 = vld [vmem:[%s1 + $0x48] sm:$0xff]
  %v32 = vld [vmem:[%s1 + $0x50] sm:$0xff]
  %v33 = vld [vmem:[%s1 + $0x58] sm:$0xff]
  %v34 = vld [vmem:[%s1 + $0x60] sm:$0xff]
  %v35 = vld [vmem:[%s1 + $0x68] sm:$0xff]
  %v36 = vld [vmem:[%s1 + $0x70] sm:$0xff]
  %v37 = vld [vmem:[%s1 + $0x78] sm:$0xff]
  %v38 = vld [vmem:[%s1 + $0x80] sm:$0xff]
  %v39 = vld [vmem:[%s1 + $0x88] sm:$0xff]
  %v40 = vld [vmem:[%s1 + $0x90] sm:$0xff]
  %v41 = vld [vmem:[%s1 + $0x98] sm:$0xff]
  %v42 = vld [vmem:[%s1 + $0xa0] sm:$0xff]
  %v43 = vld [vmem:[%s1 + $0xa8] sm:$0xff]
  %v44 = vld [vmem:[%s1 + $0xb0] sm:$0xff]
  %v45 = vld [vmem:[%s1 + $0xb8] sm:$0xff]
  %v46 = vld [vmem:[%s1 + $0xc0] sm:$0xff]
  %v47 = vld [vmem:[%s1 + $0xc8] sm:$0xff]
  %v48 = vld [vmem:[%s1 + $0xd0] sm:$0xff]
  %v49 = vld [vmem:[%s1 + $0xd8] sm:$0xff]
  %v50 = vld [vmem:[%s1 + $0xe0] sm:$0xff]
  %v51 = vld [vmem:[%s1 + $0xe8] sm:$0xff]
  %v52 = vld [vmem:[%s1 + $0xf0] sm:$0xff]
  %v53 = vld [vmem:[%s1 + $0xf8] sm:$0xff]
  %v54 = vld [vmem:[%s1 + $0x100] sm:$0xff]
  %v55 = vld [vmem:[%s1 + $0x108] sm:$0xff]
  %v56 = vld [vmem:[%s1 + $0x110] sm:$0xff]
  %v57 = vld [vmem:[%s1 + $0x118] sm:$0xff]
  %v58 = vld [vmem:[%s1 + $0x120] sm:$0xff]
  %v59 = vld [vmem:[%s1 + $0x128] sm:$0xff]
  %v60 = vld [vmem:[%s1 + $0x130] sm:$0xff]
  %v61 = vld [vmem:[%s1 + $0x138] sm:$0xff]
  %v62 = vld [vmem:[%s1 + $0x140] sm:$0xff]
  %v63 = vld [vmem:[%s1 + $0x148] sm:$0xff]
  %v64 = vld [vmem:[%s1 + $0x150] sm:$0xff]
  %v65 = vld [vmem:[%s1 + $0x158] sm:$0xff]
  %v66 = vld [vmem:[%s1 + $0x160] sm:$0xff]
  %v67 = vld [vmem:[%s1 + $0x168] sm:$0xff]
  %v68 = vld [vmem:[%s1 + $0x170] sm:$0xff]
  %v69 = vld [vmem:[%s1 + $0x178] sm:$0xff]
  %v70 = vld [vmem:[%s1 + $0x180] sm:$0xff]
  %v71 = vld [vmem:[%s1 + $0x188] sm:$0xff]
  %v72 = vld [vmem:[%s1 + $0x190] sm:$0xff]
  %v73 = vld [vmem:[%s1 + $0x198] sm:$0xff]
  %v74 = vld [vmem:[%s1 + $0x1a0] sm:$0xff]
  %v75 = vld [vmem:[%s1 + $0x1a8] sm:$0xff]
  %v76 = vld [vmem:[%s1 + $0x1b0] sm:$0xff]
  %v77 = vld [vmem:[%s1 + $0x1b8] sm:$0xff]
  %v78 = vld [vmem:[%s1 + $0x1c0] sm:$0xff]
  %v79 = vld [vmem:[%s1 + $0x1c8] sm:$0xff]
  %v80 = vld [vmem:[%s1 + $0x1d0] sm:$0xff]
  %v81 = vld [vmem:[%s1 + $0x1d8] sm:$0xff]
  %v82 = vld [vmem:[%s1 + $0x1e0] sm:$0xff]
  %v83 = vld [vmem:[%s1 + $0x1e8] sm:$0xff]
  %v84 = vld [vmem:[%s1 + $0x1f0] sm:$0xff]
  %v85 = vld [vmem:[%s1 + $0x1f8] sm:$0xff]
  %v86 = vld [vmem:[%s2] sm:$0xff]
  %v87 = vld [vmem:[%s2 + $0x8] sm:$0xff]
  %v88 = vld [vmem:[%s2 + $0x10] sm:$0xff]
  %v89 = vld [vmem:[%s2 + $0x18] sm:$0xff]
  %v90 = vld [vmem:[%s2 + $0x20] sm:$0xff]
  %v91 = vld [vmem:[%s2 + $0x28] sm:$0xff]
  %v92 = vld [vmem:[%s2 + $0x30] sm:$0xff]
  %v93 = vld [vmem:[%s2 + $0x38] sm:$0xff]
  %v94 = vld [vmem:[%s2 + $0x40] sm:$0xff]
  %v95 = vld [vmem:[%s2 + $0x48] sm:$0xff]
  %v96 = vld [vmem:[%s2 + $0x50] sm:$0xff]
  %v97 = vld [vmem:[%s2 + $0x58] sm:$0xff]
  %v98 = vld [vmem:[%s2 + $0x60] sm:$0xff]
  %v99 = vld [vmem:[%s2 + $0x68] sm:$0xff]
  %v100 = vld [vmem:[%s2 + $0x70] sm:$0xff]
  %v101 = vld [vmem:[%s2 + $0x78] sm:$0xff]
  %v102 = vld [vmem:[%s2 + $0x80] sm:$0xff]
  %v103 = vld [vmem:[%s2 + $0x88] sm:$0xff]
  %v104 = vld [vmem:[%s2 + $0x90] sm:$0xff]
  %v105 = vld [vmem:[%s2 + $0x98] sm:$0xff]
  %v106 = vld [vmem:[%s2 + $0xa0] sm:$0xff]
  %v107 = vld [vmem:[%s2 + $0xa8] sm:$0xff]
  %v108 = vld [vmem:[%s2 + $0xb0] sm:$0xff]
  %v109 = vld [vmem:[%s2 + $0xb8] sm:$0xff]
  %v110 = vld [vmem:[%s2 + $0xc0] sm:$0xff]
  %v111 = vld [vmem:[%s2 + $0xc8] sm:$0xff]
  %v112 = vld [vmem:[%s2 + $0xd0] sm:$0xff]
  %v113 = vld [vmem:[%s2 + $0xd8] sm:$0xff]
  %v114 = vld [vmem:[%s2 + $0xe0] sm:$0xff]
  %v115 = vld [vmem:[%s2 + $0xe8] sm:$0xff]
  %v116 = vld [vmem:[%s2 + $0xf0] sm:$0xff]
  %v117 = vld [vmem:[%s2 + $0xf8] sm:$0xff]
  %v118 = vld [vmem:[%s2 + $0x100] sm:$0xff]
  %v119 = vld [vmem:[%s2 + $0x108] sm:$0xff]
  %v120 = vld [vmem:[%s2 + $0x110] sm:$0xff]
  %v121 = vld [vmem:[%s2 + $0x118] sm:$0xff]
  %v122 = vld [vmem:[%s2 + $0x120] sm:$0xff]
  %v123 = vld [vmem:[%s2 + $0x128] sm:$0xff]
  %v124 = vld [vmem:[%s2 + $0x130] sm:$0xff]
  %v125 = vld [vmem:[%s2 + $0x138] sm:$0xff]
  %v126 = vld [vmem:[%s2 + $0x140] sm:$0xff]
  %v127 = vld [vmem:[%s2 + $0x148] sm:$0xff]
  %v128 = vld [vmem:[%s2 + $0x150] sm:$0xff]
  %v129 = vld [vmem:[%s2 + $0x158] sm:$0xff]
  %v130 = vld [vmem:[%s2 + $0x160] sm:$0xff]
  %v131 = vld [vmem:[%s2 + $0x168] sm:$0xff]
  %v132 = vld [vmem:[%s2 + $0x170] sm:$0xff]
  %v133 = vld [vmem:[%s2 + $0x178] sm:$0xff]
  %v134 = vld [vmem:[%s2 + $0x180] sm:$0xff]
  %v135 = vld [vmem:[%s2 + $0x188] sm:$0xff]
  %v136 = vld [vmem:[%s2 + $0x190] sm:$0xff]
  %v137 = vld [vmem:[%s2 + $0x198] sm:$0xff]
  %v138 = vld [vmem:[%s2 + $0x1a0] sm:$0xff]
  %v139 = vld [vmem:[%s2 + $0x1a8] sm:$0xff]
  %v140 = vld [vmem:[%s2 + $0x1b0] sm:$0xff]
  %v141 = vld [vmem:[%s2 + $0x1b8] sm:$0xff]
  %v142 = vld [vmem:[%s2 + $0x1c0] sm:$0xff]
  %v143 = vld [vmem:[%s2 + $0x1c8] sm:$0xff]
  %v144 = vld [vmem:[%s2 + $0x1d0] sm:$0xff]
  %v145 = vld [vmem:[%s2 + $0x1d8] sm:$0xff]
  %v146 = vld [vmem:[%s2 + $0x1e0] sm:$0xff]
  %v147 = vld [vmem:[%s2 + $0x1e8] sm:$0xff]
  %v148 = vld [vmem:[%s2 + $0x1f0] sm:$0xff]
  %v149 = vld [vmem:[%s2 + $0x1f8] sm:$0xff]
  %v150 = vld [vmem:[%s3] sm:$0xff]
  %v151 = vld [vmem:[%s3 + $0x8] sm:$0xff]
  %v152 = vld [vmem:[%s3 + $0x10] sm:$0xff]
  %v153 = vld [vmem:[%s3 + $0x18] sm:$0xff]
  %v154 = vld [vmem:[%s3 + $0x20] sm:$0xff]
  %v155 = vld [vmem:[%s3 + $0x28] sm:$0xff]
  %v156 = vld [vmem:[%s3 + $0x30] sm:$0xff]
  %v157 = vld [vmem:[%s3 + $0x38] sm:$0xff]
  %v158 = vld [vmem:[%s3 + $0x40] sm:$0xff]
  %v159 = vld [vmem:[%s3 + $0x48] sm:$0xff]
  %v160 = vld [vmem:[%s3 + $0x50] sm:$0xff]
  %v161 = vld [vmem:[%s3 + $0x58] sm:$0xff]
  %v162 = vld [vmem:[%s3 + $0x60] sm:$0xff]
  %v163 = vld [vmem:[%s3 + $0x68] sm:$0xff]
  %v164 = vld [vmem:[%s3 + $0x70] sm:$0xff]
  %v165 = vld [vmem:[%s3 + $0x78] sm:$0xff]
  %v166 = vld [vmem:[%s3 + $0x80] sm:$0xff]
  %v167 = vld [vmem:[%s3 + $0x88] sm:$0xff]
  %v168 = vld [vmem:[%s3 + $0x90] sm:$0xff]
  %v169 = vld [vmem:[%s3 + $0x98] sm:$0xff]
  %v170 = vld [vmem:[%s3 + $0xa0] sm:$0xff]
  %v171 = vld [vmem:[%s3 + $0xa8] sm:$0xff]
  %v172 = vld [vmem:[%s3 + $0xb0] sm:$0xff]
  %v173 = vld [vmem:[%s3 + $0xb8] sm:$0xff]
  %v174 = vld [vmem:[%s3 + $0xc0] sm:$0xff]
  %v175 = vld [vmem:[%s3 + $0xc8] sm:$0xff]
  %v176 = vld [vmem:[%s3 + $0xd0] sm:$0xff]
  %v177 = vld [vmem:[%s3 + $0xd8] sm:$0xff]
  %v178 = vld [vmem:[%s3 + $0xe0] sm:$0xff]
  %v179 = vld [vmem:[%s3 + $0xe8] sm:$0xff]
  %v180 = vld [vmem:[%s3 + $0xf0] sm:$0xff]
  %v181 = vld [vmem:[%s3 + $0xf8] sm:$0xff]
  %v182 = vld [vmem:[%s3 + $0x100] sm:$0xff]
  %v183 = vld [vmem:[%s3 + $0x108] sm:$0xff]
  %v184 = vld [vmem:[%s3 + $0x110] sm:$0xff]
  %v185 = vld [vmem:[%s3 + $0x118] sm:$0xff]
  %v186 = vld [vmem:[%s3 + $0x120] sm:$0xff]
  %v187 = vld [vmem:[%s3 + $0x128] sm:$0xff]
  %v188 = vld [vmem:[%s3 + $0x130] sm:$0xff]
  %v189 = vld [vmem:[%s3 + $0x138] sm:$0xff]
  %v190 = vld [vmem:[%s3 + $0x140] sm:$0xff]
  %v191 = vld [vmem:[%s3 + $0x148] sm:$0xff]
  %v192 = vld [vmem:[%s3 + $0x150] sm:$0xff]
  %v193 = vld [vmem:[%s3 + $0x158] sm:$0xff]
  %v194 = vld [vmem:[%s3 + $0x160] sm:$0xff]
  %v195 = vld [vmem:[%s3 + $0x168] sm:$0xff]
  %v196 = vld [vmem:[%s3 + $0x170] sm:$0xff]
  %v197 = vld [vmem:[%s3 + $0x178] sm:$0xff]
  %v198 = vld [vmem:[%s3 + $0x180] sm:$0xff]
  %v199 = vld [vmem:[%s3 + $0x188] sm:$0xff]
  %v200 = vld [vmem:[%s3 + $0x190] sm:$0xff]
  %v201 = vld [vmem:[%s3 + $0x198] sm:$0xff]
  %v202 = vld [vmem:[%s3 + $0x1a0] sm:$0xff]
  %v203 = vld [vmem:[%s3 + $0x1a8] sm:$0xff]
  %v204 = vld [vmem:[%s3 + $0x1b0] sm:$0xff]
  %v205 = vld [vmem:[%s3 + $0x1b8] sm:$0xff]
  %v206 = vld [vmem:[%s3 + $0x1c0] sm:$0xff]
  %v207 = vld [vmem:[%s3 + $0x1c8] sm:$0xff]
  %v208 = vld [vmem:[%s3 + $0x1d0] sm:$0xff]
  %v209 = vld [vmem:[%s3 + $0x1d8] sm:$0xff]
  %v210 = vld [vmem:[%s3 + $0x1e0] sm:$0xff]
  %v211 = vld [vmem:[%s3 + $0x1e8] sm:$0xff]
  %v212 = vld [vmem:[%s3 + $0x1f0] sm:$0xff]
  %v213 = vld [vmem:[%s3 + $0x1f8] sm:$0xff]
  %v214 = vld [vmem:[%s4] sm:$0xf]
  %v215 = vld [vmem:[%s0] sm:$0xff]
  %v216 = vld [vmem:[%s0 + $0x8] sm:$0xff]
  %v217 = vld [vmem:[%s0 + $0x10] sm:$0xff]
  %v218 = vld [vmem:[%s0 + $0x18] sm:$0xff]
  %219 = vmatpush.msra.mxu0 %v82
  %220 = vmatpush.msra.mxu0 %v78
  %221 = vmatpush.msra.mxu0 %v74
  %222 = vmatpush.msra.mxu0 %v70
  %223 = vmatpush.msra.mxu0 %v66
  %224 = vmatpush.msra.mxu0 %v62
  %225 = vmatpush.msra.mxu0 %v58
  %226 = vmatpush.msra.mxu0 %v54
  %227 = vmatpush.msra.mxu0 %v50
  %228 = vmatpush.msra.mxu0 %v46
  %229 = vmatpush.msra.mxu0 %v42
  %230 = vmatpush.msra.mxu0 %v38
  %231 = vmatpush.msra.mxu0 %v34
  %232 = vmatpush.msra.mxu0 %v30
  %233 = vmatpush.msra.mxu0 %v26
  %234 = vmatpush.msra.mxu0 %v22
  %235 = vmatmul.f32.gmra.mxu0 0.0
  %v236 = vpop.f32.mrf.mxu0
  %v237 = vadd.f32 0.0, %v236
  %238 = vdwg.mxu0
  %239 = vmatpush.msra.mxu0 %v83
  %240 = vmatpush.msra.mxu0 %v79
  %241 = vmatpush.msra.mxu0 %v75
  %242 = vmatpush.msra.mxu0 %v71
  %243 = vmatpush.msra.mxu0 %v67
  %244 = vmatpush.msra.mxu0 %v63
  %245 = vmatpush.msra.mxu0 %v59
  %246 = vmatpush.msra.mxu0 %v55
  %247 = vmatpush.msra.mxu0 %v51
  %248 = vmatpush.msra.mxu0 %v47
  %249 = vmatpush.msra.mxu0 %v43
  %250 = vmatpush.msra.mxu0 %v39
  %251 = vmatpush.msra.mxu0 %v35
  %252 = vmatpush.msra.mxu0 %v31
  %253 = vmatpush.msra.mxu0 %v27
  %254 = vmatpush.msra.mxu0 %v23
  %255 = vmatmul.f32.gmra.mxu0 0.0
  %v256 = vpop.f32.mrf.mxu0
  %v257 = vadd.f32 0.0, %v256
  %258 = vdwg.mxu0
  %259 = vmatpush.msra.mxu0 %v84
  %260 = vmatpush.msra.mxu0 %v80
  %261 = vmatpush.msra.mxu0 %v76
  %262 = vmatpush.msra.mxu0 %v72
  %263 = vmatpush.msra.mxu0 %v68
  %264 = vmatpush.msra.mxu0 %v64
  %265 = vmatpush.msra.mxu0 %v60
  %266 = vmatpush.msra.mxu0 %v56
  %267 = vmatpush.msra.mxu0 %v52
  %268 = vmatpush.msra.mxu0 %v48
  %269 = vmatpush.msra.mxu0 %v44
  %270 = vmatpush.msra.mxu0 %v40
  %271 = vmatpush.msra.mxu0 %v36
  %272 = vmatpush.msra.mxu0 %v32
  %273 = vmatpush.msra.mxu0 %v28
  %274 = vmatpush.msra.mxu0 %v24
  %275 = vmatmul.f32.gmra.mxu0 0.0
  %v276 = vpop.f32.mrf.mxu0
  %v277 = vadd.f32 0.0, %v276
  %278 = vdwg.mxu0
  %279 = vmatpush.msra.mxu0 %v85
  %280 = vmatpush.msra.mxu0 %v81
  %281 = vmatpush.msra.mxu0 %v77
  %282 = vmatpush.msra.mxu0 %v73
  %283 = vmatpush.msra.mxu0 %v69
  %284 = vmatpush.msra.mxu0 %v65
  %285 = vmatpush.msra.mxu0 %v61
  %286 = vmatpush.msra.mxu0 %v57
  %287 = vmatpush.msra.mxu0 %v53
  %288 = vmatpush.msra.mxu0 %v49
  %289 = vmatpush.msra.mxu0 %v45
  %290 = vmatpush.msra.mxu0 %v41
  %291 = vmatpush.msra.mxu0 %v37
  %292 = vmatpush.msra.mxu0 %v33
  %293 = vmatpush.msra.mxu0 %v29
  %294 = vmatpush.msra.mxu0 %v25
  %295 = vmatmul.f32.gmra.mxu0 0.0
  %v296 = vpop.f32.mrf.mxu0
  %v297 = vadd.f32 0.0, %v296
  %298 = vdwg.mxu0
  %v299 = vadd.f32 %v215, %v237
  %v300 = vadd.f32 %v216, %v257
  %v301 = vadd.f32 %v217, %v277
  %v302 = vadd.f32 %v218, %v297
  %v303 = vxor.u32 %v299, 2147483648
  %v304 = vmul.f32 %v303, 1.442695
  %v305 = vpow.pop %v304
  %v306 = vadd.f32 %v305, 1.0
  %v307 = vrcp.pop %v306
  %v308 = vmul.f32 %v306, %v307
  %v309 = vsub.f32 1.0, %v308
  %v310 = vmul.f32 %v307, %v309
  %v311 = vadd.f32 %v307, %v310
  %vm312 = vweird.f32 %v306
  %vm313 = vweird.f32 %v307
  %vm314 = vmor %vm312, %vm313
  %v315 = vsel %vm314, %v307, %v311
  %v316 = vand.u32 2147483647, %v306
  %vm317 = vcmp.eq.f32.partialorder %v316, 8.507059e+37
  %v318 = vand.u32 %v306, 2147483648
  %v319 = vor.u32 1.1754944e-38, %v318
  %v320 = vsel %vm317, %v319, %v315
  %v321 = vmul.f32 1.0, %v320
  %v322 = vxor.u32 %v300, 2147483648
  %v323 = vmul.f32 %v322, 1.442695
  %v324 = vpow.pop %v323
  %v325 = vadd.f32 %v324, 1.0
  %v326 = vrcp.pop %v325
  %v327 = vmul.f32 %v325, %v326
  %v328 = vsub.f32 1.0, %v327
  %v329 = vmul.f32 %v326, %v328
  %v330 = vadd.f32 %v326, %v329
  %vm331 = vweird.f32 %v325
  %vm332 = vweird.f32 %v326
  %vm333 = vmor %vm331, %vm332
  %v334 = vsel %vm333, %v326, %v330
  %v335 = vand.u32 2147483647, %v325
  %vm336 = vcmp.eq.f32.partialorder %v335, 8.507059e+37
  %v337 = vand.u32 %v325, 2147483648
  %v338 = vor.u32 1.1754944e-38, %v337
  %v339 = vsel %vm336, %v338, %v334
  %v340 = vmul.f32 1.0, %v339
  %v341 = vtanh.pop %v301
  %v342 = vxor.u32 %v302, 2147483648
  %v343 = vmul.f32 %v342, 1.442695
  %v344 = vpow.pop %v343
  %v345 = vadd.f32 %v344, 1.0
  %v346 = vrcp.pop %v345
  %v347 = vmul.f32 %v345, %v346
  %v348 = vsub.f32 1.0, %v347
  %v349 = vmul.f32 %v346, %v348
  %v350 = vadd.f32 %v346, %v349
  %vm351 = vweird.f32 %v345
  %vm352 = vweird.f32 %v346
  %vm353 = vmor %vm351, %vm352
  %v354 = vsel %vm353, %v346, %v350
  %v355 = vand.u32 2147483647, %v345
  %vm356 = vcmp.eq.f32.partialorder %v355, 8.507059e+37
  %v357 = vand.u32 %v345, 2147483648
  %v358 = vor.u32 1.1754944e-38, %v357
  %v359 = vsel %vm356, %v358, %v354
  %v360 = vmul.f32 1.0, %v359
  %v361 = vmul.f32 %v340, 0.0
  %v362 = vmul.f32 %v321, %v341
  %v363 = vadd.f32 %v361, %v362
  %v364 = vtanh.pop %v363
  %v365 = vmul.f32 %v360, %v364
  %366 = vmatpush.msra.mxu0 %v210
  %367 = vmatpush.msra.mxu0 %v206
  %368 = vmatpush.msra.mxu0 %v202
  %369 = vmatpush.msra.mxu0 %v198
  %370 = vmatpush.msra.mxu0 %v194
  %371 = vmatpush.msra.mxu0 %v190
  %372 = vmatpush.msra.mxu0 %v186
  %373 = vmatpush.msra.mxu0 %v182
  %374 = vmatpush.msra.mxu0 %v178
  %375 = vmatpush.msra.mxu0 %v174
  %376 = vmatpush.msra.mxu0 %v170
  %377 = vmatpush.msra.mxu0 %v166
  %378 = vmatpush.msra.mxu0 %v162
  %379 = vmatpush.msra.mxu0 %v158
  %380 = vmatpush.msra.mxu0 %v154
  %381 = vmatpush.msra.mxu0 %v150
  %382 = vmatmul.f32.gmra.mxu0 0.0
  %v383 = vpop.f32.mrf.mxu0
  %v384 = vadd.f32 0.0, %v383
  %385 = vdwg.mxu0
  %386 = vmatpush.msra.mxu0 %v211
  %387 = vmatpush.msra.mxu0 %v207
  %388 = vmatpush.msra.mxu0 %v203
  %389 = vmatpush.msra.mxu0 %v199
  %390 = vmatpush.msra.mxu0 %v195
  %391 = vmatpush.msra.mxu0 %v191
  %392 = vmatpush.msra.mxu0 %v187
  %393 = vmatpush.msra.mxu0 %v183
  %394 = vmatpush.msra.mxu0 %v179
  %395 = vmatpush.msra.mxu0 %v175
  %396 = vmatpush.msra.mxu0 %v171
  %397 = vmatpush.msra.mxu0 %v167
  %398 = vmatpush.msra.mxu0 %v163
  %399 = vmatpush.msra.mxu0 %v159
  %400 = vmatpush.msra.mxu0 %v155
  %401 = vmatpush.msra.mxu0 %v151
  %402 = vmatmul.f32.gmra.mxu0 0.0
  %v403 = vpop.f32.mrf.mxu0
  %v404 = vadd.f32 0.0, %v403
  %405 = vdwg.mxu0
  %406 = vmatpush.msra.mxu0 %v212
  %407 = vmatpush.msra.mxu0 %v208
  %408 = vmatpush.msra.mxu0 %v204
  %409 = vmatpush.msra.mxu0 %v200
  %410 = vmatpush.msra.mxu0 %v196
  %411 = vmatpush.msra.mxu0 %v192
  %412 = vmatpush.msra.mxu0 %v188
  %413 = vmatpush.msra.mxu0 %v184
  %414 = vmatpush.msra.mxu0 %v180
  %415 = vmatpush.msra.mxu0 %v176
  %416 = vmatpush.msra.mxu0 %v172
  %417 = vmatpush.msra.mxu0 %v168
  %418 = vmatpush.msra.mxu0 %v164
  %419 = vmatpush.msra.mxu0 %v160
  %420 = vmatpush.msra.mxu0 %v156
  %421 = vmatpush.msra.mxu0 %v152
  %422 = vmatmul.f32.gmra.mxu0 0.0
  %v423 = vpop.f32.mrf.mxu0
  %v424 = vadd.f32 0.0, %v423
  %425 = vdwg.mxu0
  %426 = vmatpush.msra.mxu0 %v213
  %427 = vmatpush.msra.mxu0 %v209
  %428 = vmatpush.msra.mxu0 %v205
  %429 = vmatpush.msra.mxu0 %v201
  %430 = vmatpush.msra.mxu0 %v197
  %431 = vmatpush.msra.mxu0 %v193
  %432 = vmatpush.msra.mxu0 %v189
  %433 = vmatpush.msra.mxu0 %v185
  %434 = vmatpush.msra.mxu0 %v181
  %435 = vmatpush.msra.mxu0 %v177
  %436 = vmatpush.msra.mxu0 %v173
  %437 = vmatpush.msra.mxu0 %v169
  %438 = vmatpush.msra.mxu0 %v165
  %439 = vmatpush.msra.mxu0 %v161
  %440 = vmatpush.msra.mxu0 %v157
  %441 = vmatpush.msra.mxu0 %v153
  %442 = vmatmul.f32.gmra.mxu0 0.0
  %v443 = vpop.f32.mrf.mxu0
  %v444 = vadd.f32 0.0, %v443
  %445 = vdwg.mxu0
  %446 = vmatpush.msra.mxu0 %v146
  %447 = vmatpush.msra.mxu0 %v142
  %448 = vmatpush.msra.mxu0 %v138
  %449 = vmatpush.msra.mxu0 %v134
  %450 = vmatpush.msra.mxu0 %v130
  %451 = vmatpush.msra.mxu0 %v126
  %452 = vmatpush.msra.mxu0 %v122
  %453 = vmatpush.msra.mxu0 %v118
  %454 = vmatpush.msra.mxu0 %v114
  %455 = vmatpush.msra.mxu0 %v110
  %456 = vmatpush.msra.mxu0 %v106
  %457 = vmatpush.msra.mxu0 %v102
  %458 = vmatpush.msra.mxu0 %v98
  %459 = vmatpush.msra.mxu0 %v94
  %460 = vmatpush.msra.mxu0 %v90
  %461 = vmatpush.msra.mxu0 %v86
  %462 = vmatmul.f32.gmra.mxu0 %v365
  %v463 = vpop.f32.mrf.mxu0
  %v464 = vadd.f32 %v384, %v463
  %465 = vdwg.mxu0
  %466 = vmatpush.msra.mxu0 %v147
  %467 = vmatpush.msra.mxu0 %v143
  %468 = vmatpush.msra.mxu0 %v139
  %469 = vmatpush.msra.mxu0 %v135
  %470 = vmatpush.msra.mxu0 %v131
  %471 = vmatpush.msra.mxu0 %v127
  %472 = vmatpush.msra.mxu0 %v123
  %473 = vmatpush.msra.mxu0 %v119
  %474 = vmatpush.msra.mxu0 %v115
  %475 = vmatpush.msra.mxu0 %v111
  %476 = vmatpush.msra.mxu0 %v107
  %477 = vmatpush.msra.mxu0 %v103
  %478 = vmatpush.msra.mxu0 %v99
  %479 = vmatpush.msra.mxu0 %v95
  %480 = vmatpush.msra.mxu0 %v91
  %481 = vmatpush.msra.mxu0 %v87
  %482 = vmatmul.f32.gmra.mxu0 %v365
  %v483 = vpop.f32.mrf.mxu0
  %v484 = vadd.f32 %v404, %v483
  %485 = vdwg.mxu0
  %486 = vmatpush.msra.mxu0 %v148
  %487 = vmatpush.msra.mxu0 %v144
  %488 = vmatpush.msra.mxu0 %v140
  %489 = vmatpush.msra.mxu0 %v136
  %490 = vmatpush.msra.mxu0 %v132
  %491 = vmatpush.msra.mxu0 %v128
  %492 = vmatpush.msra.mxu0 %v124
  %493 = vmatpush.msra.mxu0 %v120
  %494 = vmatpush.msra.mxu0 %v116
  %495 = vmatpush.msra.mxu0 %v112
  %496 = vmatpush.msra.mxu0 %v108
  %497 = vmatpush.msra.mxu0 %v104
  %498 = vmatpush.msra.mxu0 %v100
  %499 = vmatpush.msra.mxu0 %v96
  %500 = vmatpush.msra.mxu0 %v92
  %501 = vmatpush.msra.mxu0 %v88
  %502 = vmatmul.f32.gmra.mxu0 %v365
  %v503 = vpop.f32.mrf.mxu0
  %v504 = vadd.f32 %v424, %v503
  %505 = vdwg.mxu0
  %506 = vmatpush.msra.mxu0 %v149
  %507 = vmatpush.msra.mxu0 %v145
  %508 = vmatpush.msra.mxu0 %v141
  %509 = vmatpush.msra.mxu0 %v137
  %510 = vmatpush.msra.mxu0 %v133
  %511 = vmatpush.msra.mxu0 %v129
  %512 = vmatpush.msra.mxu0 %v125
  %513 = vmatpush.msra.mxu0 %v121
  %514 = vmatpush.msra.mxu0 %v117
  %515 = vmatpush.msra.mxu0 %v113
  %516 = vmatpush.msra.mxu0 %v109
  %517 = vmatpush.msra.mxu0 %v105
  %518 = vmatpush.msra.mxu0 %v101
  %519 = vmatpush.msra.mxu0 %v97
  %520 = vmatpush.msra.mxu0 %v93
  %521 = vmatpush.msra.mxu0 %v89
  %522 = vmatmul.f32.gmra.mxu0 %v365
  %v523 = vpop.f32.mrf.mxu0
  %v524 = vadd.f32 %v444, %v523
  %525 = vdwg.mxu0
  %v527 = vperm.slane %v214, 0
  %v528 = vperm.slane %v214, 1
  %v529 = vperm.slane %v214, 2
  %v530 = vperm.slane %v214, 3
  %v535 = vadd.f32 %v464, %v527
  %v536 = vadd.f32 %v484, %v528
  %v537 = vadd.f32 %v504, %v529
  %v538 = vadd.f32 %v524, %v530
  %v539 = vxor.u32 %v535, 2147483648
  %v540 = vmul.f32 %v539, 1.442695
  %v541 = vpow.pop %v540
  %v542 = vadd.f32 %v541, 1.0
  %v543 = vrcp.pop %v542
  %v544 = vmul.f32 %v542, %v543
  %v545 = vsub.f32 1.0, %v544
  %v546 = vmul.f32 %v543, %v545
  %v547 = vadd.f32 %v543, %v546
  %vm548 = vweird.f32 %v542
  %vm549 = vweird.f32 %v543
  %vm550 = vmor %vm548, %vm549
  %v551 = vsel %vm550, %v543, %v547
  %v552 = vand.u32 2147483647, %v542
  %vm553 = vcmp.eq.f32.partialorder %v552, 8.507059e+37
  %v554 = vand.u32 %v542, 2147483648
  %v555 = vor.u32 1.1754944e-38, %v554
  %v556 = vsel %vm553, %v555, %v551
  %v557 = vmul.f32 1.0, %v556
  %v558 = vxor.u32 %v536, 2147483648
  %v559 = vmul.f32 %v558, 1.442695
  %v560 = vpow.pop %v559
  %v561 = vadd.f32 %v560, 1.0
  %v562 = vrcp.pop %v561
  %v563 = vmul.f32 %v561, %v562
  %v564 = vsub.f32 1.0, %v563
  %v565 = vmul.f32 %v562, %v564
  %v566 = vadd.f32 %v562, %v565
  %vm567 = vweird.f32 %v561
  %vm568 = vweird.f32 %v562
  %vm569 = vmor %vm567, %vm568
  %v570 = vsel %vm569, %v562, %v566
  %v571 = vand.u32 2147483647, %v561
  %vm572 = vcmp.eq.f32.partialorder %v571, 8.507059e+37
  %v573 = vand.u32 %v561, 2147483648
  %v574 = vor.u32 1.1754944e-38, %v573
  %v575 = vsel %vm572, %v574, %v570
  %v576 = vmul.f32 1.0, %v575
  %v577 = vtanh.pop %v537
  %v578 = vxor.u32 %v538, 2147483648
  %v579 = vmul.f32 %v578, 1.442695
  %v580 = vpow.pop %v579
  %v581 = vadd.f32 %v580, 1.0
  %v582 = vrcp.pop %v581
  %v583 = vmul.f32 %v581, %v582
  %v584 = vsub.f32 1.0, %v583
  %v585 = vmul.f32 %v582, %v584
  %v586 = vadd.f32 %v582, %v585
  %vm587 = vweird.f32 %v581
  %vm588 = vweird.f32 %v582
  %vm589 = vmor %vm587, %vm588
  %v590 = vsel %vm589, %v582, %v586
  %v591 = vand.u32 2147483647, %v581
  %vm592 = vcmp.eq.f32.partialorder %v591, 8.507059e+37
  %v593 = vand.u32 %v581, 2147483648
  %v594 = vor.u32 1.1754944e-38, %v593
  %v595 = vsel %vm592, %v594, %v590
  %v596 = vmul.f32 1.0, %v595
  %v597 = vmul.f32 %v576, 0.0
  %v598 = vmul.f32 %v557, %v577
  %v599 = vadd.f32 %v597, %v598
  %v600 = vtanh.pop %v599
  %v601 = vmul.f32 %v596, %v600
  %s602 = scalar_lea.vmem %s0, 32
  %v603 = vld [vmem:[%s602] sm:$0xff]
  %v604 = vld [vmem:[%s602 + $0x8] sm:$0xff]
  %v605 = vld [vmem:[%s602 + $0x10] sm:$0xff]
  %v606 = vld [vmem:[%s602 + $0x18] sm:$0xff]
  %607 = vmatpush.msra.mxu0 %v82
  %608 = vmatpush.msra.mxu0 %v78
  %609 = vmatpush.msra.mxu0 %v74
  %610 = vmatpush.msra.mxu0 %v70
  %611 = vmatpush.msra.mxu0 %v66
  %612 = vmatpush.msra.mxu0 %v62
  %613 = vmatpush.msra.mxu0 %v58
  %614 = vmatpush.msra.mxu0 %v54
  %615 = vmatpush.msra.mxu0 %v50
  %616 = vmatpush.msra.mxu0 %v46
  %617 = vmatpush.msra.mxu0 %v42
  %618 = vmatpush.msra.mxu0 %v38
  %619 = vmatpush.msra.mxu0 %v34
  %620 = vmatpush.msra.mxu0 %v30
  %621 = vmatpush.msra.mxu0 %v26
  %622 = vmatpush.msra.mxu0 %v22
  %623 = vmatmul.f32.gmra.mxu0 %v365
  %v624 = vpop.f32.mrf.mxu0
  %v625 = vadd.f32 0.0, %v624
  %626 = vdwg.mxu0
  %627 = vmatpush.msra.mxu0 %v83
  %628 = vmatpush.msra.mxu0 %v79
  %629 = vmatpush.msra.mxu0 %v75
  %630 = vmatpush.msra.mxu0 %v71
  %631 = vmatpush.msra.mxu0 %v67
  %632 = vmatpush.msra.mxu0 %v63
  %633 = vmatpush.msra.mxu0 %v59
  %634 = vmatpush.msra.mxu0 %v55
  %635 = vmatpush.msra.mxu0 %v51
  %636 = vmatpush.msra.mxu0 %v47
  %637 = vmatpush.msra.mxu0 %v43
  %638 = vmatpush.msra.mxu0 %v39
  %639 = vmatpush.msra.mxu0 %v35
  %640 = vmatpush.msra.mxu0 %v31
  %641 = vmatpush.msra.mxu0 %v27
  %642 = vmatpush.msra.mxu0 %v23
  %643 = vmatmul.f32.gmra.mxu0 %v365
  %v644 = vpop.f32.mrf.mxu0
  %v645 = vadd.f32 0.0, %v644
  %646 = vdwg.mxu0
  %647 = vmatpush.msra.mxu0 %v84
  %648 = vmatpush.msra.mxu0 %v80
  %649 = vmatpush.msra.mxu0 %v76
  %650 = vmatpush.msra.mxu0 %v72
  %651 = vmatpush.msra.mxu0 %v68
  %652 = vmatpush.msra.mxu0 %v64
  %653 = vmatpush.msra.mxu0 %v60
  %654 = vmatpush.msra.mxu0 %v56
  %655 = vmatpush.msra.mxu0 %v52
  %656 = vmatpush.msra.mxu0 %v48
  %657 = vmatpush.msra.mxu0 %v44
  %658 = vmatpush.msra.mxu0 %v40
  %659 = vmatpush.msra.mxu0 %v36
  %660 = vmatpush.msra.mxu0 %v32
  %661 = vmatpush.msra.mxu0 %v28
  %662 = vmatpush.msra.mxu0 %v24
  %663 = vmatmul.f32.gmra.mxu0 %v365
  %v664 = vpop.f32.mrf.mxu0
  %v665 = vadd.f32 0.0, %v664
  %666 = vdwg.mxu0
  %667 = vmatpush.msra.mxu0 %v85
  %668 = vmatpush.msra.mxu0 %v81
  %669 = vmatpush.msra.mxu0 %v77
  %670 = vmatpush.msra.mxu0 %v73
  %671 = vmatpush.msra.mxu0 %v69
  %672 = vmatpush.msra.mxu0 %v65
  %673 = vmatpush.msra.mxu0 %v61
  %674 = vmatpush.msra.mxu0 %v57
  %675 = vmatpush.msra.mxu0 %v53
  %676 = vmatpush.msra.mxu0 %v49
  %677 = vmatpush.msra.mxu0 %v45
  %678 = vmatpush.msra.mxu0 %v41
  %679 = vmatpush.msra.mxu0 %v37
  %680 = vmatpush.msra.mxu0 %v33
  %681 = vmatpush.msra.mxu0 %v29
  %682 = vmatpush.msra.mxu0 %v25
  %683 = vmatmul.f32.gmra.mxu0 %v365
  %v684 = vpop.f32.mrf.mxu0
  %v685 = vadd.f32 0.0, %v684
  %686 = vdwg.mxu0
  %v687 = vadd.f32 %v603, %v625
  %v688 = vadd.f32 %v604, %v645
  %v689 = vadd.f32 %v605, %v665
  %v690 = vadd.f32 %v606, %v685
  %v691 = vxor.u32 %v687, 2147483648
  %v692 = vmul.f32 %v691, 1.442695
  %v693 = vpow.pop %v692
  %v694 = vadd.f32 %v693, 1.0
  %v695 = vrcp.pop %v694
  %v696 = vmul.f32 %v694, %v695
  %v697 = vsub.f32 1.0, %v696
  %v698 = vmul.f32 %v695, %v697
  %v699 = vadd.f32 %v695, %v698
  %vm700 = vweird.f32 %v694
  %vm701 = vweird.f32 %v695
  %vm702 = vmor %vm700, %vm701
  %v703 = vsel %vm702, %v695, %v699
  %v704 = vand.u32 2147483647, %v694
  %vm705 = vcmp.eq.f32.partialorder %v704, 8.507059e+37
  %v706 = vand.u32 %v694, 2147483648
  %v707 = vor.u32 1.1754944e-38, %v706
  %v708 = vsel %vm705, %v707, %v703
  %v709 = vmul.f32 1.0, %v708
  %v710 = vxor.u32 %v688, 2147483648
  %v711 = vmul.f32 %v710, 1.442695
  %v712 = vpow.pop %v711
  %v713 = vadd.f32 %v712, 1.0
  %v714 = vrcp.pop %v713
  %v715 = vmul.f32 %v713, %v714
  %v716 = vsub.f32 1.0, %v715
  %v717 = vmul.f32 %v714, %v716
  %v718 = vadd.f32 %v714, %v717
  %vm719 = vweird.f32 %v713
  %vm720 = vweird.f32 %v714
  %vm721 = vmor %vm719, %vm720
  %v722 = vsel %vm721, %v714, %v718
  %v723 = vand.u32 2147483647, %v713
  %vm724 = vcmp.eq.f32.partialorder %v723, 8.507059e+37
  %v725 = vand.u32 %v713, 2147483648
  %v726 = vor.u32 1.1754944e-38, %v725
  %v727 = vsel %vm724, %v726, %v722
  %v728 = vmul.f32 1.0, %v727
  %v729 = vtanh.pop %v689
  %v730 = vxor.u32 %v690, 2147483648
  %v731 = vmul.f32 %v730, 1.442695
  %v732 = vpow.pop %v731
  %v733 = vadd.f32 %v732, 1.0
  %v734 = vrcp.pop %v733
  %v735 = vmul.f32 %v733, %v734
  %v736 = vsub.f32 1.0, %v735
  %v737 = vmul.f32 %v734, %v736
  %v738 = vadd.f32 %v734, %v737
  %vm739 = vweird.f32 %v733
  %vm740 = vweird.f32 %v734
  %vm741 = vmor %vm739, %vm740
  %v742 = vsel %vm741, %v734, %v738
  %v743 = vand.u32 2147483647, %v733
  %vm744 = vcmp.eq.f32.partialorder %v743, 8.507059e+37
  %v745 = vand.u32 %v733, 2147483648
  %v746 = vor.u32 1.1754944e-38, %v745
  %v747 = vsel %vm744, %v746, %v742
  %v748 = vmul.f32 1.0, %v747
  %v749 = vmul.f32 %v728, %v363
  %v750 = vmul.f32 %v709, %v729
  %v751 = vadd.f32 %v749, %v750
  %v752 = vtanh.pop %v751
  %v753 = vmul.f32 %v748, %v752
  %754 = vmatpush.msra.mxu0 %v210
  %755 = vmatpush.msra.mxu0 %v206
  %756 = vmatpush.msra.mxu0 %v202
  %757 = vmatpush.msra.mxu0 %v198
  %758 = vmatpush.msra.mxu0 %v194
  %759 = vmatpush.msra.mxu0 %v190
  %760 = vmatpush.msra.mxu0 %v186
  %761 = vmatpush.msra.mxu0 %v182
  %762 = vmatpush.msra.mxu0 %v178
  %763 = vmatpush.msra.mxu0 %v174
  %764 = vmatpush.msra.mxu0 %v170
  %765 = vmatpush.msra.mxu0 %v166
  %766 = vmatpush.msra.mxu0 %v162
  %767 = vmatpush.msra.mxu0 %v158
  %768 = vmatpush.msra.mxu0 %v154
  %769 = vmatpush.msra.mxu0 %v150
  %770 = vmatmul.f32.gmra.mxu0 %v601
  %v771 = vpop.f32.mrf.mxu0
  %v772 = vadd.f32 0.0, %v771
  %773 = vdwg.mxu0
  %774 = vmatpush.msra.mxu0 %v211
  %775 = vmatpush.msra.mxu0 %v207
  %776 = vmatpush.msra.mxu0 %v203
  %777 = vmatpush.msra.mxu0 %v199
  %778 = vmatpush.msra.mxu0 %v195
  %779 = vmatpush.msra.mxu0 %v191
  %780 = vmatpush.msra.mxu0 %v187
  %781 = vmatpush.msra.mxu0 %v183
  %782 = vmatpush.msra.mxu0 %v179
  %783 = vmatpush.msra.mxu0 %v175
  %784 = vmatpush.msra.mxu0 %v171
  %785 = vmatpush.msra.mxu0 %v167
  %786 = vmatpush.msra.mxu0 %v163
  %787 = vmatpush.msra.mxu0 %v159
  %788 = vmatpush.msra.mxu0 %v155
  %789 = vmatpush.msra.mxu0 %v151
  %790 = vmatmul.f32.gmra.mxu0 %v601
  %v791 = vpop.f32.mrf.mxu0
  %v792 = vadd.f32 0.0, %v791
  %793 = vdwg.mxu0
  %794 = vmatpush.msra.mxu0 %v212
  %795 = vmatpush.msra.mxu0 %v208
  %796 = vmatpush.msra.mxu0 %v204
  %797 = vmatpush.msra.mxu0 %v200
  %798 = vmatpush.msra.mxu0 %v196
  %799 = vmatpush.msra.mxu0 %v192
  %800 = vmatpush.msra.mxu0 %v188
  %801 = vmatpush.msra.mxu0 %v184
  %802 = vmatpush.msra.mxu0 %v180
  %803 = vmatpush.msra.mxu0 %v176
  %804 = vmatpush.msra.mxu0 %v172
  %805 = vmatpush.msra.mxu0 %v168
  %806 = vmatpush.msra.mxu0 %v164
  %807 = vmatpush.msra.mxu0 %v160
  %808 = vmatpush.msra.mxu0 %v156
  %809 = vmatpush.msra.mxu0 %v152
  %810 = vmatmul.f32.gmra.mxu0 %v601
  %v811 = vpop.f32.mrf.mxu0
  %v812 = vadd.f32 0.0, %v811
  %813 = vdwg.mxu0
  %814 = vmatpush.msra.mxu0 %v213
  %815 = vmatpush.msra.mxu0 %v209
  %816 = vmatpush.msra.mxu0 %v205
  %817 = vmatpush.msra.mxu0 %v201
  %818 = vmatpush.msra.mxu0 %v197
  %819 = vmatpush.msra.mxu0 %v193
  %820 = vmatpush.msra.mxu0 %v189
  %821 = vmatpush.msra.mxu0 %v185
  %822 = vmatpush.msra.mxu0 %v181
  %823 = vmatpush.msra.mxu0 %v177
  %824 = vmatpush.msra.mxu0 %v173
  %825 = vmatpush.msra.mxu0 %v169
  %826 = vmatpush.msra.mxu0 %v165
  %827 = vmatpush.msra.mxu0 %v161
  %828 = vmatpush.msra.mxu0 %v157
  %829 = vmatpush.msra.mxu0 %v153
  %830 = vmatmul.f32.gmra.mxu0 %v601
  %v831 = vpop.f32.mrf.mxu0
  %v832 = vadd.f32 0.0, %v831
  %833 = vdwg.mxu0
  %834 = vmatpush.msra.mxu0 %v146
  %835 = vmatpush.msra.mxu0 %v142
  %836 = vmatpush.msra.mxu0 %v138
  %837 = vmatpush.msra.mxu0 %v134
  %838 = vmatpush.msra.mxu0 %v130
  %839 = vmatpush.msra.mxu0 %v126
  %840 = vmatpush.msra.mxu0 %v122
  %841 = vmatpush.msra.mxu0 %v118
  %842 = vmatpush.msra.mxu0 %v114
  %843 = vmatpush.msra.mxu0 %v110
  %844 = vmatpush.msra.mxu0 %v106
  %845 = vmatpush.msra.mxu0 %v102
  %846 = vmatpush.msra.mxu0 %v98
  %847 = vmatpush.msra.mxu0 %v94
  %848 = vmatpush.msra.mxu0 %v90
  %849 = vmatpush.msra.mxu0 %v86
  %850 = vmatmul.f32.gmra.mxu0 %v753
  %v851 = vpop.f32.mrf.mxu0
  %v852 = vadd.f32 %v772, %v851
  %853 = vdwg.mxu0
  %854 = vmatpush.msra.mxu0 %v147
  %855 = vmatpush.msra.mxu0 %v143
  %856 = vmatpush.msra.mxu0 %v139
  %857 = vmatpush.msra.mxu0 %v135
  %858 = vmatpush.msra.mxu0 %v131
  %859 = vmatpush.msra.mxu0 %v127
  %860 = vmatpush.msra.mxu0 %v123
  %861 = vmatpush.msra.mxu0 %v119
  %862 = vmatpush.msra.mxu0 %v115
  %863 = vmatpush.msra.mxu0 %v111
  %864 = vmatpush.msra.mxu0 %v107
  %865 = vmatpush.msra.mxu0 %v103
  %866 = vmatpush.msra.mxu0 %v99
  %867 = vmatpush.msra.mxu0 %v95
  %868 = vmatpush.msra.mxu0 %v91
  %869 = vmatpush.msra.mxu0 %v87
  %870 = vmatmul.f32.gmra.mxu0 %v753
  %v871 = vpop.f32.mrf.mxu0
  %v872 = vadd.f32 %v792, %v871
  %873 = vdwg.mxu0
  %874 = vmatpush.msra.mxu0 %v148
  %875 = vmatpush.msra.mxu0 %v144
  %876 = vmatpush.msra.mxu0 %v140
  %877 = vmatpush.msra.mxu0 %v136
  %878 = vmatpush.msra.mxu0 %v132
  %879 = vmatpush.msra.mxu0 %v128
  %880 = vmatpush.msra.mxu0 %v124
  %881 = vmatpush.msra.mxu0 %v120
  %882 = vmatpush.msra.mxu0 %v116
  %883 = vmatpush.msra.mxu0 %v112
  %884 = vmatpush.msra.mxu0 %v108
  %885 = vmatpush.msra.mxu0 %v104
  %886 = vmatpush.msra.mxu0 %v100
  %887 = vmatpush.msra.mxu0 %v96
  %888 = vmatpush.msra.mxu0 %v92
  %889 = vmatpush.msra.mxu0 %v88
  %890 = vmatmul.f32.gmra.mxu0 %v753
  %v891 = vpop.f32.mrf.mxu0
  %v892 = vadd.f32 %v812, %v891
  %893 = vdwg.mxu0
  %894 = vmatpush.msra.mxu0 %v149
  %895 = vmatpush.msra.mxu0 %v145
  %896 = vmatpush.msra.mxu0 %v141
  %897 = vmatpush.msra.mxu0 %v137
  %898 = vmatpush.msra.mxu0 %v133
  %899 = vmatpush.msra.mxu0 %v129
  %900 = vmatpush.msra.mxu0 %v125
  %901 = vmatpush.msra.mxu0 %v121
  %902 = vmatpush.msra.mxu0 %v117
  %903 = vmatpush.msra.mxu0 %v113
  %904 = vmatpush.msra.mxu0 %v109
  %905 = vmatpush.msra.mxu0 %v105
  %906 = vmatpush.msra.mxu0 %v101
  %907 = vmatpush.msra.mxu0 %v97
  %908 = vmatpush.msra.mxu0 %v93
  %909 = vmatpush.msra.mxu0 %v89
  %910 = vmatmul.f32.gmra.mxu0 %v753
  %v911 = vpop.f32.mrf.mxu0
  %v912 = vadd.f32 %v832, %v911
  %913 = vdwg.mxu0
  %v914 = vadd.f32 %v852, %v527
  %v915 = vadd.f32 %v872, %v528
  %v916 = vadd.f32 %v892, %v529
  %v917 = vadd.f32 %v912, %v530
  %v918 = vxor.u32 %v914, 2147483648
  %v919 = vmul.f32 %v918, 1.442695
  %v920 = vpow.pop %v919
  %v921 = vadd.f32 %v920, 1.0
  %v922 = vrcp.pop %v921
  %v923 = vmul.f32 %v921, %v922
  %v924 = vsub.f32 1.0, %v923
  %v925 = vmul.f32 %v922, %v924
  %v926 = vadd.f32 %v922, %v925
  %vm927 = vweird.f32 %v921
  %vm928 = vweird.f32 %v922
  %vm929 = vmor %vm927, %vm928
  %v930 = vsel %vm929, %v922, %v926
  %v931 = vand.u32 2147483647, %v921
  %vm932 = vcmp.eq.f32.partialorder %v931, 8.507059e+37
  %v933 = vand.u32 %v921, 2147483648
  %v934 = vor.u32 1.1754944e-38, %v933
  %v935 = vsel %vm932, %v934, %v930
  %v936 = vmul.f32 1.0, %v935
  %v937 = vxor.u32 %v915, 2147483648
  %v938 = vmul.f32 %v937, 1.442695
  %v939 = vpow.pop %v938
  %v940 = vadd.f32 %v939, 1.0
  %v941 = vrcp.pop %v940
  %v942 = vmul.f32 %v940, %v941
  %v943 = vsub.f32 1.0, %v942
  %v944 = vmul.f32 %v941, %v943
  %v945 = vadd.f32 %v941, %v944
  %vm946 = vweird.f32 %v940
  %vm947 = vweird.f32 %v941
  %vm948 = vmor %vm946, %vm947
  %v949 = vsel %vm948, %v941, %v945
  %v950 = vand.u32 2147483647, %v940
  %vm951 = vcmp.eq.f32.partialorder %v950, 8.507059e+37
  %v952 = vand.u32 %v940, 2147483648
  %v953 = vor.u32 1.1754944e-38, %v952
  %v954 = vsel %vm951, %v953, %v949
  %v955 = vmul.f32 1.0, %v954
  %v956 = vtanh.pop %v916
  %v957 = vxor.u32 %v917, 2147483648
  %v958 = vmul.f32 %v957, 1.442695
  %v959 = vpow.pop %v958
  %v960 = vadd.f32 %v959, 1.0
  %v961 = vrcp.pop %v960
  %v962 = vmul.f32 %v960, %v961
  %v963 = vsub.f32 1.0, %v962
  %v964 = vmul.f32 %v961, %v963
  %v965 = vadd.f32 %v961, %v964
  %vm966 = vweird.f32 %v960
  %vm967 = vweird.f32 %v961
  %vm968 = vmor %vm966, %vm967
  %v969 = vsel %vm968, %v961, %v965
  %v970 = vand.u32 2147483647, %v960
  %vm971 = vcmp.eq.f32.partialorder %v970, 8.507059e+37
  %v972 = vand.u32 %v960, 2147483648
  %v973 = vor.u32 1.1754944e-38, %v972
  %v974 = vsel %vm971, %v973, %v969
  %v975 = vmul.f32 1.0, %v974
  %v976 = vmul.f32 %v955, %v599
  %v977 = vmul.f32 %v936, %v956
  %v978 = vadd.f32 %v976, %v977
  %v979 = vtanh.pop %v978
  %v980 = vmul.f32 %v975, %v979
  %s981 = scalar_lea.vmem %s0, 64
  %v982 = vld [vmem:[%s981] sm:$0xff]
  %v983 = vld [vmem:[%s981 + $0x8] sm:$0xff]
  %v984 = vld [vmem:[%s981 + $0x10] sm:$0xff]
  %v985 = vld [vmem:[%s981 + $0x18] sm:$0xff]
  %986 = vmatpush.msra.mxu0 %v82
  %987 = vmatpush.msra.mxu0 %v78
  %988 = vmatpush.msra.mxu0 %v74
  %989 = vmatpush.msra.mxu0 %v70
  %990 = vmatpush.msra.mxu0 %v66
  %991 = vmatpush.msra.mxu0 %v62
  %992 = vmatpush.msra.mxu0 %v58
  %993 = vmatpush.msra.mxu0 %v54
  %994 = vmatpush.msra.mxu0 %v50
  %995 = vmatpush.msra.mxu0 %v46
  %996 = vmatpush.msra.mxu0 %v42
  %997 = vmatpush.msra.mxu0 %v38
  %998 = vmatpush.msra.mxu0 %v34
  %999 = vmatpush.msra.mxu0 %v30
  %1000 = vmatpush.msra.mxu0 %v26
  %1001 = vmatpush.msra.mxu0 %v22
  %1002 = vmatmul.f32.gmra.mxu0 %v753
  %v1003 = vpop.f32.mrf.mxu0
  %v1004 = vadd.f32 0.0, %v1003
  %1005 = vdwg.mxu0
  %1006 = vmatpush.msra.mxu0 %v83
  %1007 = vmatpush.msra.mxu0 %v79
  %1008 = vmatpush.msra.mxu0 %v75
  %1009 = vmatpush.msra.mxu0 %v71
  %1010 = vmatpush.msra.mxu0 %v67
  %1011 = vmatpush.msra.mxu0 %v63
  %1012 = vmatpush.msra.mxu0 %v59
  %1013 = vmatpush.msra.mxu0 %v55
  %1014 = vmatpush.msra.mxu0 %v51
  %1015 = vmatpush.msra.mxu0 %v47
  %1016 = vmatpush.msra.mxu0 %v43
  %1017 = vmatpush.msra.mxu0 %v39
  %1018 = vmatpush.msra.mxu0 %v35
  %1019 = vmatpush.msra.mxu0 %v31
  %1020 = vmatpush.msra.mxu0 %v27
  %1021 = vmatpush.msra.mxu0 %v23
  %1022 = vmatmul.f32.gmra.mxu0 %v753
  %v1023 = vpop.f32.mrf.mxu0
  %v1024 = vadd.f32 0.0, %v1023
  %1025 = vdwg.mxu0
  %1026 = vmatpush.msra.mxu0 %v84
  %1027 = vmatpush.msra.mxu0 %v80
  %1028 = vmatpush.msra.mxu0 %v76
  %1029 = vmatpush.msra.mxu0 %v72
  %1030 = vmatpush.msra.mxu0 %v68
  %1031 = vmatpush.msra.mxu0 %v64
  %1032 = vmatpush.msra.mxu0 %v60
  %1033 = vmatpush.msra.mxu0 %v56
  %1034 = vmatpush.msra.mxu0 %v52
  %1035 = vmatpush.msra.mxu0 %v48
  %1036 = vmatpush.msra.mxu0 %v44
  %1037 = vmatpush.msra.mxu0 %v40
  %1038 = vmatpush.msra.mxu0 %v36
  %1039 = vmatpush.msra.mxu0 %v32
  %1040 = vmatpush.msra.mxu0 %v28
  %1041 = vmatpush.msra.mxu0 %v24
  %1042 = vmatmul.f32.gmra.mxu0 %v753
  %v1043 = vpop.f32.mrf.mxu0
  %v1044 = vadd.f32 0.0, %v1043
  %1045 = vdwg.mxu0
  %1046 = vmatpush.msra.mxu0 %v85
  %1047 = vmatpush.msra.mxu0 %v81
  %1048 = vmatpush.msra.mxu0 %v77
  %1049 = vmatpush.msra.mxu0 %v73
  %1050 = vmatpush.msra.mxu0 %v69
  %1051 = vmatpush.msra.mxu0 %v65
  %1052 = vmatpush.msra.mxu0 %v61
  %1053 = vmatpush.msra.mxu0 %v57
  %1054 = vmatpush.msra.mxu0 %v53
  %1055 = vmatpush.msra.mxu0 %v49
  %1056 = vmatpush.msra.mxu0 %v45
  %1057 = vmatpush.msra.mxu0 %v41
  %1058 = vmatpush.msra.mxu0 %v37
  %1059 = vmatpush.msra.mxu0 %v33
  %1060 = vmatpush.msra.mxu0 %v29
  %1061 = vmatpush.msra.mxu0 %v25
  %1062 = vmatmul.f32.gmra.mxu0 %v753
  %v1063 = vpop.f32.mrf.mxu0
  %v1064 = vadd.f32 0.0, %v1063
  %1065 = vdwg.mxu0
  %v1066 = vadd.f32 %v982, %v1004
  %v1067 = vadd.f32 %v983, %v1024
  %v1068 = vadd.f32 %v984, %v1044
  %v1069 = vadd.f32 %v985, %v1064
  %v1070 = vxor.u32 %v1066, 2147483648
  %v1071 = vmul.f32 %v1070, 1.442695
  %v1072 = vpow.pop %v1071
  %v1073 = vadd.f32 %v1072, 1.0
  %v1074 = vrcp.pop %v1073
  %v1075 = vmul.f32 %v1073, %v1074
  %v1076 = vsub.f32 1.0, %v1075
  %v1077 = vmul.f32 %v1074, %v1076
  %v1078 = vadd.f32 %v1074, %v1077
  %vm1079 = vweird.f32 %v1073
  %vm1080 = vweird.f32 %v1074
  %vm1081 = vmor %vm1079, %vm1080
  %v1082 = vsel %vm1081, %v1074, %v1078
  %v1083 = vand.u32 2147483647, %v1073
  %vm1084 = vcmp.eq.f32.partialorder %v1083, 8.507059e+37
  %v1085 = vand.u32 %v1073, 2147483648
  %v1086 = vor.u32 1.1754944e-38, %v1085
  %v1087 = vsel %vm1084, %v1086, %v1082
  %v1088 = vmul.f32 1.0, %v1087
  %v1089 = vxor.u32 %v1067, 2147483648
  %v1090 = vmul.f32 %v1089, 1.442695
  %v1091 = vpow.pop %v1090
  %v1092 = vadd.f32 %v1091, 1.0
  %v1093 = vrcp.pop %v1092
  %v1094 = vmul.f32 %v1092, %v1093
  %v1095 = vsub.f32 1.0, %v1094
  %v1096 = vmul.f32 %v1093, %v1095
  %v1097 = vadd.f32 %v1093, %v1096
  %vm1098 = vweird.f32 %v1092
  %vm1099 = vweird.f32 %v1093
  %vm1100 = vmor %vm1098, %vm1099
  %v1101 = vsel %vm1100, %v1093, %v1097
  %v1102 = vand.u32 2147483647, %v1092
  %vm1103 = vcmp.eq.f32.partialorder %v1102, 8.507059e+37
  %v1104 = vand.u32 %v1092, 2147483648
  %v1105 = vor.u32 1.1754944e-38, %v1104
  %v1106 = vsel %vm1103, %v1105, %v1101
  %v1107 = vmul.f32 1.0, %v1106
  %v1108 = vtanh.pop %v1068
  %v1109 = vxor.u32 %v1069, 2147483648
  %v1110 = vmul.f32 %v1109, 1.442695
  %v1111 = vpow.pop %v1110
  %v1112 = vadd.f32 %v1111, 1.0
  %v1113 = vrcp.pop %v1112
  %v1114 = vmul.f32 %v1112, %v1113
  %v1115 = vsub.f32 1.0, %v1114
  %v1116 = vmul.f32 %v1113, %v1115
  %v1117 = vadd.f32 %v1113, %v1116
  %vm1118 = vweird.f32 %v1112
  %vm1119 = vweird.f32 %v1113
  %vm1120 = vmor %vm1118, %vm1119
  %v1121 = vsel %vm1120, %v1113, %v1117
  %v1122 = vand.u32 2147483647, %v1112
  %vm1123 = vcmp.eq.f32.partialorder %v1122, 8.507059e+37
  %v1124 = vand.u32 %v1112, 2147483648
  %v1125 = vor.u32 1.1754944e-38, %v1124
  %v1126 = vsel %vm1123, %v1125, %v1121
  %v1127 = vmul.f32 1.0, %v1126
  %v1128 = vmul.f32 %v1107, %v751
  %v1129 = vmul.f32 %v1088, %v1108
  %v1130 = vadd.f32 %v1128, %v1129
  %v1131 = vtanh.pop %v1130
  %v1132 = vmul.f32 %v1127, %v1131
  %1133 = vmatpush.msra.mxu0 %v210
  %1134 = vmatpush.msra.mxu0 %v206
  %1135 = vmatpush.msra.mxu0 %v202
  %1136 = vmatpush.msra.mxu0 %v198
  %1137 = vmatpush.msra.mxu0 %v194
  %1138 = vmatpush.msra.mxu0 %v190
  %1139 = vmatpush.msra.mxu0 %v186
  %1140 = vmatpush.msra.mxu0 %v182
  %1141 = vmatpush.msra.mxu0 %v178
  %1142 = vmatpush.msra.mxu0 %v174
  %1143 = vmatpush.msra.mxu0 %v170
  %1144 = vmatpush.msra.mxu0 %v166
  %1145 = vmatpush.msra.mxu0 %v162
  %1146 = vmatpush.msra.mxu0 %v158
  %1147 = vmatpush.msra.mxu0 %v154
  %1148 = vmatpush.msra.mxu0 %v150
  %1149 = vmatmul.f32.gmra.mxu0 %v980
  %v1150 = vpop.f32.mrf.mxu0
  %v1151 = vadd.f32 0.0, %v1150
  %1152 = vdwg.mxu0
  %1153 = vmatpush.msra.mxu0 %v211
  %1154 = vmatpush.msra.mxu0 %v207
  %1155 = vmatpush.msra.mxu0 %v203
  %1156 = vmatpush.msra.mxu0 %v199
  %1157 = vmatpush.msra.mxu0 %v195
  %1158 = vmatpush.msra.mxu0 %v191
  %1159 = vmatpush.msra.mxu0 %v187
  %1160 = vmatpush.msra.mxu0 %v183
  %1161 = vmatpush.msra.mxu0 %v179
  %1162 = vmatpush.msra.mxu0 %v175
  %1163 = vmatpush.msra.mxu0 %v171
  %1164 = vmatpush.msra.mxu0 %v167
  %1165 = vmatpush.msra.mxu0 %v163
  %1166 = vmatpush.msra.mxu0 %v159
  %1167 = vmatpush.msra.mxu0 %v155
  %1168 = vmatpush.msra.mxu0 %v151
  %1169 = vmatmul.f32.gmra.mxu0 %v980
  %v1170 = vpop.f32.mrf.mxu0
  %v1171 = vadd.f32 0.0, %v1170
  %1172 = vdwg.mxu0
  %1173 = vmatpush.msra.mxu0 %v212
  %1174 = vmatpush.msra.mxu0 %v208
  %1175 = vmatpush.msra.mxu0 %v204
  %1176 = vmatpush.msra.mxu0 %v200
  %1177 = vmatpush.msra.mxu0 %v196
  %1178 = vmatpush.msra.mxu0 %v192
  %1179 = vmatpush.msra.mxu0 %v188
  %1180 = vmatpush.msra.mxu0 %v184
  %1181 = vmatpush.msra.mxu0 %v180
  %1182 = vmatpush.msra.mxu0 %v176
  %1183 = vmatpush.msra.mxu0 %v172
  %1184 = vmatpush.msra.mxu0 %v168
  %1185 = vmatpush.msra.mxu0 %v164
  %1186 = vmatpush.msra.mxu0 %v160
  %1187 = vmatpush.msra.mxu0 %v156
  %1188 = vmatpush.msra.mxu0 %v152
  %1189 = vmatmul.f32.gmra.mxu0 %v980
  %v1190 = vpop.f32.mrf.mxu0
  %v1191 = vadd.f32 0.0, %v1190
  %1192 = vdwg.mxu0
  %1193 = vmatpush.msra.mxu0 %v213
  %1194 = vmatpush.msra.mxu0 %v209
  %1195 = vmatpush.msra.mxu0 %v205
  %1196 = vmatpush.msra.mxu0 %v201
  %1197 = vmatpush.msra.mxu0 %v197
  %1198 = vmatpush.msra.mxu0 %v193
  %1199 = vmatpush.msra.mxu0 %v189
  %1200 = vmatpush.msra.mxu0 %v185
  %1201 = vmatpush.msra.mxu0 %v181
  %1202 = vmatpush.msra.mxu0 %v177
  %1203 = vmatpush.msra.mxu0 %v173
  %1204 = vmatpush.msra.mxu0 %v169
  %1205 = vmatpush.msra.mxu0 %v165
  %1206 = vmatpush.msra.mxu0 %v161
  %1207 = vmatpush.msra.mxu0 %v157
  %1208 = vmatpush.msra.mxu0 %v153
  %1209 = vmatmul.f32.gmra.mxu0 %v980
  %v1210 = vpop.f32.mrf.mxu0
  %v1211 = vadd.f32 0.0, %v1210
  %1212 = vdwg.mxu0
  %1213 = vmatpush.msra.mxu0 %v146
  %1214 = vmatpush.msra.mxu0 %v142
  %1215 = vmatpush.msra.mxu0 %v138
  %1216 = vmatpush.msra.mxu0 %v134
  %1217 = vmatpush.msra.mxu0 %v130
  %1218 = vmatpush.msra.mxu0 %v126
  %1219 = vmatpush.msra.mxu0 %v122
  %1220 = vmatpush.msra.mxu0 %v118
  %1221 = vmatpush.msra.mxu0 %v114
  %1222 = vmatpush.msra.mxu0 %v110
  %1223 = vmatpush.msra.mxu0 %v106
  %1224 = vmatpush.msra.mxu0 %v102
  %1225 = vmatpush.msra.mxu0 %v98
  %1226 = vmatpush.msra.mxu0 %v94
  %1227 = vmatpush.msra.mxu0 %v90
  %1228 = vmatpush.msra.mxu0 %v86
  %1229 = vmatmul.f32.gmra.mxu0 %v1132
  %v1230 = vpop.f32.mrf.mxu0
  %v1231 = vadd.f32 %v1151, %v1230
  %1232 = vdwg.mxu0
  %1233 = vmatpush.msra.mxu0 %v147
  %1234 = vmatpush.msra.mxu0 %v143
  %1235 = vmatpush.msra.mxu0 %v139
  %1236 = vmatpush.msra.mxu0 %v135
  %1237 = vmatpush.msra.mxu0 %v131
  %1238 = vmatpush.msra.mxu0 %v127
  %1239 = vmatpush.msra.mxu0 %v123
  %1240 = vmatpush.msra.mxu0 %v119
  %1241 = vmatpush.msra.mxu0 %v115
  %1242 = vmatpush.msra.mxu0 %v111
  %1243 = vmatpush.msra.mxu0 %v107
  %1244 = vmatpush.msra.mxu0 %v103
  %1245 = vmatpush.msra.mxu0 %v99
  %1246 = vmatpush.msra.mxu0 %v95
  %1247 = vmatpush.msra.mxu0 %v91
  %1248 = vmatpush.msra.mxu0 %v87
  %1249 = vmatmul.f32.gmra.mxu0 %v1132
  %v1250 = vpop.f32.mrf.mxu0
  %v1251 = vadd.f32 %v1171, %v1250
  %1252 = vdwg.mxu0
  %1253 = vmatpush.msra.mxu0 %v148
  %1254 = vmatpush.msra.mxu0 %v144
  %1255 = vmatpush.msra.mxu0 %v140
  %1256 = vmatpush.msra.mxu0 %v136
  %1257 = vmatpush.msra.mxu0 %v132
  %1258 = vmatpush.msra.mxu0 %v128
  %1259 = vmatpush.msra.mxu0 %v124
  %1260 = vmatpush.msra.mxu0 %v120
  %1261 = vmatpush.msra.mxu0 %v116
  %1262 = vmatpush.msra.mxu0 %v112
  %1263 = vmatpush.msra.mxu0 %v108
  %1264 = vmatpush.msra.mxu0 %v104
  %1265 = vmatpush.msra.mxu0 %v100
  %1266 = vmatpush.msra.mxu0 %v96
  %1267 = vmatpush.msra.mxu0 %v92
  %1268 = vmatpush.msra.mxu0 %v88
  %1269 = vmatmul.f32.gmra.mxu0 %v1132
  %v1270 = vpop.f32.mrf.mxu0
  %v1271 = vadd.f32 %v1191, %v1270
  %1272 = vdwg.mxu0
  %1273 = vmatpush.msra.mxu0 %v149
  %1274 = vmatpush.msra.mxu0 %v145
  %1275 = vmatpush.msra.mxu0 %v141
  %1276 = vmatpush.msra.mxu0 %v137
  %1277 = vmatpush.msra.mxu0 %v133
  %1278 = vmatpush.msra.mxu0 %v129
  %1279 = vmatpush.msra.mxu0 %v125
  %1280 = vmatpush.msra.mxu0 %v121
  %1281 = vmatpush.msra.mxu0 %v117
  %1282 = vmatpush.msra.mxu0 %v113
  %1283 = vmatpush.msra.mxu0 %v109
  %1284 = vmatpush.msra.mxu0 %v105
  %1285 = vmatpush.msra.mxu0 %v101
  %1286 = vmatpush.msra.mxu0 %v97
  %1287 = vmatpush.msra.mxu0 %v93
  %1288 = vmatpush.msra.mxu0 %v89
  %1289 = vmatmul.f32.gmra.mxu0 %v1132
  %v1290 = vpop.f32.mrf.mxu0
  %v1291 = vadd.f32 %v1211, %v1290
  %1292 = vdwg.mxu0
  %v1293 = vadd.f32 %v1231, %v527
  %v1294 = vadd.f32 %v1251, %v528
  %v1295 = vadd.f32 %v1271, %v529
  %v1296 = vadd.f32 %v1291, %v530
  %v1297 = vxor.u32 %v1293, 2147483648
  %v1298 = vmul.f32 %v1297, 1.442695
  %v1299 = vpow.pop %v1298
  %v1300 = vadd.f32 %v1299, 1.0
  %v1301 = vrcp.pop %v1300
  %v1302 = vmul.f32 %v1300, %v1301
  %v1303 = vsub.f32 1.0, %v1302
  %v1304 = vmul.f32 %v1301, %v1303
  %v1305 = vadd.f32 %v1301, %v1304
  %vm1306 = vweird.f32 %v1300
  %vm1307 = vweird.f32 %v1301
  %vm1308 = vmor %vm1306, %vm1307
  %v1309 = vsel %vm1308, %v1301, %v1305
  %v1310 = vand.u32 2147483647, %v1300
  %vm1311 = vcmp.eq.f32.partialorder %v1310, 8.507059e+37
  %v1312 = vand.u32 %v1300, 2147483648
  %v1313 = vor.u32 1.1754944e-38, %v1312
  %v1314 = vsel %vm1311, %v1313, %v1309
  %v1315 = vmul.f32 1.0, %v1314
  %v1316 = vxor.u32 %v1294, 2147483648
  %v1317 = vmul.f32 %v1316, 1.442695
  %v1318 = vpow.pop %v1317
  %v1319 = vadd.f32 %v1318, 1.0
  %v1320 = vrcp.pop %v1319
  %v1321 = vmul.f32 %v1319, %v1320
  %v1322 = vsub.f32 1.0, %v1321
  %v1323 = vmul.f32 %v1320, %v1322
  %v1324 = vadd.f32 %v1320, %v1323
  %vm1325 = vweird.f32 %v1319
  %vm1326 = vweird.f32 %v1320
  %vm1327 = vmor %vm1325, %vm1326
  %v1328 = vsel %vm1327, %v1320, %v1324
  %v1329 = vand.u32 2147483647, %v1319
  %vm1330 = vcmp.eq.f32.partialorder %v1329, 8.507059e+37
  %v1331 = vand.u32 %v1319, 2147483648
  %v1332 = vor.u32 1.1754944e-38, %v1331
  %v1333 = vsel %vm1330, %v1332, %v1328
  %v1334 = vmul.f32 1.0, %v1333
  %v1335 = vtanh.pop %v1295
  %v1336 = vxor.u32 %v1296, 2147483648
  %v1337 = vmul.f32 %v1336, 1.442695
  %v1338 = vpow.pop %v1337
  %v1339 = vadd.f32 %v1338, 1.0
  %v1340 = vrcp.pop %v1339
  %v1341 = vmul.f32 %v1339, %v1340
  %v1342 = vsub.f32 1.0, %v1341
  %v1343 = vmul.f32 %v1340, %v1342
  %v1344 = vadd.f32 %v1340, %v1343
  %vm1345 = vweird.f32 %v1339
  %vm1346 = vweird.f32 %v1340
  %vm1347 = vmor %vm1345, %vm1346
  %v1348 = vsel %vm1347, %v1340, %v1344
  %v1349 = vand.u32 2147483647, %v1339
  %vm1350 = vcmp.eq.f32.partialorder %v1349, 8.507059e+37
  %v1351 = vand.u32 %v1339, 2147483648
  %v1352 = vor.u32 1.1754944e-38, %v1351
  %v1353 = vsel %vm1350, %v1352, %v1348
  %v1354 = vmul.f32 1.0, %v1353
  %v1355 = vmul.f32 %v1334, %v978
  %v1356 = vmul.f32 %v1315, %v1335
  %v1357 = vadd.f32 %v1355, %v1356
  %v1358 = vtanh.pop %v1357
  %v1359 = vmul.f32 %v1354, %v1358
  %s1360 = scalar_lea.vmem %s0, 96
  %v1361 = vld [vmem:[%s1360] sm:$0xff]
  %v1362 = vld [vmem:[%s1360 + $0x8] sm:$0xff]
  %v1363 = vld [vmem:[%s1360 + $0x10] sm:$0xff]
  %v1364 = vld [vmem:[%s1360 + $0x18] sm:$0xff]
  %1365 = vmatpush.msra.mxu0 %v82
  %1366 = vmatpush.msra.mxu0 %v78
  %1367 = vmatpush.msra.mxu0 %v74
  %1368 = vmatpush.msra.mxu0 %v70
  %1369 = vmatpush.msra.mxu0 %v66
  %1370 = vmatpush.msra.mxu0 %v62
  %1371 = vmatpush.msra.mxu0 %v58
  %1372 = vmatpush.msra.mxu0 %v54
  %1373 = vmatpush.msra.mxu0 %v50
  %1374 = vmatpush.msra.mxu0 %v46
  %1375 = vmatpush.msra.mxu0 %v42
  %1376 = vmatpush.msra.mxu0 %v38
  %1377 = vmatpush.msra.mxu0 %v34
  %1378 = vmatpush.msra.mxu0 %v30
  %1379 = vmatpush.msra.mxu0 %v26
  %1380 = vmatpush.msra.mxu0 %v22
  %1381 = vmatmul.f32.gmra.mxu0 %v1132
  %v1382 = vpop.f32.mrf.mxu0
  %v1383 = vadd.f32 0.0, %v1382
  %1384 = vdwg.mxu0
  %1385 = vmatpush.msra.mxu0 %v83
  %1386 = vmatpush.msra.mxu0 %v79
  %1387 = vmatpush.msra.mxu0 %v75
  %1388 = vmatpush.msra.mxu0 %v71
  %1389 = vmatpush.msra.mxu0 %v67
  %1390 = vmatpush.msra.mxu0 %v63
  %1391 = vmatpush.msra.mxu0 %v59
  %1392 = vmatpush.msra.mxu0 %v55
  %1393 = vmatpush.msra.mxu0 %v51
  %1394 = vmatpush.msra.mxu0 %v47
  %1395 = vmatpush.msra.mxu0 %v43
  %1396 = vmatpush.msra.mxu0 %v39
  %1397 = vmatpush.msra.mxu0 %v35
  %1398 = vmatpush.msra.mxu0 %v31
  %1399 = vmatpush.msra.mxu0 %v27
  %1400 = vmatpush.msra.mxu0 %v23
  %1401 = vmatmul.f32.gmra.mxu0 %v1132
  %v1402 = vpop.f32.mrf.mxu0
  %v1403 = vadd.f32 0.0, %v1402
  %1404 = vdwg.mxu0
  %1405 = vmatpush.msra.mxu0 %v84
  %1406 = vmatpush.msra.mxu0 %v80
  %1407 = vmatpush.msra.mxu0 %v76
  %1408 = vmatpush.msra.mxu0 %v72
  %1409 = vmatpush.msra.mxu0 %v68
  %1410 = vmatpush.msra.mxu0 %v64
  %1411 = vmatpush.msra.mxu0 %v60
  %1412 = vmatpush.msra.mxu0 %v56
  %1413 = vmatpush.msra.mxu0 %v52
  %1414 = vmatpush.msra.mxu0 %v48
  %1415 = vmatpush.msra.mxu0 %v44
  %1416 = vmatpush.msra.mxu0 %v40
  %1417 = vmatpush.msra.mxu0 %v36
  %1418 = vmatpush.msra.mxu0 %v32
  %1419 = vmatpush.msra.mxu0 %v28
  %1420 = vmatpush.msra.mxu0 %v24
  %1421 = vmatmul.f32.gmra.mxu0 %v1132
  %v1422 = vpop.f32.mrf.mxu0
  %v1423 = vadd.f32 0.0, %v1422
  %1424 = vdwg.mxu0
  %1425 = vmatpush.msra.mxu0 %v85
  %1426 = vmatpush.msra.mxu0 %v81
  %1427 = vmatpush.msra.mxu0 %v77
  %1428 = vmatpush.msra.mxu0 %v73
  %1429 = vmatpush.msra.mxu0 %v69
  %1430 = vmatpush.msra.mxu0 %v65
  %1431 = vmatpush.msra.mxu0 %v61
  %1432 = vmatpush.msra.mxu0 %v57
  %1433 = vmatpush.msra.mxu0 %v53
  %1434 = vmatpush.msra.mxu0 %v49
  %1435 = vmatpush.msra.mxu0 %v45
  %1436 = vmatpush.msra.mxu0 %v41
  %1437 = vmatpush.msra.mxu0 %v37
  %1438 = vmatpush.msra.mxu0 %v33
  %1439 = vmatpush.msra.mxu0 %v29
  %1440 = vmatpush.msra.mxu0 %v25
  %1441 = vmatmul.f32.gmra.mxu0 %v1132
  %v1442 = vpop.f32.mrf.mxu0
  %v1443 = vadd.f32 0.0, %v1442
  %1444 = vdwg.mxu0
  %v1445 = vadd.f32 %v1361, %v1383
  %v1446 = vadd.f32 %v1362, %v1403
  %v1447 = vadd.f32 %v1363, %v1423
  %v1448 = vadd.f32 %v1364, %v1443
  %v1449 = vxor.u32 %v1445, 2147483648
  %v1450 = vmul.f32 %v1449, 1.442695
  %v1451 = vpow.pop %v1450
  %v1452 = vadd.f32 %v1451, 1.0
  %v1453 = vrcp.pop %v1452
  %v1454 = vmul.f32 %v1452, %v1453
  %v1455 = vsub.f32 1.0, %v1454
  %v1456 = vmul.f32 %v1453, %v1455
  %v1457 = vadd.f32 %v1453, %v1456
  %vm1458 = vweird.f32 %v1452
  %vm1459 = vweird.f32 %v1453
  %vm1460 = vmor %vm1458, %vm1459
  %v1461 = vsel %vm1460, %v1453, %v1457
  %v1462 = vand.u32 2147483647, %v1452
  %vm1463 = vcmp.eq.f32.partialorder %v1462, 8.507059e+37
  %v1464 = vand.u32 %v1452, 2147483648
  %v1465 = vor.u32 1.1754944e-38, %v1464
  %v1466 = vsel %vm1463, %v1465, %v1461
  %v1467 = vmul.f32 1.0, %v1466
  %v1468 = vxor.u32 %v1446, 2147483648
  %v1469 = vmul.f32 %v1468, 1.442695
  %v1470 = vpow.pop %v1469
  %v1471 = vadd.f32 %v1470, 1.0
  %v1472 = vrcp.pop %v1471
  %v1473 = vmul.f32 %v1471, %v1472
  %v1474 = vsub.f32 1.0, %v1473
  %v1475 = vmul.f32 %v1472, %v1474
  %v1476 = vadd.f32 %v1472, %v1475
  %vm1477 = vweird.f32 %v1471
  %vm1478 = vweird.f32 %v1472
  %vm1479 = vmor %vm1477, %vm1478
  %v1480 = vsel %vm1479, %v1472, %v1476
  %v1481 = vand.u32 2147483647, %v1471
  %vm1482 = vcmp.eq.f32.partialorder %v1481, 8.507059e+37
  %v1483 = vand.u32 %v1471, 2147483648
  %v1484 = vor.u32 1.1754944e-38, %v1483
  %v1485 = vsel %vm1482, %v1484, %v1480
  %v1486 = vmul.f32 1.0, %v1485
  %v1487 = vtanh.pop %v1447
  %v1488 = vxor.u32 %v1448, 2147483648
  %v1489 = vmul.f32 %v1488, 1.442695
  %v1490 = vpow.pop %v1489
  %v1491 = vadd.f32 %v1490, 1.0
  %v1492 = vrcp.pop %v1491
  %v1493 = vmul.f32 %v1491, %v1492
  %v1494 = vsub.f32 1.0, %v1493
  %v1495 = vmul.f32 %v1492, %v1494
  %v1496 = vadd.f32 %v1492, %v1495
  %vm1497 = vweird.f32 %v1491
  %vm1498 = vweird.f32 %v1492
  %vm1499 = vmor %vm1497, %vm1498
  %v1500 = vsel %vm1499, %v1492, %v1496
  %v1501 = vand.u32 2147483647, %v1491
  %vm1502 = vcmp.eq.f32.partialorder %v1501, 8.507059e+37
  %v1503 = vand.u32 %v1491, 2147483648
  %v1504 = vor.u32 1.1754944e-38, %v1503
  %v1505 = vsel %vm1502, %v1504, %v1500
  %v1506 = vmul.f32 1.0, %v1505
  %v1507 = vmul.f32 %v1486, %v1130
  %v1508 = vmul.f32 %v1467, %v1487
  %v1509 = vadd.f32 %v1507, %v1508
  %v1510 = vtanh.pop %v1509
  %v1511 = vmul.f32 %v1506, %v1510
  %1512 = vmatpush.msra.mxu0 %v210
  %1513 = vmatpush.msra.mxu0 %v206
  %1514 = vmatpush.msra.mxu0 %v202
  %1515 = vmatpush.msra.mxu0 %v198
  %1516 = vmatpush.msra.mxu0 %v194
  %1517 = vmatpush.msra.mxu0 %v190
  %1518 = vmatpush.msra.mxu0 %v186
  %1519 = vmatpush.msra.mxu0 %v182
  %1520 = vmatpush.msra.mxu0 %v178
  %1521 = vmatpush.msra.mxu0 %v174
  %1522 = vmatpush.msra.mxu0 %v170
  %1523 = vmatpush.msra.mxu0 %v166
  %1524 = vmatpush.msra.mxu0 %v162
  %1525 = vmatpush.msra.mxu0 %v158
  %1526 = vmatpush.msra.mxu0 %v154
  %1527 = vmatpush.msra.mxu0 %v150
  %1528 = vmatmul.f32.gmra.mxu0 %v1359
  %v1529 = vpop.f32.mrf.mxu0
  %v1530 = vadd.f32 0.0, %v1529
  %1531 = vdwg.mxu0
  %1532 = vmatpush.msra.mxu0 %v211
  %1533 = vmatpush.msra.mxu0 %v207
  %1534 = vmatpush.msra.mxu0 %v203
  %1535 = vmatpush.msra.mxu0 %v199
  %1536 = vmatpush.msra.mxu0 %v195
  %1537 = vmatpush.msra.mxu0 %v191
  %1538 = vmatpush.msra.mxu0 %v187
  %1539 = vmatpush.msra.mxu0 %v183
  %1540 = vmatpush.msra.mxu0 %v179
  %1541 = vmatpush.msra.mxu0 %v175
  %1542 = vmatpush.msra.mxu0 %v171
  %1543 = vmatpush.msra.mxu0 %v167
  %1544 = vmatpush.msra.mxu0 %v163
  %1545 = vmatpush.msra.mxu0 %v159
  %1546 = vmatpush.msra.mxu0 %v155
  %1547 = vmatpush.msra.mxu0 %v151
  %1548 = vmatmul.f32.gmra.mxu0 %v1359
  %v1549 = vpop.f32.mrf.mxu0
  %v1550 = vadd.f32 0.0, %v1549
  %1551 = vdwg.mxu0
  %1552 = vmatpush.msra.mxu0 %v212
  %1553 = vmatpush.msra.mxu0 %v208
  %1554 = vmatpush.msra.mxu0 %v204
  %1555 = vmatpush.msra.mxu0 %v200
  %1556 = vmatpush.msra.mxu0 %v196
  %1557 = vmatpush.msra.mxu0 %v192
  %1558 = vmatpush.msra.mxu0 %v188
  %1559 = vmatpush.msra.mxu0 %v184
  %1560 = vmatpush.msra.mxu0 %v180
  %1561 = vmatpush.msra.mxu0 %v176
  %1562 = vmatpush.msra.mxu0 %v172
  %1563 = vmatpush.msra.mxu0 %v168
  %1564 = vmatpush.msra.mxu0 %v164
  %1565 = vmatpush.msra.mxu0 %v160
  %1566 = vmatpush.msra.mxu0 %v156
  %1567 = vmatpush.msra.mxu0 %v152
  %1568 = vmatmul.f32.gmra.mxu0 %v1359
  %v1569 = vpop.f32.mrf.mxu0
  %v1570 = vadd.f32 0.0, %v1569
  %1571 = vdwg.mxu0
  %1572 = vmatpush.msra.mxu0 %v213
  %1573 = vmatpush.msra.mxu0 %v209
  %1574 = vmatpush.msra.mxu0 %v205
  %1575 = vmatpush.msra.mxu0 %v201
  %1576 = vmatpush.msra.mxu0 %v197
  %1577 = vmatpush.msra.mxu0 %v193
  %1578 = vmatpush.msra.mxu0 %v189
  %1579 = vmatpush.msra.mxu0 %v185
  %1580 = vmatpush.msra.mxu0 %v181
  %1581 = vmatpush.msra.mxu0 %v177
  %1582 = vmatpush.msra.mxu0 %v173
  %1583 = vmatpush.msra.mxu0 %v169
  %1584 = vmatpush.msra.mxu0 %v165
  %1585 = vmatpush.msra.mxu0 %v161
  %1586 = vmatpush.msra.mxu0 %v157
  %1587 = vmatpush.msra.mxu0 %v153
  %1588 = vmatmul.f32.gmra.mxu0 %v1359
  %v1589 = vpop.f32.mrf.mxu0
  %v1590 = vadd.f32 0.0, %v1589
  %1591 = vdwg.mxu0
  %1592 = vmatpush.msra.mxu0 %v146
  %1593 = vmatpush.msra.mxu0 %v142
  %1594 = vmatpush.msra.mxu0 %v138
  %1595 = vmatpush.msra.mxu0 %v134
  %1596 = vmatpush.msra.mxu0 %v130
  %1597 = vmatpush.msra.mxu0 %v126
  %1598 = vmatpush.msra.mxu0 %v122
  %1599 = vmatpush.msra.mxu0 %v118
  %1600 = vmatpush.msra.mxu0 %v114
  %1601 = vmatpush.msra.mxu0 %v110
  %1602 = vmatpush.msra.mxu0 %v106
  %1603 = vmatpush.msra.mxu0 %v102
  %1604 = vmatpush.msra.mxu0 %v98
  %1605 = vmatpush.msra.mxu0 %v94
  %1606 = vmatpush.msra.mxu0 %v90
  %1607 = vmatpush.msra.mxu0 %v86
  %1608 = vmatmul.f32.gmra.mxu0 %v1511
  %v1609 = vpop.f32.mrf.mxu0
  %v1610 = vadd.f32 %v1530, %v1609
  %1611 = vdwg.mxu0
  %1612 = vmatpush.msra.mxu0 %v147
  %1613 = vmatpush.msra.mxu0 %v143
  %1614 = vmatpush.msra.mxu0 %v139
  %1615 = vmatpush.msra.mxu0 %v135
  %1616 = vmatpush.msra.mxu0 %v131
  %1617 = vmatpush.msra.mxu0 %v127
  %1618 = vmatpush.msra.mxu0 %v123
  %1619 = vmatpush.msra.mxu0 %v119
  %1620 = vmatpush.msra.mxu0 %v115
  %1621 = vmatpush.msra.mxu0 %v111
  %1622 = vmatpush.msra.mxu0 %v107
  %1623 = vmatpush.msra.mxu0 %v103
  %1624 = vmatpush.msra.mxu0 %v99
  %1625 = vmatpush.msra.mxu0 %v95
  %1626 = vmatpush.msra.mxu0 %v91
  %1627 = vmatpush.msra.mxu0 %v87
  %1628 = vmatmul.f32.gmra.mxu0 %v1511
  %v1629 = vpop.f32.mrf.mxu0
  %v1630 = vadd.f32 %v1550, %v1629
  %1631 = vdwg.mxu0
  %1632 = vmatpush.msra.mxu0 %v148
  %1633 = vmatpush.msra.mxu0 %v144
  %1634 = vmatpush.msra.mxu0 %v140
  %1635 = vmatpush.msra.mxu0 %v136
  %1636 = vmatpush.msra.mxu0 %v132
  %1637 = vmatpush.msra.mxu0 %v128
  %1638 = vmatpush.msra.mxu0 %v124
  %1639 = vmatpush.msra.mxu0 %v120
  %1640 = vmatpush.msra.mxu0 %v116
  %1641 = vmatpush.msra.mxu0 %v112
  %1642 = vmatpush.msra.mxu0 %v108
  %1643 = vmatpush.msra.mxu0 %v104
  %1644 = vmatpush.msra.mxu0 %v100
  %1645 = vmatpush.msra.mxu0 %v96
  %1646 = vmatpush.msra.mxu0 %v92
  %1647 = vmatpush.msra.mxu0 %v88
  %1648 = vmatmul.f32.gmra.mxu0 %v1511
  %v1649 = vpop.f32.mrf.mxu0
  %v1650 = vadd.f32 %v1570, %v1649
  %1651 = vdwg.mxu0
  %1652 = vmatpush.msra.mxu0 %v149
  %1653 = vmatpush.msra.mxu0 %v145
  %1654 = vmatpush.msra.mxu0 %v141
  %1655 = vmatpush.msra.mxu0 %v137
  %1656 = vmatpush.msra.mxu0 %v133
  %1657 = vmatpush.msra.mxu0 %v129
  %1658 = vmatpush.msra.mxu0 %v125
  %1659 = vmatpush.msra.mxu0 %v121
  %1660 = vmatpush.msra.mxu0 %v117
  %1661 = vmatpush.msra.mxu0 %v113
  %1662 = vmatpush.msra.mxu0 %v109
  %1663 = vmatpush.msra.mxu0 %v105
  %1664 = vmatpush.msra.mxu0 %v101
  %1665 = vmatpush.msra.mxu0 %v97
  %1666 = vmatpush.msra.mxu0 %v93
  %1667 = vmatpush.msra.mxu0 %v89
  %1668 = vmatmul.f32.gmra.mxu0 %v1511
  %v1669 = vpop.f32.mrf.mxu0
  %v1670 = vadd.f32 %v1590, %v1669
  %1671 = vdwg.mxu0
  %v1672 = vadd.f32 %v1610, %v527
  %v1673 = vadd.f32 %v1630, %v528
  %v1674 = vadd.f32 %v1650, %v529
  %v1675 = vadd.f32 %v1670, %v530
  %v1676 = vxor.u32 %v1672, 2147483648
  %v1677 = vmul.f32 %v1676, 1.442695
  %v1678 = vpow.pop %v1677
  %v1679 = vadd.f32 %v1678, 1.0
  %v1680 = vrcp.pop %v1679
  %v1681 = vmul.f32 %v1679, %v1680
  %v1682 = vsub.f32 1.0, %v1681
  %v1683 = vmul.f32 %v1680, %v1682
  %v1684 = vadd.f32 %v1680, %v1683
  %vm1685 = vweird.f32 %v1679
  %vm1686 = vweird.f32 %v1680
  %vm1687 = vmor %vm1685, %vm1686
  %v1688 = vsel %vm1687, %v1680, %v1684
  %v1689 = vand.u32 2147483647, %v1679
  %vm1690 = vcmp.eq.f32.partialorder %v1689, 8.507059e+37
  %v1691 = vand.u32 %v1679, 2147483648
  %v1692 = vor.u32 1.1754944e-38, %v1691
  %v1693 = vsel %vm1690, %v1692, %v1688
  %v1694 = vmul.f32 1.0, %v1693
  %v1695 = vxor.u32 %v1673, 2147483648
  %v1696 = vmul.f32 %v1695, 1.442695
  %v1697 = vpow.pop %v1696
  %v1698 = vadd.f32 %v1697, 1.0
  %v1699 = vrcp.pop %v1698
  %v1700 = vmul.f32 %v1698, %v1699
  %v1701 = vsub.f32 1.0, %v1700
  %v1702 = vmul.f32 %v1699, %v1701
  %v1703 = vadd.f32 %v1699, %v1702
  %vm1704 = vweird.f32 %v1698
  %vm1705 = vweird.f32 %v1699
  %vm1706 = vmor %vm1704, %vm1705
  %v1707 = vsel %vm1706, %v1699, %v1703
  %v1708 = vand.u32 2147483647, %v1698
  %vm1709 = vcmp.eq.f32.partialorder %v1708, 8.507059e+37
  %v1710 = vand.u32 %v1698, 2147483648
  %v1711 = vor.u32 1.1754944e-38, %v1710
  %v1712 = vsel %vm1709, %v1711, %v1707
  %v1713 = vmul.f32 1.0, %v1712
  %v1714 = vtanh.pop %v1674
  %v1715 = vxor.u32 %v1675, 2147483648
  %v1716 = vmul.f32 %v1715, 1.442695
  %v1717 = vpow.pop %v1716
  %v1718 = vadd.f32 %v1717, 1.0
  %v1719 = vrcp.pop %v1718
  %v1720 = vmul.f32 %v1718, %v1719
  %v1721 = vsub.f32 1.0, %v1720
  %v1722 = vmul.f32 %v1719, %v1721
  %v1723 = vadd.f32 %v1719, %v1722
  %vm1724 = vweird.f32 %v1718
  %vm1725 = vweird.f32 %v1719
  %vm1726 = vmor %vm1724, %vm1725
  %v1727 = vsel %vm1726, %v1719, %v1723
  %v1728 = vand.u32 2147483647, %v1718
  %vm1729 = vcmp.eq.f32.partialorder %v1728, 8.507059e+37
  %v1730 = vand.u32 %v1718, 2147483648
  %v1731 = vor.u32 1.1754944e-38, %v1730
  %v1732 = vsel %vm1729, %v1731, %v1727
  %v1733 = vmul.f32 1.0, %v1732
  %v1734 = vmul.f32 %v1713, %v1357
  %v1735 = vmul.f32 %v1694, %v1714
  %v1736 = vadd.f32 %v1734, %v1735
  %v1737 = vtanh.pop %v1736
  %v1738 = vmul.f32 %v1733, %v1737
  %s1739 = scalar_lea.vmem %s0, 128
  %v1740 = vld [vmem:[%s1739] sm:$0xff]
  %v1741 = vld [vmem:[%s1739 + $0x8] sm:$0xff]
  %v1742 = vld [vmem:[%s1739 + $0x10] sm:$0xff]
  %v1743 = vld [vmem:[%s1739 + $0x18] sm:$0xff]
  %1744 = vmatpush.msra.mxu0 %v82
  %1745 = vmatpush.msra.mxu0 %v78
  %1746 = vmatpush.msra.mxu0 %v74
  %1747 = vmatpush.msra.mxu0 %v70
  %1748 = vmatpush.msra.mxu0 %v66
  %1749 = vmatpush.msra.mxu0 %v62
  %1750 = vmatpush.msra.mxu0 %v58
  %1751 = vmatpush.msra.mxu0 %v54
  %1752 = vmatpush.msra.mxu0 %v50
  %1753 = vmatpush.msra.mxu0 %v46
  %1754 = vmatpush.msra.mxu0 %v42
  %1755 = vmatpush.msra.mxu0 %v38
  %1756 = vmatpush.msra.mxu0 %v34
  %1757 = vmatpush.msra.mxu0 %v30
  %1758 = vmatpush.msra.mxu0 %v26
  %1759 = vmatpush.msra.mxu0 %v22
  %1760 = vmatmul.f32.gmra.mxu0 %v1511
  %v1761 = vpop.f32.mrf.mxu0
  %v1762 = vadd.f32 0.0, %v1761
  %1763 = vdwg.mxu0
  %1764 = vmatpush.msra.mxu0 %v83
  %1765 = vmatpush.msra.mxu0 %v79
  %1766 = vmatpush.msra.mxu0 %v75
  %1767 = vmatpush.msra.mxu0 %v71
  %1768 = vmatpush.msra.mxu0 %v67
  %1769 = vmatpush.msra.mxu0 %v63
  %1770 = vmatpush.msra.mxu0 %v59
  %1771 = vmatpush.msra.mxu0 %v55
  %1772 = vmatpush.msra.mxu0 %v51
  %1773 = vmatpush.msra.mxu0 %v47
  %1774 = vmatpush.msra.mxu0 %v43
  %1775 = vmatpush.msra.mxu0 %v39
  %1776 = vmatpush.msra.mxu0 %v35
  %1777 = vmatpush.msra.mxu0 %v31
  %1778 = vmatpush.msra.mxu0 %v27
  %1779 = vmatpush.msra.mxu0 %v23
  %1780 = vmatmul.f32.gmra.mxu0 %v1511
  %v1781 = vpop.f32.mrf.mxu0
  %v1782 = vadd.f32 0.0, %v1781
  %1783 = vdwg.mxu0
  %1784 = vmatpush.msra.mxu0 %v84
  %1785 = vmatpush.msra.mxu0 %v80
  %1786 = vmatpush.msra.mxu0 %v76
  %1787 = vmatpush.msra.mxu0 %v72
  %1788 = vmatpush.msra.mxu0 %v68
  %1789 = vmatpush.msra.mxu0 %v64
  %1790 = vmatpush.msra.mxu0 %v60
  %1791 = vmatpush.msra.mxu0 %v56
  %1792 = vmatpush.msra.mxu0 %v52
  %1793 = vmatpush.msra.mxu0 %v48
  %1794 = vmatpush.msra.mxu0 %v44
  %1795 = vmatpush.msra.mxu0 %v40
  %1796 = vmatpush.msra.mxu0 %v36
  %1797 = vmatpush.msra.mxu0 %v32
  %1798 = vmatpush.msra.mxu0 %v28
  %1799 = vmatpush.msra.mxu0 %v24
  %1800 = vmatmul.f32.gmra.mxu0 %v1511
  %v1801 = vpop.f32.mrf.mxu0
  %v1802 = vadd.f32 0.0, %v1801
  %1803 = vdwg.mxu0
  %1804 = vmatpush.msra.mxu0 %v85
  %1805 = vmatpush.msra.mxu0 %v81
  %1806 = vmatpush.msra.mxu0 %v77
  %1807 = vmatpush.msra.mxu0 %v73
  %1808 = vmatpush.msra.mxu0 %v69
  %1809 = vmatpush.msra.mxu0 %v65
  %1810 = vmatpush.msra.mxu0 %v61
  %1811 = vmatpush.msra.mxu0 %v57
  %1812 = vmatpush.msra.mxu0 %v53
  %1813 = vmatpush.msra.mxu0 %v49
  %1814 = vmatpush.msra.mxu0 %v45
  %1815 = vmatpush.msra.mxu0 %v41
  %1816 = vmatpush.msra.mxu0 %v37
  %1817 = vmatpush.msra.mxu0 %v33
  %1818 = vmatpush.msra.mxu0 %v29
  %1819 = vmatpush.msra.mxu0 %v25
  %1820 = vmatmul.f32.gmra.mxu0 %v1511
  %v1821 = vpop.f32.mrf.mxu0
  %v1822 = vadd.f32 0.0, %v1821
  %1823 = vdwg.mxu0
  %v1824 = vadd.f32 %v1740, %v1762
  %v1825 = vadd.f32 %v1741, %v1782
  %v1826 = vadd.f32 %v1742, %v1802
  %v1827 = vadd.f32 %v1743, %v1822
  %v1828 = vxor.u32 %v1824, 2147483648
  %v1829 = vmul.f32 %v1828, 1.442695
  %v1830 = vpow.pop %v1829
  %v1831 = vadd.f32 %v1830, 1.0
  %v1832 = vrcp.pop %v1831
  %v1833 = vmul.f32 %v1831, %v1832
  %v1834 = vsub.f32 1.0, %v1833
  %v1835 = vmul.f32 %v1832, %v1834
  %v1836 = vadd.f32 %v1832, %v1835
  %vm1837 = vweird.f32 %v1831
  %vm1838 = vweird.f32 %v1832
  %vm1839 = vmor %vm1837, %vm1838
  %v1840 = vsel %vm1839, %v1832, %v1836
  %v1841 = vand.u32 2147483647, %v1831
  %vm1842 = vcmp.eq.f32.partialorder %v1841, 8.507059e+37
  %v1843 = vand.u32 %v1831, 2147483648
  %v1844 = vor.u32 1.1754944e-38, %v1843
  %v1845 = vsel %vm1842, %v1844, %v1840
  %v1846 = vmul.f32 1.0, %v1845
  %v1847 = vxor.u32 %v1825, 2147483648
  %v1848 = vmul.f32 %v1847, 1.442695
  %v1849 = vpow.pop %v1848
  %v1850 = vadd.f32 %v1849, 1.0
  %v1851 = vrcp.pop %v1850
  %v1852 = vmul.f32 %v1850, %v1851
  %v1853 = vsub.f32 1.0, %v1852
  %v1854 = vmul.f32 %v1851, %v1853
  %v1855 = vadd.f32 %v1851, %v1854
  %vm1856 = vweird.f32 %v1850
  %vm1857 = vweird.f32 %v1851
  %vm1858 = vmor %vm1856, %vm1857
  %v1859 = vsel %vm1858, %v1851, %v1855
  %v1860 = vand.u32 2147483647, %v1850
  %vm1861 = vcmp.eq.f32.partialorder %v1860, 8.507059e+37
  %v1862 = vand.u32 %v1850, 2147483648
  %v1863 = vor.u32 1.1754944e-38, %v1862
  %v1864 = vsel %vm1861, %v1863, %v1859
  %v1865 = vmul.f32 1.0, %v1864
  %v1866 = vtanh.pop %v1826
  %v1867 = vxor.u32 %v1827, 2147483648
  %v1868 = vmul.f32 %v1867, 1.442695
  %v1869 = vpow.pop %v1868
  %v1870 = vadd.f32 %v1869, 1.0
  %v1871 = vrcp.pop %v1870
  %v1872 = vmul.f32 %v1870, %v1871
  %v1873 = vsub.f32 1.0, %v1872
  %v1874 = vmul.f32 %v1871, %v1873
  %v1875 = vadd.f32 %v1871, %v1874
  %vm1876 = vweird.f32 %v1870
  %vm1877 = vweird.f32 %v1871
  %vm1878 = vmor %vm1876, %vm1877
  %v1879 = vsel %vm1878, %v1871, %v1875
  %v1880 = vand.u32 2147483647, %v1870
  %vm1881 = vcmp.eq.f32.partialorder %v1880, 8.507059e+37
  %v1882 = vand.u32 %v1870, 2147483648
  %v1883 = vor.u32 1.1754944e-38, %v1882
  %v1884 = vsel %vm1881, %v1883, %v1879
  %v1885 = vmul.f32 1.0, %v1884
  %v1886 = vmul.f32 %v1865, %v1509
  %v1887 = vmul.f32 %v1846, %v1866
  %v1888 = vadd.f32 %v1886, %v1887
  %v1889 = vtanh.pop %v1888
  %v1890 = vmul.f32 %v1885, %v1889
  %1891 = vmatpush.msra.mxu0 %v210
  %1892 = vmatpush.msra.mxu0 %v206
  %1893 = vmatpush.msra.mxu0 %v202
  %1894 = vmatpush.msra.mxu0 %v198
  %1895 = vmatpush.msra.mxu0 %v194
  %1896 = vmatpush.msra.mxu0 %v190
  %1897 = vmatpush.msra.mxu0 %v186
  %1898 = vmatpush.msra.mxu0 %v182
  %1899 = vmatpush.msra.mxu0 %v178
  %1900 = vmatpush.msra.mxu0 %v174
  %1901 = vmatpush.msra.mxu0 %v170
  %1902 = vmatpush.msra.mxu0 %v166
  %1903 = vmatpush.msra.mxu0 %v162
  %1904 = vmatpush.msra.mxu0 %v158
  %1905 = vmatpush.msra.mxu0 %v154
  %1906 = vmatpush.msra.mxu0 %v150
  %1907 = vmatmul.f32.gmra.mxu0 %v1738
  %v1908 = vpop.f32.mrf.mxu0
  %v1909 = vadd.f32 0.0, %v1908
  %1910 = vdwg.mxu0
  %1911 = vmatpush.msra.mxu0 %v211
  %1912 = vmatpush.msra.mxu0 %v207
  %1913 = vmatpush.msra.mxu0 %v203
  %1914 = vmatpush.msra.mxu0 %v199
  %1915 = vmatpush.msra.mxu0 %v195
  %1916 = vmatpush.msra.mxu0 %v191
  %1917 = vmatpush.msra.mxu0 %v187
  %1918 = vmatpush.msra.mxu0 %v183
  %1919 = vmatpush.msra.mxu0 %v179
  %1920 = vmatpush.msra.mxu0 %v175
  %1921 = vmatpush.msra.mxu0 %v171
  %1922 = vmatpush.msra.mxu0 %v167
  %1923 = vmatpush.msra.mxu0 %v163
  %1924 = vmatpush.msra.mxu0 %v159
  %1925 = vmatpush.msra.mxu0 %v155
  %1926 = vmatpush.msra.mxu0 %v151
  %1927 = vmatmul.f32.gmra.mxu0 %v1738
  %v1928 = vpop.f32.mrf.mxu0
  %v1929 = vadd.f32 0.0, %v1928
  %1930 = vdwg.mxu0
  %1931 = vmatpush.msra.mxu0 %v212
  %1932 = vmatpush.msra.mxu0 %v208
  %1933 = vmatpush.msra.mxu0 %v204
  %1934 = vmatpush.msra.mxu0 %v200
  %1935 = vmatpush.msra.mxu0 %v196
  %1936 = vmatpush.msra.mxu0 %v192
  %1937 = vmatpush.msra.mxu0 %v188
  %1938 = vmatpush.msra.mxu0 %v184
  %1939 = vmatpush.msra.mxu0 %v180
  %1940 = vmatpush.msra.mxu0 %v176
  %1941 = vmatpush.msra.mxu0 %v172
  %1942 = vmatpush.msra.mxu0 %v168
  %1943 = vmatpush.msra.mxu0 %v164
  %1944 = vmatpush.msra.mxu0 %v160
  %1945 = vmatpush.msra.mxu0 %v156
  %1946 = vmatpush.msra.mxu0 %v152
  %1947 = vmatmul.f32.gmra.mxu0 %v1738
  %v1948 = vpop.f32.mrf.mxu0
  %v1949 = vadd.f32 0.0, %v1948
  %1950 = vdwg.mxu0
  %1951 = vmatpush.msra.mxu0 %v213
  %1952 = vmatpush.msra.mxu0 %v209
  %1953 = vmatpush.msra.mxu0 %v205
  %1954 = vmatpush.msra.mxu0 %v201
  %1955 = vmatpush.msra.mxu0 %v197
  %1956 = vmatpush.msra.mxu0 %v193
  %1957 = vmatpush.msra.mxu0 %v189
  %1958 = vmatpush.msra.mxu0 %v185
  %1959 = vmatpush.msra.mxu0 %v181
  %1960 = vmatpush.msra.mxu0 %v177
  %1961 = vmatpush.msra.mxu0 %v173
  %1962 = vmatpush.msra.mxu0 %v169
  %1963 = vmatpush.msra.mxu0 %v165
  %1964 = vmatpush.msra.mxu0 %v161
  %1965 = vmatpush.msra.mxu0 %v157
  %1966 = vmatpush.msra.mxu0 %v153
  %1967 = vmatmul.f32.gmra.mxu0 %v1738
  %v1968 = vpop.f32.mrf.mxu0
  %v1969 = vadd.f32 0.0, %v1968
  %1970 = vdwg.mxu0
  %1971 = vmatpush.msra.mxu0 %v146
  %1972 = vmatpush.msra.mxu0 %v142
  %1973 = vmatpush.msra.mxu0 %v138
  %1974 = vmatpush.msra.mxu0 %v134
  %1975 = vmatpush.msra.mxu0 %v130
  %1976 = vmatpush.msra.mxu0 %v126
  %1977 = vmatpush.msra.mxu0 %v122
  %1978 = vmatpush.msra.mxu0 %v118
  %1979 = vmatpush.msra.mxu0 %v114
  %1980 = vmatpush.msra.mxu0 %v110
  %1981 = vmatpush.msra.mxu0 %v106
  %1982 = vmatpush.msra.mxu0 %v102
  %1983 = vmatpush.msra.mxu0 %v98
  %1984 = vmatpush.msra.mxu0 %v94
  %1985 = vmatpush.msra.mxu0 %v90
  %1986 = vmatpush.msra.mxu0 %v86
  %1987 = vmatmul.f32.gmra.mxu0 %v1890
  %v1988 = vpop.f32.mrf.mxu0
  %v1989 = vadd.f32 %v1909, %v1988
  %1990 = vdwg.mxu0
  %1991 = vmatpush.msra.mxu0 %v147
  %1992 = vmatpush.msra.mxu0 %v143
  %1993 = vmatpush.msra.mxu0 %v139
  %1994 = vmatpush.msra.mxu0 %v135
  %1995 = vmatpush.msra.mxu0 %v131
  %1996 = vmatpush.msra.mxu0 %v127
  %1997 = vmatpush.msra.mxu0 %v123
  %1998 = vmatpush.msra.mxu0 %v119
  %1999 = vmatpush.msra.mxu0 %v115
  %2000 = vmatpush.msra.mxu0 %v111
  %2001 = vmatpush.msra.mxu0 %v107
  %2002 = vmatpush.msra.mxu0 %v103
  %2003 = vmatpush.msra.mxu0 %v99
  %2004 = vmatpush.msra.mxu0 %v95
  %2005 = vmatpush.msra.mxu0 %v91
  %2006 = vmatpush.msra.mxu0 %v87
  %2007 = vmatmul.f32.gmra.mxu0 %v1890
  %v2008 = vpop.f32.mrf.mxu0
  %v2009 = vadd.f32 %v1929, %v2008
  %2010 = vdwg.mxu0
  %2011 = vmatpush.msra.mxu0 %v148
  %2012 = vmatpush.msra.mxu0 %v144
  %2013 = vmatpush.msra.mxu0 %v140
  %2014 = vmatpush.msra.mxu0 %v136
  %2015 = vmatpush.msra.mxu0 %v132
  %2016 = vmatpush.msra.mxu0 %v128
  %2017 = vmatpush.msra.mxu0 %v124
  %2018 = vmatpush.msra.mxu0 %v120
  %2019 = vmatpush.msra.mxu0 %v116
  %2020 = vmatpush.msra.mxu0 %v112
  %2021 = vmatpush.msra.mxu0 %v108
  %2022 = vmatpush.msra.mxu0 %v104
  %2023 = vmatpush.msra.mxu0 %v100
  %2024 = vmatpush.msra.mxu0 %v96
  %2025 = vmatpush.msra.mxu0 %v92
  %2026 = vmatpush.msra.mxu0 %v88
  %2027 = vmatmul.f32.gmra.mxu0 %v1890
  %v2028 = vpop.f32.mrf.mxu0
  %v2029 = vadd.f32 %v1949, %v2028
  %2030 = vdwg.mxu0
  %2031 = vmatpush.msra.mxu0 %v149
  %2032 = vmatpush.msra.mxu0 %v145
  %2033 = vmatpush.msra.mxu0 %v141
  %2034 = vmatpush.msra.mxu0 %v137
  %2035 = vmatpush.msra.mxu0 %v133
  %2036 = vmatpush.msra.mxu0 %v129
  %2037 = vmatpush.msra.mxu0 %v125
  %2038 = vmatpush.msra.mxu0 %v121
  %2039 = vmatpush.msra.mxu0 %v117
  %2040 = vmatpush.msra.mxu0 %v113
  %2041 = vmatpush.msra.mxu0 %v109
  %2042 = vmatpush.msra.mxu0 %v105
  %2043 = vmatpush.msra.mxu0 %v101
  %2044 = vmatpush.msra.mxu0 %v97
  %2045 = vmatpush.msra.mxu0 %v93
  %2046 = vmatpush.msra.mxu0 %v89
  %2047 = vmatmul.f32.gmra.mxu0 %v1890
  %v2048 = vpop.f32.mrf.mxu0
  %v2049 = vadd.f32 %v1969, %v2048
  %2050 = vdwg.mxu0
  %v2051 = vadd.f32 %v1989, %v527
  %v2052 = vadd.f32 %v2009, %v528
  %v2053 = vadd.f32 %v2029, %v529
  %v2054 = vadd.f32 %v2049, %v530
  %v2055 = vxor.u32 %v2051, 2147483648
  %v2056 = vmul.f32 %v2055, 1.442695
  %v2057 = vpow.pop %v2056
  %v2058 = vadd.f32 %v2057, 1.0
  %v2059 = vrcp.pop %v2058
  %v2060 = vmul.f32 %v2058, %v2059
  %v2061 = vsub.f32 1.0, %v2060
  %v2062 = vmul.f32 %v2059, %v2061
  %v2063 = vadd.f32 %v2059, %v2062
  %vm2064 = vweird.f32 %v2058
  %vm2065 = vweird.f32 %v2059
  %vm2066 = vmor %vm2064, %vm2065
  %v2067 = vsel %vm2066, %v2059, %v2063
  %v2068 = vand.u32 2147483647, %v2058
  %vm2069 = vcmp.eq.f32.partialorder %v2068, 8.507059e+37
  %v2070 = vand.u32 %v2058, 2147483648
  %v2071 = vor.u32 1.1754944e-38, %v2070
  %v2072 = vsel %vm2069, %v2071, %v2067
  %v2073 = vmul.f32 1.0, %v2072
  %v2074 = vxor.u32 %v2052, 2147483648
  %v2075 = vmul.f32 %v2074, 1.442695
  %v2076 = vpow.pop %v2075
  %v2077 = vadd.f32 %v2076, 1.0
  %v2078 = vrcp.pop %v2077
  %v2079 = vmul.f32 %v2077, %v2078
  %v2080 = vsub.f32 1.0, %v2079
  %v2081 = vmul.f32 %v2078, %v2080
  %v2082 = vadd.f32 %v2078, %v2081
  %vm2083 = vweird.f32 %v2077
  %vm2084 = vweird.f32 %v2078
  %vm2085 = vmor %vm2083, %vm2084
  %v2086 = vsel %vm2085, %v2078, %v2082
  %v2087 = vand.u32 2147483647, %v2077
  %vm2088 = vcmp.eq.f32.partialorder %v2087, 8.507059e+37
  %v2089 = vand.u32 %v2077, 2147483648
  %v2090 = vor.u32 1.1754944e-38, %v2089
  %v2091 = vsel %vm2088, %v2090, %v2086
  %v2092 = vmul.f32 1.0, %v2091
  %v2093 = vtanh.pop %v2053
  %v2094 = vxor.u32 %v2054, 2147483648
  %v2095 = vmul.f32 %v2094, 1.442695
  %v2096 = vpow.pop %v2095
  %v2097 = vadd.f32 %v2096, 1.0
  %v2098 = vrcp.pop %v2097
  %v2099 = vmul.f32 %v2097, %v2098
  %v2100 = vsub.f32 1.0, %v2099
  %v2101 = vmul.f32 %v2098, %v2100
  %v2102 = vadd.f32 %v2098, %v2101
  %vm2103 = vweird.f32 %v2097
  %vm2104 = vweird.f32 %v2098
  %vm2105 = vmor %vm2103, %vm2104
  %v2106 = vsel %vm2105, %v2098, %v2102
  %v2107 = vand.u32 2147483647, %v2097
  %vm2108 = vcmp.eq.f32.partialorder %v2107, 8.507059e+37
  %v2109 = vand.u32 %v2097, 2147483648
  %v2110 = vor.u32 1.1754944e-38, %v2109
  %v2111 = vsel %vm2108, %v2110, %v2106
  %v2112 = vmul.f32 1.0, %v2111
  %v2113 = vmul.f32 %v2092, %v1736
  %v2114 = vmul.f32 %v2073, %v2093
  %v2115 = vadd.f32 %v2113, %v2114
  %v2116 = vtanh.pop %v2115
  %v2117 = vmul.f32 %v2112, %v2116
  %s2118 = scalar_lea.vmem %s0, 160
  %v2119 = vld [vmem:[%s2118] sm:$0xff]
  %v2120 = vld [vmem:[%s2118 + $0x8] sm:$0xff]
  %v2121 = vld [vmem:[%s2118 + $0x10] sm:$0xff]
  %v2122 = vld [vmem:[%s2118 + $0x18] sm:$0xff]
  %2123 = vmatpush.msra.mxu0 %v82
  %2124 = vmatpush.msra.mxu0 %v78
  %2125 = vmatpush.msra.mxu0 %v74
  %2126 = vmatpush.msra.mxu0 %v70
  %2127 = vmatpush.msra.mxu0 %v66
  %2128 = vmatpush.msra.mxu0 %v62
  %2129 = vmatpush.msra.mxu0 %v58
  %2130 = vmatpush.msra.mxu0 %v54
  %2131 = vmatpush.msra.mxu0 %v50
  %2132 = vmatpush.msra.mxu0 %v46
  %2133 = vmatpush.msra.mxu0 %v42
  %2134 = vmatpush.msra.mxu0 %v38
  %2135 = vmatpush.msra.mxu0 %v34
  %2136 = vmatpush.msra.mxu0 %v30
  %2137 = vmatpush.msra.mxu0 %v26
  %2138 = vmatpush.msra.mxu0 %v22
  %2139 = vmatmul.f32.gmra.mxu0 %v1890
  %v2140 = vpop.f32.mrf.mxu0
  %v2141 = vadd.f32 0.0, %v2140
  %2142 = vdwg.mxu0
  %2143 = vmatpush.msra.mxu0 %v83
  %2144 = vmatpush.msra.mxu0 %v79
  %2145 = vmatpush.msra.mxu0 %v75
  %2146 = vmatpush.msra.mxu0 %v71
  %2147 = vmatpush.msra.mxu0 %v67
  %2148 = vmatpush.msra.mxu0 %v63
  %2149 = vmatpush.msra.mxu0 %v59
  %2150 = vmatpush.msra.mxu0 %v55
  %2151 = vmatpush.msra.mxu0 %v51
  %2152 = vmatpush.msra.mxu0 %v47
  %2153 = vmatpush.msra.mxu0 %v43
  %2154 = vmatpush.msra.mxu0 %v39
  %2155 = vmatpush.msra.mxu0 %v35
  %2156 = vmatpush.msra.mxu0 %v31
  %2157 = vmatpush.msra.mxu0 %v27
  %2158 = vmatpush.msra.mxu0 %v23
  %2159 = vmatmul.f32.gmra.mxu0 %v1890
  %v2160 = vpop.f32.mrf.mxu0
  %v2161 = vadd.f32 0.0, %v2160
  %2162 = vdwg.mxu0
  %2163 = vmatpush.msra.mxu0 %v84
  %2164 = vmatpush.msra.mxu0 %v80
  %2165 = vmatpush.msra.mxu0 %v76
  %2166 = vmatpush.msra.mxu0 %v72
  %2167 = vmatpush.msra.mxu0 %v68
  %2168 = vmatpush.msra.mxu0 %v64
  %2169 = vmatpush.msra.mxu0 %v60
  %2170 = vmatpush.msra.mxu0 %v56
  %2171 = vmatpush.msra.mxu0 %v52
  %2172 = vmatpush.msra.mxu0 %v48
  %2173 = vmatpush.msra.mxu0 %v44
  %2174 = vmatpush.msra.mxu0 %v40
  %2175 = vmatpush.msra.mxu0 %v36
  %2176 = vmatpush.msra.mxu0 %v32
  %2177 = vmatpush.msra.mxu0 %v28
  %2178 = vmatpush.msra.mxu0 %v24
  %2179 = vmatmul.f32.gmra.mxu0 %v1890
  %v2180 = vpop.f32.mrf.mxu0
  %v2181 = vadd.f32 0.0, %v2180
  %2182 = vdwg.mxu0
  %2183 = vmatpush.msra.mxu0 %v85
  %2184 = vmatpush.msra.mxu0 %v81
  %2185 = vmatpush.msra.mxu0 %v77
  %2186 = vmatpush.msra.mxu0 %v73
  %2187 = vmatpush.msra.mxu0 %v69
  %2188 = vmatpush.msra.mxu0 %v65
  %2189 = vmatpush.msra.mxu0 %v61
  %2190 = vmatpush.msra.mxu0 %v57
  %2191 = vmatpush.msra.mxu0 %v53
  %2192 = vmatpush.msra.mxu0 %v49
  %2193 = vmatpush.msra.mxu0 %v45
  %2194 = vmatpush.msra.mxu0 %v41
  %2195 = vmatpush.msra.mxu0 %v37
  %2196 = vmatpush.msra.mxu0 %v33
  %2197 = vmatpush.msra.mxu0 %v29
  %2198 = vmatpush.msra.mxu0 %v25
  %2199 = vmatmul.f32.gmra.mxu0 %v1890
  %v2200 = vpop.f32.mrf.mxu0
  %v2201 = vadd.f32 0.0, %v2200
  %2202 = vdwg.mxu0
  %v2203 = vadd.f32 %v2119, %v2141
  %v2204 = vadd.f32 %v2120, %v2161
  %v2205 = vadd.f32 %v2121, %v2181
  %v2206 = vadd.f32 %v2122, %v2201
  %v2207 = vxor.u32 %v2203, 2147483648
  %v2208 = vmul.f32 %v2207, 1.442695
  %v2209 = vpow.pop %v2208
  %v2210 = vadd.f32 %v2209, 1.0
  %v2211 = vrcp.pop %v2210
  %v2212 = vmul.f32 %v2210, %v2211
  %v2213 = vsub.f32 1.0, %v2212
  %v2214 = vmul.f32 %v2211, %v2213
  %v2215 = vadd.f32 %v2211, %v2214
  %vm2216 = vweird.f32 %v2210
  %vm2217 = vweird.f32 %v2211
  %vm2218 = vmor %vm2216, %vm2217
  %v2219 = vsel %vm2218, %v2211, %v2215
  %v2220 = vand.u32 2147483647, %v2210
  %vm2221 = vcmp.eq.f32.partialorder %v2220, 8.507059e+37
  %v2222 = vand.u32 %v2210, 2147483648
  %v2223 = vor.u32 1.1754944e-38, %v2222
  %v2224 = vsel %vm2221, %v2223, %v2219
  %v2225 = vmul.f32 1.0, %v2224
  %v2226 = vxor.u32 %v2204, 2147483648
  %v2227 = vmul.f32 %v2226, 1.442695
  %v2228 = vpow.pop %v2227
  %v2229 = vadd.f32 %v2228, 1.0
  %v2230 = vrcp.pop %v2229
  %v2231 = vmul.f32 %v2229, %v2230
  %v2232 = vsub.f32 1.0, %v2231
  %v2233 = vmul.f32 %v2230, %v2232
  %v2234 = vadd.f32 %v2230, %v2233
  %vm2235 = vweird.f32 %v2229
  %vm2236 = vweird.f32 %v2230
  %vm2237 = vmor %vm2235, %vm2236
  %v2238 = vsel %vm2237, %v2230, %v2234
  %v2239 = vand.u32 2147483647, %v2229
  %vm2240 = vcmp.eq.f32.partialorder %v2239, 8.507059e+37
  %v2241 = vand.u32 %v2229, 2147483648
  %v2242 = vor.u32 1.1754944e-38, %v2241
  %v2243 = vsel %vm2240, %v2242, %v2238
  %v2244 = vmul.f32 1.0, %v2243
  %v2245 = vtanh.pop %v2205
  %v2246 = vxor.u32 %v2206, 2147483648
  %v2247 = vmul.f32 %v2246, 1.442695
  %v2248 = vpow.pop %v2247
  %v2249 = vadd.f32 %v2248, 1.0
  %v2250 = vrcp.pop %v2249
  %v2251 = vmul.f32 %v2249, %v2250
  %v2252 = vsub.f32 1.0, %v2251
  %v2253 = vmul.f32 %v2250, %v2252
  %v2254 = vadd.f32 %v2250, %v2253
  %vm2255 = vweird.f32 %v2249
  %vm2256 = vweird.f32 %v2250
  %vm2257 = vmor %vm2255, %vm2256
  %v2258 = vsel %vm2257, %v2250, %v2254
  %v2259 = vand.u32 2147483647, %v2249
  %vm2260 = vcmp.eq.f32.partialorder %v2259, 8.507059e+37
  %v2261 = vand.u32 %v2249, 2147483648
  %v2262 = vor.u32 1.1754944e-38, %v2261
  %v2263 = vsel %vm2260, %v2262, %v2258
  %v2264 = vmul.f32 1.0, %v2263
  %v2265 = vmul.f32 %v2244, %v1888
  %v2266 = vmul.f32 %v2225, %v2245
  %v2267 = vadd.f32 %v2265, %v2266
  %v2268 = vtanh.pop %v2267
  %v2269 = vmul.f32 %v2264, %v2268
  %2270 = vmatpush.msra.mxu0 %v210
  %2271 = vmatpush.msra.mxu0 %v206
  %2272 = vmatpush.msra.mxu0 %v202
  %2273 = vmatpush.msra.mxu0 %v198
  %2274 = vmatpush.msra.mxu0 %v194
  %2275 = vmatpush.msra.mxu0 %v190
  %2276 = vmatpush.msra.mxu0 %v186
  %2277 = vmatpush.msra.mxu0 %v182
  %2278 = vmatpush.msra.mxu0 %v178
  %2279 = vmatpush.msra.mxu0 %v174
  %2280 = vmatpush.msra.mxu0 %v170
  %2281 = vmatpush.msra.mxu0 %v166
  %2282 = vmatpush.msra.mxu0 %v162
  %2283 = vmatpush.msra.mxu0 %v158
  %2284 = vmatpush.msra.mxu0 %v154
  %2285 = vmatpush.msra.mxu0 %v150
  %2286 = vmatmul.f32.gmra.mxu0 %v2117
  %v2287 = vpop.f32.mrf.mxu0
  %v2288 = vadd.f32 0.0, %v2287
  %2289 = vdwg.mxu0
  %2290 = vmatpush.msra.mxu0 %v211
  %2291 = vmatpush.msra.mxu0 %v207
  %2292 = vmatpush.msra.mxu0 %v203
  %2293 = vmatpush.msra.mxu0 %v199
  %2294 = vmatpush.msra.mxu0 %v195
  %2295 = vmatpush.msra.mxu0 %v191
  %2296 = vmatpush.msra.mxu0 %v187
  %2297 = vmatpush.msra.mxu0 %v183
  %2298 = vmatpush.msra.mxu0 %v179
  %2299 = vmatpush.msra.mxu0 %v175
  %2300 = vmatpush.msra.mxu0 %v171
  %2301 = vmatpush.msra.mxu0 %v167
  %2302 = vmatpush.msra.mxu0 %v163
  %2303 = vmatpush.msra.mxu0 %v159
  %2304 = vmatpush.msra.mxu0 %v155
  %2305 = vmatpush.msra.mxu0 %v151
  %2306 = vmatmul.f32.gmra.mxu0 %v2117
  %v2307 = vpop.f32.mrf.mxu0
  %v2308 = vadd.f32 0.0, %v2307
  %2309 = vdwg.mxu0
  %2310 = vmatpush.msra.mxu0 %v212
  %2311 = vmatpush.msra.mxu0 %v208
  %2312 = vmatpush.msra.mxu0 %v204
  %2313 = vmatpush.msra.mxu0 %v200
  %2314 = vmatpush.msra.mxu0 %v196
  %2315 = vmatpush.msra.mxu0 %v192
  %2316 = vmatpush.msra.mxu0 %v188
  %2317 = vmatpush.msra.mxu0 %v184
  %2318 = vmatpush.msra.mxu0 %v180
  %2319 = vmatpush.msra.mxu0 %v176
  %2320 = vmatpush.msra.mxu0 %v172
  %2321 = vmatpush.msra.mxu0 %v168
  %2322 = vmatpush.msra.mxu0 %v164
  %2323 = vmatpush.msra.mxu0 %v160
  %2324 = vmatpush.msra.mxu0 %v156
  %2325 = vmatpush.msra.mxu0 %v152
  %2326 = vmatmul.f32.gmra.mxu0 %v2117
  %v2327 = vpop.f32.mrf.mxu0
  %v2328 = vadd.f32 0.0, %v2327
  %2329 = vdwg.mxu0
  %2330 = vmatpush.msra.mxu0 %v213
  %2331 = vmatpush.msra.mxu0 %v209
  %2332 = vmatpush.msra.mxu0 %v205
  %2333 = vmatpush.msra.mxu0 %v201
  %2334 = vmatpush.msra.mxu0 %v197
  %2335 = vmatpush.msra.mxu0 %v193
  %2336 = vmatpush.msra.mxu0 %v189
  %2337 = vmatpush.msra.mxu0 %v185
  %2338 = vmatpush.msra.mxu0 %v181
  %2339 = vmatpush.msra.mxu0 %v177
  %2340 = vmatpush.msra.mxu0 %v173
  %2341 = vmatpush.msra.mxu0 %v169
  %2342 = vmatpush.msra.mxu0 %v165
  %2343 = vmatpush.msra.mxu0 %v161
  %2344 = vmatpush.msra.mxu0 %v157
  %2345 = vmatpush.msra.mxu0 %v153
  %2346 = vmatmul.f32.gmra.mxu0 %v2117
  %v2347 = vpop.f32.mrf.mxu0
  %v2348 = vadd.f32 0.0, %v2347
  %2349 = vdwg.mxu0
  %2350 = vmatpush.msra.mxu0 %v146
  %2351 = vmatpush.msra.mxu0 %v142
  %2352 = vmatpush.msra.mxu0 %v138
  %2353 = vmatpush.msra.mxu0 %v134
  %2354 = vmatpush.msra.mxu0 %v130
  %2355 = vmatpush.msra.mxu0 %v126
  %2356 = vmatpush.msra.mxu0 %v122
  %2357 = vmatpush.msra.mxu0 %v118
  %2358 = vmatpush.msra.mxu0 %v114
  %2359 = vmatpush.msra.mxu0 %v110
  %2360 = vmatpush.msra.mxu0 %v106
  %2361 = vmatpush.msra.mxu0 %v102
  %2362 = vmatpush.msra.mxu0 %v98
  %2363 = vmatpush.msra.mxu0 %v94
  %2364 = vmatpush.msra.mxu0 %v90
  %2365 = vmatpush.msra.mxu0 %v86
  %2366 = vmatmul.f32.gmra.mxu0 %v2269
  %v2367 = vpop.f32.mrf.mxu0
  %v2368 = vadd.f32 %v2288, %v2367
  %2369 = vdwg.mxu0
  %2370 = vmatpush.msra.mxu0 %v147
  %2371 = vmatpush.msra.mxu0 %v143
  %2372 = vmatpush.msra.mxu0 %v139
  %2373 = vmatpush.msra.mxu0 %v135
  %2374 = vmatpush.msra.mxu0 %v131
  %2375 = vmatpush.msra.mxu0 %v127
  %2376 = vmatpush.msra.mxu0 %v123
  %2377 = vmatpush.msra.mxu0 %v119
  %2378 = vmatpush.msra.mxu0 %v115
  %2379 = vmatpush.msra.mxu0 %v111
  %2380 = vmatpush.msra.mxu0 %v107
  %2381 = vmatpush.msra.mxu0 %v103
  %2382 = vmatpush.msra.mxu0 %v99
  %2383 = vmatpush.msra.mxu0 %v95
  %2384 = vmatpush.msra.mxu0 %v91
  %2385 = vmatpush.msra.mxu0 %v87
  %2386 = vmatmul.f32.gmra.mxu0 %v2269
  %v2387 = vpop.f32.mrf.mxu0
  %v2388 = vadd.f32 %v2308, %v2387
  %2389 = vdwg.mxu0
  %2390 = vmatpush.msra.mxu0 %v148
  %2391 = vmatpush.msra.mxu0 %v144
  %2392 = vmatpush.msra.mxu0 %v140
  %2393 = vmatpush.msra.mxu0 %v136
  %2394 = vmatpush.msra.mxu0 %v132
  %2395 = vmatpush.msra.mxu0 %v128
  %2396 = vmatpush.msra.mxu0 %v124
  %2397 = vmatpush.msra.mxu0 %v120
  %2398 = vmatpush.msra.mxu0 %v116
  %2399 = vmatpush.msra.mxu0 %v112
  %2400 = vmatpush.msra.mxu0 %v108
  %2401 = vmatpush.msra.mxu0 %v104
  %2402 = vmatpush.msra.mxu0 %v100
  %2403 = vmatpush.msra.mxu0 %v96
  %2404 = vmatpush.msra.mxu0 %v92
  %2405 = vmatpush.msra.mxu0 %v88
  %2406 = vmatmul.f32.gmra.mxu0 %v2269
  %v2407 = vpop.f32.mrf.mxu0
  %v2408 = vadd.f32 %v2328, %v2407
  %2409 = vdwg.mxu0
  %2410 = vmatpush.msra.mxu0 %v149
  %2411 = vmatpush.msra.mxu0 %v145
  %2412 = vmatpush.msra.mxu0 %v141
  %2413 = vmatpush.msra.mxu0 %v137
  %2414 = vmatpush.msra.mxu0 %v133
  %2415 = vmatpush.msra.mxu0 %v129
  %2416 = vmatpush.msra.mxu0 %v125
  %2417 = vmatpush.msra.mxu0 %v121
  %2418 = vmatpush.msra.mxu0 %v117
  %2419 = vmatpush.msra.mxu0 %v113
  %2420 = vmatpush.msra.mxu0 %v109
  %2421 = vmatpush.msra.mxu0 %v105
  %2422 = vmatpush.msra.mxu0 %v101
  %2423 = vmatpush.msra.mxu0 %v97
  %2424 = vmatpush.msra.mxu0 %v93
  %2425 = vmatpush.msra.mxu0 %v89
  %2426 = vmatmul.f32.gmra.mxu0 %v2269
  %v2427 = vpop.f32.mrf.mxu0
  %v2428 = vadd.f32 %v2348, %v2427
  %2429 = vdwg.mxu0
  %v2430 = vadd.f32 %v2368, %v527
  %v2431 = vadd.f32 %v2388, %v528
  %v2432 = vadd.f32 %v2408, %v529
  %v2433 = vadd.f32 %v2428, %v530
  %v2434 = vxor.u32 %v2430, 2147483648
  %v2435 = vmul.f32 %v2434, 1.442695
  %v2436 = vpow.pop %v2435
  %v2437 = vadd.f32 %v2436, 1.0
  %v2438 = vrcp.pop %v2437
  %v2439 = vmul.f32 %v2437, %v2438
  %v2440 = vsub.f32 1.0, %v2439
  %v2441 = vmul.f32 %v2438, %v2440
  %v2442 = vadd.f32 %v2438, %v2441
  %vm2443 = vweird.f32 %v2437
  %vm2444 = vweird.f32 %v2438
  %vm2445 = vmor %vm2443, %vm2444
  %v2446 = vsel %vm2445, %v2438, %v2442
  %v2447 = vand.u32 2147483647, %v2437
  %vm2448 = vcmp.eq.f32.partialorder %v2447, 8.507059e+37
  %v2449 = vand.u32 %v2437, 2147483648
  %v2450 = vor.u32 1.1754944e-38, %v2449
  %v2451 = vsel %vm2448, %v2450, %v2446
  %v2452 = vmul.f32 1.0, %v2451
  %v2453 = vxor.u32 %v2431, 2147483648
  %v2454 = vmul.f32 %v2453, 1.442695
  %v2455 = vpow.pop %v2454
  %v2456 = vadd.f32 %v2455, 1.0
  %v2457 = vrcp.pop %v2456
  %v2458 = vmul.f32 %v2456, %v2457
  %v2459 = vsub.f32 1.0, %v2458
  %v2460 = vmul.f32 %v2457, %v2459
  %v2461 = vadd.f32 %v2457, %v2460
  %vm2462 = vweird.f32 %v2456
  %vm2463 = vweird.f32 %v2457
  %vm2464 = vmor %vm2462, %vm2463
  %v2465 = vsel %vm2464, %v2457, %v2461
  %v2466 = vand.u32 2147483647, %v2456
  %vm2467 = vcmp.eq.f32.partialorder %v2466, 8.507059e+37
  %v2468 = vand.u32 %v2456, 2147483648
  %v2469 = vor.u32 1.1754944e-38, %v2468
  %v2470 = vsel %vm2467, %v2469, %v2465
  %v2471 = vmul.f32 1.0, %v2470
  %v2472 = vtanh.pop %v2432
  %v2473 = vxor.u32 %v2433, 2147483648
  %v2474 = vmul.f32 %v2473, 1.442695
  %v2475 = vpow.pop %v2474
  %v2476 = vadd.f32 %v2475, 1.0
  %v2477 = vrcp.pop %v2476
  %v2478 = vmul.f32 %v2476, %v2477
  %v2479 = vsub.f32 1.0, %v2478
  %v2480 = vmul.f32 %v2477, %v2479
  %v2481 = vadd.f32 %v2477, %v2480
  %vm2482 = vweird.f32 %v2476
  %vm2483 = vweird.f32 %v2477
  %vm2484 = vmor %vm2482, %vm2483
  %v2485 = vsel %vm2484, %v2477, %v2481
  %v2486 = vand.u32 2147483647, %v2476
  %vm2487 = vcmp.eq.f32.partialorder %v2486, 8.507059e+37
  %v2488 = vand.u32 %v2476, 2147483648
  %v2489 = vor.u32 1.1754944e-38, %v2488
  %v2490 = vsel %vm2487, %v2489, %v2485
  %v2491 = vmul.f32 1.0, %v2490
  %v2492 = vmul.f32 %v2471, %v2115
  %v2493 = vmul.f32 %v2452, %v2472
  %v2494 = vadd.f32 %v2492, %v2493
  %v2495 = vtanh.pop %v2494
  %v2496 = vmul.f32 %v2491, %v2495
  %s2497 = scalar_lea.vmem %s0, 192
  %v2498 = vld [vmem:[%s2497] sm:$0xff]
  %v2499 = vld [vmem:[%s2497 + $0x8] sm:$0xff]
  %v2500 = vld [vmem:[%s2497 + $0x10] sm:$0xff]
  %v2501 = vld [vmem:[%s2497 + $0x18] sm:$0xff]
  %2502 = vmatpush.msra.mxu0 %v82
  %2503 = vmatpush.msra.mxu0 %v78
  %2504 = vmatpush.msra.mxu0 %v74
  %2505 = vmatpush.msra.mxu0 %v70
  %2506 = vmatpush.msra.mxu0 %v66
  %2507 = vmatpush.msra.mxu0 %v62
  %2508 = vmatpush.msra.mxu0 %v58
  %2509 = vmatpush.msra.mxu0 %v54
  %2510 = vmatpush.msra.mxu0 %v50
  %2511 = vmatpush.msra.mxu0 %v46
  %2512 = vmatpush.msra.mxu0 %v42
  %2513 = vmatpush.msra.mxu0 %v38
  %2514 = vmatpush.msra.mxu0 %v34
  %2515 = vmatpush.msra.mxu0 %v30
  %2516 = vmatpush.msra.mxu0 %v26
  %2517 = vmatpush.msra.mxu0 %v22
  %2518 = vmatmul.f32.gmra.mxu0 %v2269
  %v2519 = vpop.f32.mrf.mxu0
  %v2520 = vadd.f32 0.0, %v2519
  %2521 = vdwg.mxu0
  %2522 = vmatpush.msra.mxu0 %v83
  %2523 = vmatpush.msra.mxu0 %v79
  %2524 = vmatpush.msra.mxu0 %v75
  %2525 = vmatpush.msra.mxu0 %v71
  %2526 = vmatpush.msra.mxu0 %v67
  %2527 = vmatpush.msra.mxu0 %v63
  %2528 = vmatpush.msra.mxu0 %v59
  %2529 = vmatpush.msra.mxu0 %v55
  %2530 = vmatpush.msra.mxu0 %v51
  %2531 = vmatpush.msra.mxu0 %v47
  %2532 = vmatpush.msra.mxu0 %v43
  %2533 = vmatpush.msra.mxu0 %v39
  %2534 = vmatpush.msra.mxu0 %v35
  %2535 = vmatpush.msra.mxu0 %v31
  %2536 = vmatpush.msra.mxu0 %v27
  %2537 = vmatpush.msra.mxu0 %v23
  %2538 = vmatmul.f32.gmra.mxu0 %v2269
  %v2539 = vpop.f32.mrf.mxu0
  %v2540 = vadd.f32 0.0, %v2539
  %2541 = vdwg.mxu0
  %2542 = vmatpush.msra.mxu0 %v84
  %2543 = vmatpush.msra.mxu0 %v80
  %2544 = vmatpush.msra.mxu0 %v76
  %2545 = vmatpush.msra.mxu0 %v72
  %2546 = vmatpush.msra.mxu0 %v68
  %2547 = vmatpush.msra.mxu0 %v64
  %2548 = vmatpush.msra.mxu0 %v60
  %2549 = vmatpush.msra.mxu0 %v56
  %2550 = vmatpush.msra.mxu0 %v52
  %2551 = vmatpush.msra.mxu0 %v48
  %2552 = vmatpush.msra.mxu0 %v44
  %2553 = vmatpush.msra.mxu0 %v40
  %2554 = vmatpush.msra.mxu0 %v36
  %2555 = vmatpush.msra.mxu0 %v32
  %2556 = vmatpush.msra.mxu0 %v28
  %2557 = vmatpush.msra.mxu0 %v24
  %2558 = vmatmul.f32.gmra.mxu0 %v2269
  %v2559 = vpop.f32.mrf.mxu0
  %v2560 = vadd.f32 0.0, %v2559
  %2561 = vdwg.mxu0
  %2562 = vmatpush.msra.mxu0 %v85
  %2563 = vmatpush.msra.mxu0 %v81
  %2564 = vmatpush.msra.mxu0 %v77
  %2565 = vmatpush.msra.mxu0 %v73
  %2566 = vmatpush.msra.mxu0 %v69
  %2567 = vmatpush.msra.mxu0 %v65
  %2568 = vmatpush.msra.mxu0 %v61
  %2569 = vmatpush.msra.mxu0 %v57
  %2570 = vmatpush.msra.mxu0 %v53
  %2571 = vmatpush.msra.mxu0 %v49
  %2572 = vmatpush.msra.mxu0 %v45
  %2573 = vmatpush.msra.mxu0 %v41
  %2574 = vmatpush.msra.mxu0 %v37
  %2575 = vmatpush.msra.mxu0 %v33
  %2576 = vmatpush.msra.mxu0 %v29
  %2577 = vmatpush.msra.mxu0 %v25
  %2578 = vmatmul.f32.gmra.mxu0 %v2269
  %v2579 = vpop.f32.mrf.mxu0
  %v2580 = vadd.f32 0.0, %v2579
  %2581 = vdwg.mxu0
  %v2582 = vadd.f32 %v2498, %v2520
  %v2583 = vadd.f32 %v2499, %v2540
  %v2584 = vadd.f32 %v2500, %v2560
  %v2585 = vadd.f32 %v2501, %v2580
  %v2586 = vxor.u32 %v2582, 2147483648
  %v2587 = vmul.f32 %v2586, 1.442695
  %v2588 = vpow.pop %v2587
  %v2589 = vadd.f32 %v2588, 1.0
  %v2590 = vrcp.pop %v2589
  %v2591 = vmul.f32 %v2589, %v2590
  %v2592 = vsub.f32 1.0, %v2591
  %v2593 = vmul.f32 %v2590, %v2592
  %v2594 = vadd.f32 %v2590, %v2593
  %vm2595 = vweird.f32 %v2589
  %vm2596 = vweird.f32 %v2590
  %vm2597 = vmor %vm2595, %vm2596
  %v2598 = vsel %vm2597, %v2590, %v2594
  %v2599 = vand.u32 2147483647, %v2589
  %vm2600 = vcmp.eq.f32.partialorder %v2599, 8.507059e+37
  %v2601 = vand.u32 %v2589, 2147483648
  %v2602 = vor.u32 1.1754944e-38, %v2601
  %v2603 = vsel %vm2600, %v2602, %v2598
  %v2604 = vmul.f32 1.0, %v2603
  %v2605 = vxor.u32 %v2583, 2147483648
  %v2606 = vmul.f32 %v2605, 1.442695
  %v2607 = vpow.pop %v2606
  %v2608 = vadd.f32 %v2607, 1.0
  %v2609 = vrcp.pop %v2608
  %v2610 = vmul.f32 %v2608, %v2609
  %v2611 = vsub.f32 1.0, %v2610
  %v2612 = vmul.f32 %v2609, %v2611
  %v2613 = vadd.f32 %v2609, %v2612
  %vm2614 = vweird.f32 %v2608
  %vm2615 = vweird.f32 %v2609
  %vm2616 = vmor %vm2614, %vm2615
  %v2617 = vsel %vm2616, %v2609, %v2613
  %v2618 = vand.u32 2147483647, %v2608
  %vm2619 = vcmp.eq.f32.partialorder %v2618, 8.507059e+37
  %v2620 = vand.u32 %v2608, 2147483648
  %v2621 = vor.u32 1.1754944e-38, %v2620
  %v2622 = vsel %vm2619, %v2621, %v2617
  %v2623 = vmul.f32 1.0, %v2622
  %v2624 = vtanh.pop %v2584
  %v2625 = vxor.u32 %v2585, 2147483648
  %v2626 = vmul.f32 %v2625, 1.442695
  %v2627 = vpow.pop %v2626
  %v2628 = vadd.f32 %v2627, 1.0
  %v2629 = vrcp.pop %v2628
  %v2630 = vmul.f32 %v2628, %v2629
  %v2631 = vsub.f32 1.0, %v2630
  %v2632 = vmul.f32 %v2629, %v2631
  %v2633 = vadd.f32 %v2629, %v2632
  %vm2634 = vweird.f32 %v2628
  %vm2635 = vweird.f32 %v2629
  %vm2636 = vmor %vm2634, %vm2635
  %v2637 = vsel %vm2636, %v2629, %v2633
  %v2638 = vand.u32 2147483647, %v2628
  %vm2639 = vcmp.eq.f32.partialorder %v2638, 8.507059e+37
  %v2640 = vand.u32 %v2628, 2147483648
  %v2641 = vor.u32 1.1754944e-38, %v2640
  %v2642 = vsel %vm2639, %v2641, %v2637
  %v2643 = vmul.f32 1.0, %v2642
  %v2644 = vmul.f32 %v2623, %v2267
  %v2645 = vmul.f32 %v2604, %v2624
  %v2646 = vadd.f32 %v2644, %v2645
  %v2647 = vtanh.pop %v2646
  %v2648 = vmul.f32 %v2643, %v2647
  %2649 = vmatpush.msra.mxu0 %v210
  %2650 = vmatpush.msra.mxu0 %v206
  %2651 = vmatpush.msra.mxu0 %v202
  %2652 = vmatpush.msra.mxu0 %v198
  %2653 = vmatpush.msra.mxu0 %v194
  %2654 = vmatpush.msra.mxu0 %v190
  %2655 = vmatpush.msra.mxu0 %v186
  %2656 = vmatpush.msra.mxu0 %v182
  %2657 = vmatpush.msra.mxu0 %v178
  %2658 = vmatpush.msra.mxu0 %v174
  %2659 = vmatpush.msra.mxu0 %v170
  %2660 = vmatpush.msra.mxu0 %v166
  %2661 = vmatpush.msra.mxu0 %v162
  %2662 = vmatpush.msra.mxu0 %v158
  %2663 = vmatpush.msra.mxu0 %v154
  %2664 = vmatpush.msra.mxu0 %v150
  %2665 = vmatmul.f32.gmra.mxu0 %v2496
  %v2666 = vpop.f32.mrf.mxu0
  %v2667 = vadd.f32 0.0, %v2666
  %2668 = vdwg.mxu0
  %2669 = vmatpush.msra.mxu0 %v211
  %2670 = vmatpush.msra.mxu0 %v207
  %2671 = vmatpush.msra.mxu0 %v203
  %2672 = vmatpush.msra.mxu0 %v199
  %2673 = vmatpush.msra.mxu0 %v195
  %2674 = vmatpush.msra.mxu0 %v191
  %2675 = vmatpush.msra.mxu0 %v187
  %2676 = vmatpush.msra.mxu0 %v183
  %2677 = vmatpush.msra.mxu0 %v179
  %2678 = vmatpush.msra.mxu0 %v175
  %2679 = vmatpush.msra.mxu0 %v171
  %2680 = vmatpush.msra.mxu0 %v167
  %2681 = vmatpush.msra.mxu0 %v163
  %2682 = vmatpush.msra.mxu0 %v159
  %2683 = vmatpush.msra.mxu0 %v155
  %2684 = vmatpush.msra.mxu0 %v151
  %2685 = vmatmul.f32.gmra.mxu0 %v2496
  %v2686 = vpop.f32.mrf.mxu0
  %v2687 = vadd.f32 0.0, %v2686
  %2688 = vdwg.mxu0
  %2689 = vmatpush.msra.mxu0 %v212
  %2690 = vmatpush.msra.mxu0 %v208
  %2691 = vmatpush.msra.mxu0 %v204
  %2692 = vmatpush.msra.mxu0 %v200
  %2693 = vmatpush.msra.mxu0 %v196
  %2694 = vmatpush.msra.mxu0 %v192
  %2695 = vmatpush.msra.mxu0 %v188
  %2696 = vmatpush.msra.mxu0 %v184
  %2697 = vmatpush.msra.mxu0 %v180
  %2698 = vmatpush.msra.mxu0 %v176
  %2699 = vmatpush.msra.mxu0 %v172
  %2700 = vmatpush.msra.mxu0 %v168
  %2701 = vmatpush.msra.mxu0 %v164
  %2702 = vmatpush.msra.mxu0 %v160
  %2703 = vmatpush.msra.mxu0 %v156
  %2704 = vmatpush.msra.mxu0 %v152
  %2705 = vmatmul.f32.gmra.mxu0 %v2496
  %v2706 = vpop.f32.mrf.mxu0
  %v2707 = vadd.f32 0.0, %v2706
  %2708 = vdwg.mxu0
  %2709 = vmatpush.msra.mxu0 %v213
  %2710 = vmatpush.msra.mxu0 %v209
  %2711 = vmatpush.msra.mxu0 %v205
  %2712 = vmatpush.msra.mxu0 %v201
  %2713 = vmatpush.msra.mxu0 %v197
  %2714 = vmatpush.msra.mxu0 %v193
  %2715 = vmatpush.msra.mxu0 %v189
  %2716 = vmatpush.msra.mxu0 %v185
  %2717 = vmatpush.msra.mxu0 %v181
  %2718 = vmatpush.msra.mxu0 %v177
  %2719 = vmatpush.msra.mxu0 %v173
  %2720 = vmatpush.msra.mxu0 %v169
  %2721 = vmatpush.msra.mxu0 %v165
  %2722 = vmatpush.msra.mxu0 %v161
  %2723 = vmatpush.msra.mxu0 %v157
  %2724 = vmatpush.msra.mxu0 %v153
  %2725 = vmatmul.f32.gmra.mxu0 %v2496
  %v2726 = vpop.f32.mrf.mxu0
  %v2727 = vadd.f32 0.0, %v2726
  %2728 = vdwg.mxu0
  %2729 = vmatpush.msra.mxu0 %v146
  %2730 = vmatpush.msra.mxu0 %v142
  %2731 = vmatpush.msra.mxu0 %v138
  %2732 = vmatpush.msra.mxu0 %v134
  %2733 = vmatpush.msra.mxu0 %v130
  %2734 = vmatpush.msra.mxu0 %v126
  %2735 = vmatpush.msra.mxu0 %v122
  %2736 = vmatpush.msra.mxu0 %v118
  %2737 = vmatpush.msra.mxu0 %v114
  %2738 = vmatpush.msra.mxu0 %v110
  %2739 = vmatpush.msra.mxu0 %v106
  %2740 = vmatpush.msra.mxu0 %v102
  %2741 = vmatpush.msra.mxu0 %v98
  %2742 = vmatpush.msra.mxu0 %v94
  %2743 = vmatpush.msra.mxu0 %v90
  %2744 = vmatpush.msra.mxu0 %v86
  %2745 = vmatmul.f32.gmra.mxu0 %v2648
  %v2746 = vpop.f32.mrf.mxu0
  %v2747 = vadd.f32 %v2667, %v2746
  %2748 = vdwg.mxu0
  %2749 = vmatpush.msra.mxu0 %v147
  %2750 = vmatpush.msra.mxu0 %v143
  %2751 = vmatpush.msra.mxu0 %v139
  %2752 = vmatpush.msra.mxu0 %v135
  %2753 = vmatpush.msra.mxu0 %v131
  %2754 = vmatpush.msra.mxu0 %v127
  %2755 = vmatpush.msra.mxu0 %v123
  %2756 = vmatpush.msra.mxu0 %v119
  %2757 = vmatpush.msra.mxu0 %v115
  %2758 = vmatpush.msra.mxu0 %v111
  %2759 = vmatpush.msra.mxu0 %v107
  %2760 = vmatpush.msra.mxu0 %v103
  %2761 = vmatpush.msra.mxu0 %v99
  %2762 = vmatpush.msra.mxu0 %v95
  %2763 = vmatpush.msra.mxu0 %v91
  %2764 = vmatpush.msra.mxu0 %v87
  %2765 = vmatmul.f32.gmra.mxu0 %v2648
  %v2766 = vpop.f32.mrf.mxu0
  %v2767 = vadd.f32 %v2687, %v2766
  %2768 = vdwg.mxu0
  %2769 = vmatpush.msra.mxu0 %v148
  %2770 = vmatpush.msra.mxu0 %v144
  %2771 = vmatpush.msra.mxu0 %v140
  %2772 = vmatpush.msra.mxu0 %v136
  %2773 = vmatpush.msra.mxu0 %v132
  %2774 = vmatpush.msra.mxu0 %v128
  %2775 = vmatpush.msra.mxu0 %v124
  %2776 = vmatpush.msra.mxu0 %v120
  %2777 = vmatpush.msra.mxu0 %v116
  %2778 = vmatpush.msra.mxu0 %v112
  %2779 = vmatpush.msra.mxu0 %v108
  %2780 = vmatpush.msra.mxu0 %v104
  %2781 = vmatpush.msra.mxu0 %v100
  %2782 = vmatpush.msra.mxu0 %v96
  %2783 = vmatpush.msra.mxu0 %v92
  %2784 = vmatpush.msra.mxu0 %v88
  %2785 = vmatmul.f32.gmra.mxu0 %v2648
  %v2786 = vpop.f32.mrf.mxu0
  %v2787 = vadd.f32 %v2707, %v2786
  %2788 = vdwg.mxu0
  %2789 = vmatpush.msra.mxu0 %v149
  %2790 = vmatpush.msra.mxu0 %v145
  %2791 = vmatpush.msra.mxu0 %v141
  %2792 = vmatpush.msra.mxu0 %v137
  %2793 = vmatpush.msra.mxu0 %v133
  %2794 = vmatpush.msra.mxu0 %v129
  %2795 = vmatpush.msra.mxu0 %v125
  %2796 = vmatpush.msra.mxu0 %v121
  %2797 = vmatpush.msra.mxu0 %v117
  %2798 = vmatpush.msra.mxu0 %v113
  %2799 = vmatpush.msra.mxu0 %v109
  %2800 = vmatpush.msra.mxu0 %v105
  %2801 = vmatpush.msra.mxu0 %v101
  %2802 = vmatpush.msra.mxu0 %v97
  %2803 = vmatpush.msra.mxu0 %v93
  %2804 = vmatpush.msra.mxu0 %v89
  %2805 = vmatmul.f32.gmra.mxu0 %v2648
  %v2806 = vpop.f32.mrf.mxu0
  %v2807 = vadd.f32 %v2727, %v2806
  %2808 = vdwg.mxu0
  %v2809 = vadd.f32 %v2747, %v527
  %v2810 = vadd.f32 %v2767, %v528
  %v2811 = vadd.f32 %v2787, %v529
  %v2812 = vadd.f32 %v2807, %v530
  %v2813 = vxor.u32 %v2809, 2147483648
  %v2814 = vmul.f32 %v2813, 1.442695
  %v2815 = vpow.pop %v2814
  %v2816 = vadd.f32 %v2815, 1.0
  %v2817 = vrcp.pop %v2816
  %v2818 = vmul.f32 %v2816, %v2817
  %v2819 = vsub.f32 1.0, %v2818
  %v2820 = vmul.f32 %v2817, %v2819
  %v2821 = vadd.f32 %v2817, %v2820
  %vm2822 = vweird.f32 %v2816
  %vm2823 = vweird.f32 %v2817
  %vm2824 = vmor %vm2822, %vm2823
  %v2825 = vsel %vm2824, %v2817, %v2821
  %v2826 = vand.u32 2147483647, %v2816
  %vm2827 = vcmp.eq.f32.partialorder %v2826, 8.507059e+37
  %v2828 = vand.u32 %v2816, 2147483648
  %v2829 = vor.u32 1.1754944e-38, %v2828
  %v2830 = vsel %vm2827, %v2829, %v2825
  %v2831 = vmul.f32 1.0, %v2830
  %v2832 = vxor.u32 %v2810, 2147483648
  %v2833 = vmul.f32 %v2832, 1.442695
  %v2834 = vpow.pop %v2833
  %v2835 = vadd.f32 %v2834, 1.0
  %v2836 = vrcp.pop %v2835
  %v2837 = vmul.f32 %v2835, %v2836
  %v2838 = vsub.f32 1.0, %v2837
  %v2839 = vmul.f32 %v2836, %v2838
  %v2840 = vadd.f32 %v2836, %v2839
  %vm2841 = vweird.f32 %v2835
  %vm2842 = vweird.f32 %v2836
  %vm2843 = vmor %vm2841, %vm2842
  %v2844 = vsel %vm2843, %v2836, %v2840
  %v2845 = vand.u32 2147483647, %v2835
  %vm2846 = vcmp.eq.f32.partialorder %v2845, 8.507059e+37
  %v2847 = vand.u32 %v2835, 2147483648
  %v2848 = vor.u32 1.1754944e-38, %v2847
  %v2849 = vsel %vm2846, %v2848, %v2844
  %v2850 = vmul.f32 1.0, %v2849
  %v2851 = vtanh.pop %v2811
  %v2852 = vxor.u32 %v2812, 2147483648
  %v2853 = vmul.f32 %v2852, 1.442695
  %v2854 = vpow.pop %v2853
  %v2855 = vadd.f32 %v2854, 1.0
  %v2856 = vrcp.pop %v2855
  %v2857 = vmul.f32 %v2855, %v2856
  %v2858 = vsub.f32 1.0, %v2857
  %v2859 = vmul.f32 %v2856, %v2858
  %v2860 = vadd.f32 %v2856, %v2859
  %vm2861 = vweird.f32 %v2855
  %vm2862 = vweird.f32 %v2856
  %vm2863 = vmor %vm2861, %vm2862
  %v2864 = vsel %vm2863, %v2856, %v2860
  %v2865 = vand.u32 2147483647, %v2855
  %vm2866 = vcmp.eq.f32.partialorder %v2865, 8.507059e+37
  %v2867 = vand.u32 %v2855, 2147483648
  %v2868 = vor.u32 1.1754944e-38, %v2867
  %v2869 = vsel %vm2866, %v2868, %v2864
  %v2870 = vmul.f32 1.0, %v2869
  %v2871 = vmul.f32 %v2850, %v2494
  %v2872 = vmul.f32 %v2831, %v2851
  %v2873 = vadd.f32 %v2871, %v2872
  %v2874 = vtanh.pop %v2873
  %v2875 = vmul.f32 %v2870, %v2874
  %s2876 = scalar_lea.vmem %s0, 224
  %v2877 = vld [vmem:[%s2876] sm:$0xff]
  %v2878 = vld [vmem:[%s2876 + $0x8] sm:$0xff]
  %v2879 = vld [vmem:[%s2876 + $0x10] sm:$0xff]
  %v2880 = vld [vmem:[%s2876 + $0x18] sm:$0xff]
  %2881 = vmatpush.msra.mxu0 %v82
  %2882 = vmatpush.msra.mxu0 %v78
  %2883 = vmatpush.msra.mxu0 %v74
  %2884 = vmatpush.msra.mxu0 %v70
  %2885 = vmatpush.msra.mxu0 %v66
  %2886 = vmatpush.msra.mxu0 %v62
  %2887 = vmatpush.msra.mxu0 %v58
  %2888 = vmatpush.msra.mxu0 %v54
  %2889 = vmatpush.msra.mxu0 %v50
  %2890 = vmatpush.msra.mxu0 %v46
  %2891 = vmatpush.msra.mxu0 %v42
  %2892 = vmatpush.msra.mxu0 %v38
  %2893 = vmatpush.msra.mxu0 %v34
  %2894 = vmatpush.msra.mxu0 %v30
  %2895 = vmatpush.msra.mxu0 %v26
  %2896 = vmatpush.msra.mxu0 %v22
  %2897 = vmatmul.f32.gmra.mxu0 %v2648
  %v2898 = vpop.f32.mrf.mxu0
  %v2899 = vadd.f32 0.0, %v2898
  %2900 = vdwg.mxu0
  %2901 = vmatpush.msra.mxu0 %v83
  %2902 = vmatpush.msra.mxu0 %v79
  %2903 = vmatpush.msra.mxu0 %v75
  %2904 = vmatpush.msra.mxu0 %v71
  %2905 = vmatpush.msra.mxu0 %v67
  %2906 = vmatpush.msra.mxu0 %v63
  %2907 = vmatpush.msra.mxu0 %v59
  %2908 = vmatpush.msra.mxu0 %v55
  %2909 = vmatpush.msra.mxu0 %v51
  %2910 = vmatpush.msra.mxu0 %v47
  %2911 = vmatpush.msra.mxu0 %v43
  %2912 = vmatpush.msra.mxu0 %v39
  %2913 = vmatpush.msra.mxu0 %v35
  %2914 = vmatpush.msra.mxu0 %v31
  %2915 = vmatpush.msra.mxu0 %v27
  %2916 = vmatpush.msra.mxu0 %v23
  %2917 = vmatmul.f32.gmra.mxu0 %v2648
  %v2918 = vpop.f32.mrf.mxu0
  %v2919 = vadd.f32 0.0, %v2918
  %2920 = vdwg.mxu0
  %2921 = vmatpush.msra.mxu0 %v84
  %2922 = vmatpush.msra.mxu0 %v80
  %2923 = vmatpush.msra.mxu0 %v76
  %2924 = vmatpush.msra.mxu0 %v72
  %2925 = vmatpush.msra.mxu0 %v68
  %2926 = vmatpush.msra.mxu0 %v64
  %2927 = vmatpush.msra.mxu0 %v60
  %2928 = vmatpush.msra.mxu0 %v56
  %2929 = vmatpush.msra.mxu0 %v52
  %2930 = vmatpush.msra.mxu0 %v48
  %2931 = vmatpush.msra.mxu0 %v44
  %2932 = vmatpush.msra.mxu0 %v40
  %2933 = vmatpush.msra.mxu0 %v36
  %2934 = vmatpush.msra.mxu0 %v32
  %2935 = vmatpush.msra.mxu0 %v28
  %2936 = vmatpush.msra.mxu0 %v24
  %2937 = vmatmul.f32.gmra.mxu0 %v2648
  %v2938 = vpop.f32.mrf.mxu0
  %v2939 = vadd.f32 0.0, %v2938
  %2940 = vdwg.mxu0
  %2941 = vmatpush.msra.mxu0 %v85
  %2942 = vmatpush.msra.mxu0 %v81
  %2943 = vmatpush.msra.mxu0 %v77
  %2944 = vmatpush.msra.mxu0 %v73
  %2945 = vmatpush.msra.mxu0 %v69
  %2946 = vmatpush.msra.mxu0 %v65
  %2947 = vmatpush.msra.mxu0 %v61
  %2948 = vmatpush.msra.mxu0 %v57
  %2949 = vmatpush.msra.mxu0 %v53
  %2950 = vmatpush.msra.mxu0 %v49
  %2951 = vmatpush.msra.mxu0 %v45
  %2952 = vmatpush.msra.mxu0 %v41
  %2953 = vmatpush.msra.mxu0 %v37
  %2954 = vmatpush.msra.mxu0 %v33
  %2955 = vmatpush.msra.mxu0 %v29
  %2956 = vmatpush.msra.mxu0 %v25
  %2957 = vmatmul.f32.gmra.mxu0 %v2648
  %v2958 = vpop.f32.mrf.mxu0
  %v2959 = vadd.f32 0.0, %v2958
  %2960 = vdwg.mxu0
  %v2961 = vadd.f32 %v2877, %v2899
  %v2962 = vadd.f32 %v2878, %v2919
  %v2963 = vadd.f32 %v2879, %v2939
  %v2964 = vadd.f32 %v2880, %v2959
  %v2965 = vxor.u32 %v2961, 2147483648
  %v2966 = vmul.f32 %v2965, 1.442695
  %v2967 = vpow.pop %v2966
  %v2968 = vadd.f32 %v2967, 1.0
  %v2969 = vrcp.pop %v2968
  %v2970 = vmul.f32 %v2968, %v2969
  %v2971 = vsub.f32 1.0, %v2970
  %v2972 = vmul.f32 %v2969, %v2971
  %v2973 = vadd.f32 %v2969, %v2972
  %vm2974 = vweird.f32 %v2968
  %vm2975 = vweird.f32 %v2969
  %vm2976 = vmor %vm2974, %vm2975
  %v2977 = vsel %vm2976, %v2969, %v2973
  %v2978 = vand.u32 2147483647, %v2968
  %vm2979 = vcmp.eq.f32.partialorder %v2978, 8.507059e+37
  %v2980 = vand.u32 %v2968, 2147483648
  %v2981 = vor.u32 1.1754944e-38, %v2980
  %v2982 = vsel %vm2979, %v2981, %v2977
  %v2983 = vmul.f32 1.0, %v2982
  %v2984 = vxor.u32 %v2962, 2147483648
  %v2985 = vmul.f32 %v2984, 1.442695
  %v2986 = vpow.pop %v2985
  %v2987 = vadd.f32 %v2986, 1.0
  %v2988 = vrcp.pop %v2987
  %v2989 = vmul.f32 %v2987, %v2988
  %v2990 = vsub.f32 1.0, %v2989
  %v2991 = vmul.f32 %v2988, %v2990
  %v2992 = vadd.f32 %v2988, %v2991
  %vm2993 = vweird.f32 %v2987
  %vm2994 = vweird.f32 %v2988
  %vm2995 = vmor %vm2993, %vm2994
  %v2996 = vsel %vm2995, %v2988, %v2992
  %v2997 = vand.u32 2147483647, %v2987
  %vm2998 = vcmp.eq.f32.partialorder %v2997, 8.507059e+37
  %v2999 = vand.u32 %v2987, 2147483648
  %v3000 = vor.u32 1.1754944e-38, %v2999
  %v3001 = vsel %vm2998, %v3000, %v2996
  %v3002 = vmul.f32 1.0, %v3001
  %v3003 = vtanh.pop %v2963
  %v3004 = vxor.u32 %v2964, 2147483648
  %v3005 = vmul.f32 %v3004, 1.442695
  %v3006 = vpow.pop %v3005
  %v3007 = vadd.f32 %v3006, 1.0
  %v3008 = vrcp.pop %v3007
  %v3009 = vmul.f32 %v3007, %v3008
  %v3010 = vsub.f32 1.0, %v3009
  %v3011 = vmul.f32 %v3008, %v3010
  %v3012 = vadd.f32 %v3008, %v3011
  %vm3013 = vweird.f32 %v3007
  %vm3014 = vweird.f32 %v3008
  %vm3015 = vmor %vm3013, %vm3014
  %v3016 = vsel %vm3015, %v3008, %v3012
  %v3017 = vand.u32 2147483647, %v3007
  %vm3018 = vcmp.eq.f32.partialorder %v3017, 8.507059e+37
  %v3019 = vand.u32 %v3007, 2147483648
  %v3020 = vor.u32 1.1754944e-38, %v3019
  %v3021 = vsel %vm3018, %v3020, %v3016
  %v3022 = vmul.f32 1.0, %v3021
  %v3023 = vmul.f32 %v3002, %v2646
  %v3024 = vmul.f32 %v2983, %v3003
  %v3025 = vadd.f32 %v3023, %v3024
  %v3026 = vtanh.pop %v3025
  %v3027 = vmul.f32 %v3022, %v3026
  %3028 = vmatpush.msra.mxu0 %v210
  %3029 = vmatpush.msra.mxu0 %v206
  %3030 = vmatpush.msra.mxu0 %v202
  %3031 = vmatpush.msra.mxu0 %v198
  %3032 = vmatpush.msra.mxu0 %v194
  %3033 = vmatpush.msra.mxu0 %v190
  %3034 = vmatpush.msra.mxu0 %v186
  %3035 = vmatpush.msra.mxu0 %v182
  %3036 = vmatpush.msra.mxu0 %v178
  %3037 = vmatpush.msra.mxu0 %v174
  %3038 = vmatpush.msra.mxu0 %v170
  %3039 = vmatpush.msra.mxu0 %v166
  %3040 = vmatpush.msra.mxu0 %v162
  %3041 = vmatpush.msra.mxu0 %v158
  %3042 = vmatpush.msra.mxu0 %v154
  %3043 = vmatpush.msra.mxu0 %v150
  %3044 = vmatmul.f32.gmra.mxu0 %v2875
  %v3045 = vpop.f32.mrf.mxu0
  %v3046 = vadd.f32 0.0, %v3045
  %3047 = vdwg.mxu0
  %3048 = vmatpush.msra.mxu0 %v211
  %3049 = vmatpush.msra.mxu0 %v207
  %3050 = vmatpush.msra.mxu0 %v203
  %3051 = vmatpush.msra.mxu0 %v199
  %3052 = vmatpush.msra.mxu0 %v195
  %3053 = vmatpush.msra.mxu0 %v191
  %3054 = vmatpush.msra.mxu0 %v187
  %3055 = vmatpush.msra.mxu0 %v183
  %3056 = vmatpush.msra.mxu0 %v179
  %3057 = vmatpush.msra.mxu0 %v175
  %3058 = vmatpush.msra.mxu0 %v171
  %3059 = vmatpush.msra.mxu0 %v167
  %3060 = vmatpush.msra.mxu0 %v163
  %3061 = vmatpush.msra.mxu0 %v159
  %3062 = vmatpush.msra.mxu0 %v155
  %3063 = vmatpush.msra.mxu0 %v151
  %3064 = vmatmul.f32.gmra.mxu0 %v2875
  %v3065 = vpop.f32.mrf.mxu0
  %v3066 = vadd.f32 0.0, %v3065
  %3067 = vdwg.mxu0
  %3068 = vmatpush.msra.mxu0 %v212
  %3069 = vmatpush.msra.mxu0 %v208
  %3070 = vmatpush.msra.mxu0 %v204
  %3071 = vmatpush.msra.mxu0 %v200
  %3072 = vmatpush.msra.mxu0 %v196
  %3073 = vmatpush.msra.mxu0 %v192
  %3074 = vmatpush.msra.mxu0 %v188
  %3075 = vmatpush.msra.mxu0 %v184
  %3076 = vmatpush.msra.mxu0 %v180
  %3077 = vmatpush.msra.mxu0 %v176
  %3078 = vmatpush.msra.mxu0 %v172
  %3079 = vmatpush.msra.mxu0 %v168
  %3080 = vmatpush.msra.mxu0 %v164
  %3081 = vmatpush.msra.mxu0 %v160
  %3082 = vmatpush.msra.mxu0 %v156
  %3083 = vmatpush.msra.mxu0 %v152
  %3084 = vmatmul.f32.gmra.mxu0 %v2875
  %v3085 = vpop.f32.mrf.mxu0
  %v3086 = vadd.f32 0.0, %v3085
  %3087 = vdwg.mxu0
  %3088 = vmatpush.msra.mxu0 %v213
  %3089 = vmatpush.msra.mxu0 %v209
  %3090 = vmatpush.msra.mxu0 %v205
  %3091 = vmatpush.msra.mxu0 %v201
  %3092 = vmatpush.msra.mxu0 %v197
  %3093 = vmatpush.msra.mxu0 %v193
  %3094 = vmatpush.msra.mxu0 %v189
  %3095 = vmatpush.msra.mxu0 %v185
  %3096 = vmatpush.msra.mxu0 %v181
  %3097 = vmatpush.msra.mxu0 %v177
  %3098 = vmatpush.msra.mxu0 %v173
  %3099 = vmatpush.msra.mxu0 %v169
  %3100 = vmatpush.msra.mxu0 %v165
  %3101 = vmatpush.msra.mxu0 %v161
  %3102 = vmatpush.msra.mxu0 %v157
  %3103 = vmatpush.msra.mxu0 %v153
  %3104 = vmatmul.f32.gmra.mxu0 %v2875
  %v3105 = vpop.f32.mrf.mxu0
  %v3106 = vadd.f32 0.0, %v3105
  %3107 = vdwg.mxu0
  %3108 = vmatpush.msra.mxu0 %v146
  %3109 = vmatpush.msra.mxu0 %v142
  %3110 = vmatpush.msra.mxu0 %v138
  %3111 = vmatpush.msra.mxu0 %v134
  %3112 = vmatpush.msra.mxu0 %v130
  %3113 = vmatpush.msra.mxu0 %v126
  %3114 = vmatpush.msra.mxu0 %v122
  %3115 = vmatpush.msra.mxu0 %v118
  %3116 = vmatpush.msra.mxu0 %v114
  %3117 = vmatpush.msra.mxu0 %v110
  %3118 = vmatpush.msra.mxu0 %v106
  %3119 = vmatpush.msra.mxu0 %v102
  %3120 = vmatpush.msra.mxu0 %v98
  %3121 = vmatpush.msra.mxu0 %v94
  %3122 = vmatpush.msra.mxu0 %v90
  %3123 = vmatpush.msra.mxu0 %v86
  %3124 = vmatmul.f32.gmra.mxu0 %v3027
  %v3125 = vpop.f32.mrf.mxu0
  %v3126 = vadd.f32 %v3046, %v3125
  %3127 = vdwg.mxu0
  %3128 = vmatpush.msra.mxu0 %v147
  %3129 = vmatpush.msra.mxu0 %v143
  %3130 = vmatpush.msra.mxu0 %v139
  %3131 = vmatpush.msra.mxu0 %v135
  %3132 = vmatpush.msra.mxu0 %v131
  %3133 = vmatpush.msra.mxu0 %v127
  %3134 = vmatpush.msra.mxu0 %v123
  %3135 = vmatpush.msra.mxu0 %v119
  %3136 = vmatpush.msra.mxu0 %v115
  %3137 = vmatpush.msra.mxu0 %v111
  %3138 = vmatpush.msra.mxu0 %v107
  %3139 = vmatpush.msra.mxu0 %v103
  %3140 = vmatpush.msra.mxu0 %v99
  %3141 = vmatpush.msra.mxu0 %v95
  %3142 = vmatpush.msra.mxu0 %v91
  %3143 = vmatpush.msra.mxu0 %v87
  %3144 = vmatmul.f32.gmra.mxu0 %v3027
  %v3145 = vpop.f32.mrf.mxu0
  %v3146 = vadd.f32 %v3066, %v3145
  %3147 = vdwg.mxu0
  %3148 = vmatpush.msra.mxu0 %v148
  %3149 = vmatpush.msra.mxu0 %v144
  %3150 = vmatpush.msra.mxu0 %v140
  %3151 = vmatpush.msra.mxu0 %v136
  %3152 = vmatpush.msra.mxu0 %v132
  %3153 = vmatpush.msra.mxu0 %v128
  %3154 = vmatpush.msra.mxu0 %v124
  %3155 = vmatpush.msra.mxu0 %v120
  %3156 = vmatpush.msra.mxu0 %v116
  %3157 = vmatpush.msra.mxu0 %v112
  %3158 = vmatpush.msra.mxu0 %v108
  %3159 = vmatpush.msra.mxu0 %v104
  %3160 = vmatpush.msra.mxu0 %v100
  %3161 = vmatpush.msra.mxu0 %v96
  %3162 = vmatpush.msra.mxu0 %v92
  %3163 = vmatpush.msra.mxu0 %v88
  %3164 = vmatmul.f32.gmra.mxu0 %v3027
  %v3165 = vpop.f32.mrf.mxu0
  %v3166 = vadd.f32 %v3086, %v3165
  %3167 = vdwg.mxu0
  %3168 = vmatpush.msra.mxu0 %v149
  %3169 = vmatpush.msra.mxu0 %v145
  %3170 = vmatpush.msra.mxu0 %v141
  %3171 = vmatpush.msra.mxu0 %v137
  %3172 = vmatpush.msra.mxu0 %v133
  %3173 = vmatpush.msra.mxu0 %v129
  %3174 = vmatpush.msra.mxu0 %v125
  %3175 = vmatpush.msra.mxu0 %v121
  %3176 = vmatpush.msra.mxu0 %v117
  %3177 = vmatpush.msra.mxu0 %v113
  %3178 = vmatpush.msra.mxu0 %v109
  %3179 = vmatpush.msra.mxu0 %v105
  %3180 = vmatpush.msra.mxu0 %v101
  %3181 = vmatpush.msra.mxu0 %v97
  %3182 = vmatpush.msra.mxu0 %v93
  %3183 = vmatpush.msra.mxu0 %v89
  %3184 = vmatmul.f32.gmra.mxu0 %v3027
  %v3185 = vpop.f32.mrf.mxu0
  %v3186 = vadd.f32 %v3106, %v3185
  %3187 = vdwg.mxu0
  %v3188 = vadd.f32 %v3126, %v527
  %v3189 = vadd.f32 %v3146, %v528
  %v3190 = vadd.f32 %v3166, %v529
  %v3191 = vadd.f32 %v3186, %v530
  %v3192 = vxor.u32 %v3188, 2147483648
  %v3193 = vmul.f32 %v3192, 1.442695
  %v3194 = vpow.pop %v3193
  %v3195 = vadd.f32 %v3194, 1.0
  %v3196 = vrcp.pop %v3195
  %v3197 = vmul.f32 %v3195, %v3196
  %v3198 = vsub.f32 1.0, %v3197
  %v3199 = vmul.f32 %v3196, %v3198
  %v3200 = vadd.f32 %v3196, %v3199
  %vm3201 = vweird.f32 %v3195
  %vm3202 = vweird.f32 %v3196
  %vm3203 = vmor %vm3201, %vm3202
  %v3204 = vsel %vm3203, %v3196, %v3200
  %v3205 = vand.u32 2147483647, %v3195
  %vm3206 = vcmp.eq.f32.partialorder %v3205, 8.507059e+37
  %v3207 = vand.u32 %v3195, 2147483648
  %v3208 = vor.u32 1.1754944e-38, %v3207
  %v3209 = vsel %vm3206, %v3208, %v3204
  %v3210 = vmul.f32 1.0, %v3209
  %v3211 = vxor.u32 %v3189, 2147483648
  %v3212 = vmul.f32 %v3211, 1.442695
  %v3213 = vpow.pop %v3212
  %v3214 = vadd.f32 %v3213, 1.0
  %v3215 = vrcp.pop %v3214
  %v3216 = vmul.f32 %v3214, %v3215
  %v3217 = vsub.f32 1.0, %v3216
  %v3218 = vmul.f32 %v3215, %v3217
  %v3219 = vadd.f32 %v3215, %v3218
  %vm3220 = vweird.f32 %v3214
  %vm3221 = vweird.f32 %v3215
  %vm3222 = vmor %vm3220, %vm3221
  %v3223 = vsel %vm3222, %v3215, %v3219
  %v3224 = vand.u32 2147483647, %v3214
  %vm3225 = vcmp.eq.f32.partialorder %v3224, 8.507059e+37
  %v3226 = vand.u32 %v3214, 2147483648
  %v3227 = vor.u32 1.1754944e-38, %v3226
  %v3228 = vsel %vm3225, %v3227, %v3223
  %v3229 = vmul.f32 1.0, %v3228
  %v3230 = vtanh.pop %v3190
  %v3231 = vxor.u32 %v3191, 2147483648
  %v3232 = vmul.f32 %v3231, 1.442695
  %v3233 = vpow.pop %v3232
  %v3234 = vadd.f32 %v3233, 1.0
  %v3235 = vrcp.pop %v3234
  %v3236 = vmul.f32 %v3234, %v3235
  %v3237 = vsub.f32 1.0, %v3236
  %v3238 = vmul.f32 %v3235, %v3237
  %v3239 = vadd.f32 %v3235, %v3238
  %vm3240 = vweird.f32 %v3234
  %vm3241 = vweird.f32 %v3235
  %vm3242 = vmor %vm3240, %vm3241
  %v3243 = vsel %vm3242, %v3235, %v3239
  %v3244 = vand.u32 2147483647, %v3234
  %vm3245 = vcmp.eq.f32.partialorder %v3244, 8.507059e+37
  %v3246 = vand.u32 %v3234, 2147483648
  %v3247 = vor.u32 1.1754944e-38, %v3246
  %v3248 = vsel %vm3245, %v3247, %v3243
  %v3249 = vmul.f32 1.0, %v3248
  %v3250 = vmul.f32 %v3229, %v2873
  %v3251 = vmul.f32 %v3210, %v3230
  %v3252 = vadd.f32 %v3250, %v3251
  %v3253 = vtanh.pop %v3252
  %v3254 = vmul.f32 %v3249, %v3253
  %3255 = vst [vmem:[%s5] sm:$0xff] %v3027
  %s3256 = scalar_lea.vmem %s5, 8
  %3257 = vst [vmem:[%s3256] sm:$0xff] %v3254
  %3258 = vst [vmem:[%s6] sm:$0xff] %v3025
  %s3259 = scalar_lea.vmem %s6, 8
  %3260 = vst [vmem:[%s3259] sm:$0xff] %v3252
  // Predicated region
  $region22: #{encoder_lstm_forward.1} parent=0 // pred_check
    _
  $region23: #{encoder_lstm_forward.1} parent=0 // pred_check_branch
    %3262 = sbr.rel (0) target = $region25
  $region24: #{encoder_lstm_forward.1} parent=0 // pred_region
    _
  $region25: #{encoder_lstm_forward.1} parent=0 // pred_fallthru
    _
  // Predicated region
  $region26: #{encoder_lstm_forward.1} parent=0 // pred_check
    _
  $region27: #{encoder_lstm_forward.1} parent=0 // pred_check_branch
    %3264 = sbr.rel (0) target = $region29
  $region28: #{encoder_lstm_forward.1} parent=0 // pred_region
    _
  $region29: #{encoder_lstm_forward.1} parent=0 // pred_fallthru
    _
  // Predicated region
  $region30: #{encoder_lstm_forward.1} parent=0 // pred_check
    _
  $region31: #{encoder_lstm_forward.1} parent=0 // pred_check_branch
    %3266 = sbr.rel (0) target = $region33
  $region32: #{encoder_lstm_forward.1} parent=0 // pred_region
    _
  $region33: #{encoder_lstm_forward.1} parent=0 // pred_fallthru
    _
  // Predicated region
  $region34: #{encoder_lstm_forward.1} parent=0 // pred_check
    _
  $region35: #{encoder_lstm_forward.1} parent=0 // pred_check_branch
    %3268 = sbr.rel (0) target = $region37
  $region36: #{encoder_lstm_forward.1} parent=0 // pred_region
    _
  $region37: #{encoder_lstm_forward.1} parent=0 // pred_fallthru
    _

</llo_original>
